<compile_context>
chip_gen: v6e
topology: v6e:2x2x1
jax: 0.10.0
libtpu: 0.0.40
codegen_flags: <defaults>
</compile_context>

<pallas_src>
import numpy as np
import jax
import jax.numpy as jnp
from jax.experimental import pallas as pl
from jax.experimental.pallas import tpu as pltpu


# ----------------------------------------------------------------------------
# Fused kernel: one grid step == one batch element.
# ----------------------------------------------------------------------------
def _fused_forward_kernel(p_ref, w1_ref, b1_ref, t_ref, w2_ref, b2_ref,
                          pm_ref, w3_ref, fb_ref, o_ref):
    # ---- conv1 (5x5, stride 2, pad 2) as a single matmul --------------------
    # p_ref block: (1, 8, 8, 192) = blocked-spatial (8x8) x
    #              (2x2 block taps * 4x4 space-to-depth * 3 input channels)
    p = p_ref[0]                                             # (8, 8, 192)
    p2d = p.reshape(p.shape[0] * p.shape[1], p.shape[2])     # (64, 192) tile-aligned
    a1 = jnp.dot(p2d, w1_ref[...], preferred_element_type=jnp.float32)
    a1 = jnp.maximum(a1 + b1_ref[...], 0.0)                  # (64, 64)
    # rows = 8x8 blocked spatial, cols = (dh, dw, conv1-channel)

    # ---- conv2 (5x5, stride 2, pad 2) == 3x3 stride-1 conv on blocked grid --
    # Spatial shifts (incl. zero padding) are constant 0/1 matrices applied on
    # the MXU -> no strided / unaligned vector accesses anywhere.
    n_c2 = w2_ref.shape[-1]
    acc = jnp.zeros((a1.shape[0], n_c2), jnp.float32)
    for t in range(9):
        shifted = a1 if t == 4 else jnp.dot(
            t_ref[t], a1, preferred_element_type=jnp.float32)
        acc = acc + jnp.dot(shifted, w2_ref[t],
                            preferred_element_type=jnp.float32)
    a2 = jnp.maximum(acc + b2_ref[...], 0.0)                 # (64, 32)
    # rows = 8x8 conv2 spatial (i*8+j), cols = conv2 channels

    # ---- AdaptiveAvgPool2d((4,4)) as a constant averaging matmul ------------
    pooled = jnp.dot(pm_ref[...], a2,
                     preferred_element_type=jnp.float32)     # (16, 32)

    # ---- fc (PyTorch flatten order folded into w3 on the host) --------------
    out = fb_ref[...]                                        # (1, output_dim)
    for s in range(16):
        out = out + jnp.dot(pooled[s:s + 1, :], w3_ref[s],
                            preferred_element_type=jnp.float32)
    o_ref[0] = out.astype(o_ref.dtype)


# ----------------------------------------------------------------------------
# Parameters (PyTorch layout) and one-time packing for the kernel
# ----------------------------------------------------------------------------
def init_params(key, output_dim=64):
    k1, k2, k3 = jax.random.split(key, 3)
    return {
        "conv1_w": 0.1 * jax.random.normal(k1, (16, 3, 5, 5), jnp.float32),
        "conv1_b": jnp.linspace(-0.1, 0.1, 16, dtype=jnp.float32),
        "conv2_w": 0.05 * jax.random.normal(k2, (32, 16, 5, 5), jnp.float32),
        "conv2_b": jnp.linspace(-0.05, 0.05, 32, dtype=jnp.float32),
        "fc_w": 0.02 * jax.random.normal(k3, (output_dim, 32 * 4 * 4),
                                         jnp.float32),
        "fc_b": jnp.linspace(-0.01, 0.01, output_dim, dtype=jnp.float32),
    }


def prepare_kernel_params(params):
    """Pack PyTorch-layout params into kernel-ready matrices (host, once)."""
    w1 = np.asarray(params["conv1_w"], np.float32)   # (16, 3, 5, 5)
    b1 = np.asarray(params["conv1_b"], np.float32)   # (16,)
    w2 = np.asarray(params["conv2_w"], np.float32)   # (32, 16, 5, 5)
    b2 = np.asarray(params["conv2_b"], np.float32)   # (32,)
    fw = np.asarray(params["fc_w"], np.float32)      # (out_dim, 512)
    fb = np.asarray(params["fc_b"], np.float32)      # (out_dim,)

    c1, cin, k, _ = w1.shape
    c2 = w2.shape[0]
    od = fw.shape[0]

    # conv1 as a blocked 2x2 stride-1 conv on a 4x4 space-to-depth input.
    # patch column index: ((rb*2+cb)*16 + u*4 + v)*cin + ci
    # output channel e  : (dh*2+dw)*c1 + co
    w1m = np.zeros((2 * 2 * 4 * 4 * cin, 4 * c1), np.float32)
    for rb in range(2):
        for cb in range(2):
            for u in range(4):
                for v in range(4):
                    for dh in range(2):
                        for dw in range(2):
                            kh = 4 * rb + u - 2 * dh
                            kw = 4 * cb + v - 2 * dw
                            if 0 <= kh < k and 0 <= kw < k:
                                ki = ((rb * 2 + cb) * 16 + u * 4 + v) * cin
                                e0 = (dh * 2 + dw) * c1
                                w1m[ki:ki + cin, e0:e0 + c1] = w1[:, :, kh, kw].T
    b1e = np.tile(b1, 4).reshape(1, 4 * c1)

    # conv2 as a 3x3 stride-1 conv on the blocked conv1 output.
    # tap t = bh*3+bw; tshift[t] is the (i+bh-1, j+bw-1) spatial shift with
    # zero padding, w2m[t] the per-tap channel-mixing matrix.
    w2m = np.zeros((9, 4 * c1, c2), np.float32)
    tshift = np.zeros((9, 64, 64), np.float32)
    for bh in range(3):
        for bw in range(3):
            t = bh * 3 + bw
            for dh in range(2):
                for dw in range(2):
                    kh = 2 * bh + dh
                    kw = 2 * bw + dw
                    if kh < k and kw < k:
                        e0 = (dh * 2 + dw) * c1
                        w2m[t, e0:e0 + c1, :] = w2[:, :, kh, kw].T
            dr, dc = bh - 1, bw - 1
            for i in range(8):
                for j in range(8):
                    ii, jj = i + dr, j + dc
                    if 0 <= ii < 8 and 0 <= jj < 8:
                        tshift[t, i * 8 + j, ii * 8 + jj] = 1.0
    b2row = b2.reshape(1, c2)

    # AdaptiveAvgPool2d((4,4)) on the 8x8 conv2 output -> uniform 2x2 bins.
    pmat = np.zeros((16, 64), np.float32)
    for pi in range(4):
        for pj in range(4):
            for di in range(2):
                for dj in range(2):
                    pmat[pi * 4 + pj, (2 * pi + di) * 8 + (2 * pj + dj)] = 0.25

    # fc: fold PyTorch flatten order (c*16 + pi*4 + pj) into per-pooled-
    # position weight stacks of shape (c2, od).
    w3 = np.transpose(fw.reshape(od, c2, 16), (2, 1, 0)).copy()
    fcb = fb.reshape(1, od)

    return {
        "w1m": jnp.asarray(w1m), "b1e": jnp.asarray(b1e),
        "tshift": jnp.asarray(tshift),
        "w2m": jnp.asarray(w2m), "b2": jnp.asarray(b2row),
        "pmat": jnp.asarray(pmat),
        "w3": jnp.asarray(w3), "fcb": jnp.asarray(fcb),
    }


# ----------------------------------------------------------------------------
# Forward pass (single fused pallas_call)
# ----------------------------------------------------------------------------
@jax.jit
def feature_extractor_forward(kparams, x):
    """x: (B, 3, 32, 32) float32 NCHW -> (B, output_dim)."""
    B, C, H, W = x.shape
    if (C, H, W) != (3, 32, 32):
        # TODO(synk): generalize the space-to-depth prep / constant matrices to
        # other input sizes (PyTorch module is size-agnostic via adaptive pool).
        raise ValueError("kernel is specialized to 3x32x32 inputs")
    od = kparams["fcb"].shape[1]

    # Cheap one-shot prep on the ~12 KiB input: pad + 4x4 space-to-depth +
    # 2x2 tap gather for the blocked conv1 (pure static XLA glue).
    xp = jnp.pad(x, ((0, 0), (0, 0), (2, 2), (2, 2)))              # (B,3,36,36)
    x4 = xp.reshape(B, 3, 9, 4, 9, 4).transpose(0, 2, 4, 3, 5, 1)  # (B,9,9,4,4,3)
    parts = [x4[:, rb:rb + 8, cb:cb + 8] for rb in (0, 1) for cb in (0, 1)]
    patches = jnp.stack(parts, axis=3).reshape(B, 8, 8, 192)

    out = pl.pallas_call(
        _fused_forward_kernel,
        out_shape=jax.ShapeDtypeStruct((B, 1, od), jnp.float32),
        grid=(B,),
        in_specs=[
            pl.BlockSpec((1, 8, 8, 192), lambda b: (b, 0, 0, 0)),
            pl.BlockSpec(kparams["w1m"].shape, lambda b: (0, 0)),
            pl.BlockSpec(kparams["b1e"].shape, lambda b: (0, 0)),
            pl.BlockSpec(kparams["tshift"].shape, lambda b: (0, 0, 0)),
            pl.BlockSpec(kparams["w2m"].shape, lambda b: (0, 0, 0)),
            pl.BlockSpec(kparams["b2"].shape, lambda b: (0, 0)),
            pl.BlockSpec(kparams["pmat"].shape, lambda b: (0, 0)),
            pl.BlockSpec(kparams["w3"].shape, lambda b: (0, 0, 0)),
            pl.BlockSpec(kparams["fcb"].shape, lambda b: (0, 0)),
        ],
        out_specs=pl.BlockSpec((1, 1, od), lambda b: (b, 0, 0)),
        compiler_params=pltpu.CompilerParams(
            dimension_semantics=("parallel",)),
    )(patches, kparams["w1m"], kparams["b1e"], kparams["tshift"],
      kparams["w2m"], kparams["b2"], kparams["pmat"], kparams["w3"],
      kparams["fcb"])
    return out.reshape(B, od)


# ----------------------------------------------------------------------------
# Pure-JAX reference (correctness check)
# ----------------------------------------------------------------------------
def reference_forward(params, x):
    dn = ("NCHW", "OIHW", "NCHW")
    y = jax.lax.conv_general_dilated(x, params["conv1_w"], (2, 2),
                                     [(2, 2), (2, 2)], dimension_numbers=dn)
    y = jax.nn.relu(y + params["conv1_b"][None, :, None, None])
    y = jax.lax.conv_general_dilated(y, params["conv2_w"], (2, 2),
                                     [(2, 2), (2, 2)], dimension_numbers=dn)
    y = jax.nn.relu(y + params["conv2_b"][None, :, None, None])
    B, C, H, W = y.shape
    y = y.reshape(B, C, 4, H // 4, 4, W // 4).mean(axis=(3, 5))
    y = y.reshape(B, C * 16)
    return y @ params["fc_w"].T + params["fc_b"]


if __name__ == "__main__":
    key = jax.random.PRNGKey(0)
    kx, kp = jax.random.split(key)

    # Small input: batch=2, 3 channels, 32x32 spatial (as the module implies).
    x = jax.random.normal(kx, (2, 3, 32, 32), jnp.float32)
    params = init_params(kp, output_dim=64)
    kparams = prepare_kernel_params(params)      # one-time weight packing

    out = feature_extractor_forward(kparams, x)
    out = jax.block_until_ready(out)

    ref = reference_forward(params, x)
    assert out.shape == (2, 64), out.shape
    assert jnp.allclose(out, ref, rtol=2e-3, atol=2e-3), \
        float(jnp.max(jnp.abs(out - ref)))

    print("KERNEL_OK")
</pallas_src>

<mosaic_0001>
module attributes {stable_mosaic.version = 11 : i64} {
  func.func @_fused_forward_kernel(%arg0: i32, %arg1: memref<1x8x8x192xf32, #tpu.memory_space<vmem>>, %arg2: memref<192x64xf32, #tpu.memory_space<vmem>>, %arg3: memref<1x64xf32, #tpu.memory_space<vmem>>, %arg4: memref<9x64x64xf32, #tpu.memory_space<vmem>>, %arg5: memref<9x64x32xf32, #tpu.memory_space<vmem>>, %arg6: memref<1x32xf32, #tpu.memory_space<vmem>>, %arg7: memref<16x64xf32, #tpu.memory_space<vmem>>, %arg8: memref<16x32x64xf32, #tpu.memory_space<vmem>>, %arg9: memref<1x64xf32, #tpu.memory_space<vmem>>, %arg10: memref<1x1x64xf32, #tpu.memory_space<vmem>>) attributes {dimension_semantics = [#tpu.dimension_semantics<parallel>], iteration_bounds = array<i64: 2>, scalar_prefetch = 0 : i64, scratch_operands = 0 : i64, tpu.core_type = #tpu.core_type<tc>, window_params = [{transform_indices = @transform_0, window_bounds = array<i64: 1, 8, 8, 192>}, {pipeline_mode = #tpu.pipeline_mode<synchronous>, transform_indices = @transform_1, window_bounds = array<i64: 192, 64>}, {pipeline_mode = #tpu.pipeline_mode<synchronous>, transform_indices = @transform_2, window_bounds = array<i64: 1, 64>}, {pipeline_mode = #tpu.pipeline_mode<synchronous>, transform_indices = @transform_3, window_bounds = array<i64: 9, 64, 64>}, {pipeline_mode = #tpu.pipeline_mode<synchronous>, transform_indices = @transform_4, window_bounds = array<i64: 9, 64, 32>}, {pipeline_mode = #tpu.pipeline_mode<synchronous>, transform_indices = @transform_5, window_bounds = array<i64: 1, 32>}, {pipeline_mode = #tpu.pipeline_mode<synchronous>, transform_indices = @transform_6, window_bounds = array<i64: 16, 64>}, {pipeline_mode = #tpu.pipeline_mode<synchronous>, transform_indices = @transform_7, window_bounds = array<i64: 16, 32, 64>}, {pipeline_mode = #tpu.pipeline_mode<synchronous>, transform_indices = @transform_8, window_bounds = array<i64: 1, 64>}, {transform_indices = @transform_9, window_bounds = array<i64: 1, 1, 64>}]} {
    %c0 = arith.constant 0 : index
    %c0_0 = arith.constant 0 : index
    %c0_1 = arith.constant 0 : index
    %c0_2 = arith.constant 0 : index
    %0 = vector.load %arg1[%c0, %c0_0, %c0_1, %c0_2] : memref<1x8x8x192xf32, #tpu.memory_space<vmem>>, vector<1x8x8x192xf32>
    %1 = vector.shape_cast %0 : vector<1x8x8x192xf32> to vector<8x8x192xf32>
    %2 = vector.shape_cast %1 : vector<8x8x192xf32> to vector<64x192xf32>
    %c0_3 = arith.constant 0 : index
    %c0_4 = arith.constant 0 : index
    %3 = vector.load %arg2[%c0_3, %c0_4] : memref<192x64xf32, #tpu.memory_space<vmem>>, vector<192x64xf32>
    %cst = arith.constant dense<0.000000e+00> : vector<64x64xf32>
    %4 = tpu.matmul %2, %3, %cst {dimension_numbers = #tpu.dot_dimension_numbers<[1], [0], [0], [1], [0, 0, 1, 1], [], []>} : vector<64x192xf32>, vector<192x64xf32>, vector<64x64xf32> -> vector<64x64xf32>
    %c0_5 = arith.constant 0 : index
    %c0_6 = arith.constant 0 : index
    %5 = vector.load %arg3[%c0_5, %c0_6] : memref<1x64xf32, #tpu.memory_space<vmem>>, vector<1x64xf32>
    %6 = vector.broadcast %5 : vector<1x64xf32> to vector<64x64xf32>
    %7 = arith.addf %4, %6 : vector<64x64xf32>
    %cst_7 = arith.constant 0.000000e+00 : f32
    %8 = vector.broadcast %cst_7 : f32 to vector<64x64xf32>
    %9 = arith.maximumf %7, %8 : vector<64x64xf32>
    %cst_8 = arith.constant 0.000000e+00 : f32
    %10 = vector.broadcast %cst_8 : f32 to vector<64x32xf32>
    %c0_9 = arith.constant 0 : index
    %c0_10 = arith.constant 0 : index
    %c0_11 = arith.constant 0 : index
    %11 = vector.load %arg4[%c0_9, %c0_10, %c0_11] : memref<9x64x64xf32, #tpu.memory_space<vmem>>, vector<1x64x64xf32>
    %12 = vector.shape_cast %11 : vector<1x64x64xf32> to vector<64x64xf32>
    %cst_12 = arith.constant dense<0.000000e+00> : vector<64x64xf32>
    %13 = tpu.matmul %12, %9, %cst_12 {dimension_numbers = #tpu.dot_dimension_numbers<[1], [0], [0], [1], [0, 0, 1, 1], [], []>} : vector<64x64xf32>, vector<64x64xf32>, vector<64x64xf32> -> vector<64x64xf32>
    %c0_13 = arith.constant 0 : index
    %c0_14 = arith.constant 0 : index
    %c0_15 = arith.constant 0 : index
    %14 = vector.load %arg5[%c0_13, %c0_14, %c0_15] : memref<9x64x32xf32, #tpu.memory_space<vmem>>, vector<1x64x32xf32>
    %15 = vector.shape_cast %14 : vector<1x64x32xf32> to vector<64x32xf32>
    %cst_16 = arith.constant dense<0.000000e+00> : vector<64x32xf32>
    %16 = tpu.matmul %13, %15, %cst_16 {dimension_numbers = #tpu.dot_dimension_numbers<[1], [0], [0], [1], [0, 0, 1, 1], [], []>} : vector<64x64xf32>, vector<64x32xf32>, vector<64x32xf32> -> vector<64x32xf32>
    %17 = arith.addf %10, %16 : vector<64x32xf32>
    %c1 = arith.constant 1 : index
    %c0_17 = arith.constant 0 : index
    %c0_18 = arith.constant 0 : index
    %18 = vector.load %arg4[%c1, %c0_17, %c0_18] : memref<9x64x64xf32, #tpu.memory_space<vmem>>, vector<1x64x64xf32>
    %19 = vector.shape_cast %18 : vector<1x64x64xf32> to vector<64x64xf32>
    %cst_19 = arith.constant dense<0.000000e+00> : vector<64x64xf32>
    %20 = tpu.matmul %19, %9, %cst_19 {dimension_numbers = #tpu.dot_dimension_numbers<[1], [0], [0], [1], [0, 0, 1, 1], [], []>} : vector<64x64xf32>, vector<64x64xf32>, vector<64x64xf32> -> vector<64x64xf32>
    %c1_20 = arith.constant 1 : index
    %c0_21 = arith.constant 0 : index
    %c0_22 = arith.constant 0 : index
    %21 = vector.load %arg5[%c1_20, %c0_21, %c0_22] : memref<9x64x32xf32, #tpu.memory_space<vmem>>, vector<1x64x32xf32>
    %22 = vector.shape_cast %21 : vector<1x64x32xf32> to vector<64x32xf32>
    %cst_23 = arith.constant dense<0.000000e+00> : vector<64x32xf32>
    %23 = tpu.matmul %20, %22, %cst_23 {dimension_numbers = #tpu.dot_dimension_numbers<[1], [0], [0], [1], [0, 0, 1, 1], [], []>} : vector<64x64xf32>, vector<64x32xf32>, vector<64x32xf32> -> vector<64x32xf32>
    %24 = arith.addf %17, %23 : vector<64x32xf32>
    %c2 = arith.constant 2 : index
    %c0_24 = arith.constant 0 : index
    %c0_25 = arith.constant 0 : index
    %25 = vector.load %arg4[%c2, %c0_24, %c0_25] : memref<9x64x64xf32, #tpu.memory_space<vmem>>, vector<1x64x64xf32>
    %26 = vector.shape_cast %25 : vector<1x64x64xf32> to vector<64x64xf32>
    %cst_26 = arith.constant dense<0.000000e+00> : vector<64x64xf32>
    %27 = tpu.matmul %26, %9, %cst_26 {dimension_numbers = #tpu.dot_dimension_numbers<[1], [0], [0], [1], [0, 0, 1, 1], [], []>} : vector<64x64xf32>, vector<64x64xf32>, vector<64x64xf32> -> vector<64x64xf32>
    %c2_27 = arith.constant 2 : index
    %c0_28 = arith.constant 0 : index
    %c0_29 = arith.constant 0 : index
    %28 = vector.load %arg5[%c2_27, %c0_28, %c0_29] : memref<9x64x32xf32, #tpu.memory_space<vmem>>, vector<1x64x32xf32>
    %29 = vector.shape_cast %28 : vector<1x64x32xf32> to vector<64x32xf32>
    %cst_30 = arith.constant dense<0.000000e+00> : vector<64x32xf32>
    %30 = tpu.matmul %27, %29, %cst_30 {dimension_numbers = #tpu.dot_dimension_numbers<[1], [0], [0], [1], [0, 0, 1, 1], [], []>} : vector<64x64xf32>, vector<64x32xf32>, vector<64x32xf32> -> vector<64x32xf32>
    %31 = arith.addf %24, %30 : vector<64x32xf32>
    %c3 = arith.constant 3 : index
    %c0_31 = arith.constant 0 : index
    %c0_32 = arith.constant 0 : index
    %32 = vector.load %arg4[%c3, %c0_31, %c0_32] : memref<9x64x64xf32, #tpu.memory_space<vmem>>, vector<1x64x64xf32>
    %33 = vector.shape_cast %32 : vector<1x64x64xf32> to vector<64x64xf32>
    %cst_33 = arith.constant dense<0.000000e+00> : vector<64x64xf32>
    %34 = tpu.matmul %33, %9, %cst_33 {dimension_numbers = #tpu.dot_dimension_numbers<[1], [0], [0], [1], [0, 0, 1, 1], [], []>} : vector<64x64xf32>, vector<64x64xf32>, vector<64x64xf32> -> vector<64x64xf32>
    %c3_34 = arith.constant 3 : index
    %c0_35 = arith.constant 0 : index
    %c0_36 = arith.constant 0 : index
    %35 = vector.load %arg5[%c3_34, %c0_35, %c0_36] : memref<9x64x32xf32, #tpu.memory_space<vmem>>, vector<1x64x32xf32>
    %36 = vector.shape_cast %35 : vector<1x64x32xf32> to vector<64x32xf32>
    %cst_37 = arith.constant dense<0.000000e+00> : vector<64x32xf32>
    %37 = tpu.matmul %34, %36, %cst_37 {dimension_numbers = #tpu.dot_dimension_numbers<[1], [0], [0], [1], [0, 0, 1, 1], [], []>} : vector<64x64xf32>, vector<64x32xf32>, vector<64x32xf32> -> vector<64x32xf32>
    %38 = arith.addf %31, %37 : vector<64x32xf32>
    %c4 = arith.constant 4 : index
    %c0_38 = arith.constant 0 : index
    %c0_39 = arith.constant 0 : index
    %39 = vector.load %arg5[%c4, %c0_38, %c0_39] : memref<9x64x32xf32, #tpu.memory_space<vmem>>, vector<1x64x32xf32>
    %40 = vector.shape_cast %39 : vector<1x64x32xf32> to vector<64x32xf32>
    %cst_40 = arith.constant dense<0.000000e+00> : vector<64x32xf32>
    %41 = tpu.matmul %9, %40, %cst_40 {dimension_numbers = #tpu.dot_dimension_numbers<[1], [0], [0], [1], [0, 0, 1, 1], [], []>} : vector<64x64xf32>, vector<64x32xf32>, vector<64x32xf32> -> vector<64x32xf32>
    %42 = arith.addf %38, %41 : vector<64x32xf32>
    %c5 = arith.constant 5 : index
    %c0_41 = arith.constant 0 : index
    %c0_42 = arith.constant 0 : index
    %43 = vector.load %arg4[%c5, %c0_41, %c0_42] : memref<9x64x64xf32, #tpu.memory_space<vmem>>, vector<1x64x64xf32>
    %44 = vector.shape_cast %43 : vector<1x64x64xf32> to vector<64x64xf32>
    %cst_43 = arith.constant dense<0.000000e+00> : vector<64x64xf32>
    %45 = tpu.matmul %44, %9, %cst_43 {dimension_numbers = #tpu.dot_dimension_numbers<[1], [0], [0], [1], [0, 0, 1, 1], [], []>} : vector<64x64xf32>, vector<64x64xf32>, vector<64x64xf32> -> vector<64x64xf32>
    %c5_44 = arith.constant 5 : index
    %c0_45 = arith.constant 0 : index
    %c0_46 = arith.constant 0 : index
    %46 = vector.load %arg5[%c5_44, %c0_45, %c0_46] : memref<9x64x32xf32, #tpu.memory_space<vmem>>, vector<1x64x32xf32>
    %47 = vector.shape_cast %46 : vector<1x64x32xf32> to vector<64x32xf32>
    %cst_47 = arith.constant dense<0.000000e+00> : vector<64x32xf32>
    %48 = tpu.matmul %45, %47, %cst_47 {dimension_numbers = #tpu.dot_dimension_numbers<[1], [0], [0], [1], [0, 0, 1, 1], [], []>} : vector<64x64xf32>, vector<64x32xf32>, vector<64x32xf32> -> vector<64x32xf32>
    %49 = arith.addf %42, %48 : vector<64x32xf32>
    %c6 = arith.constant 6 : index
    %c0_48 = arith.constant 0 : index
    %c0_49 = arith.constant 0 : index
    %50 = vector.load %arg4[%c6, %c0_48, %c0_49] : memref<9x64x64xf32, #tpu.memory_space<vmem>>, vector<1x64x64xf32>
    %51 = vector.shape_cast %50 : vector<1x64x64xf32> to vector<64x64xf32>
    %cst_50 = arith.constant dense<0.000000e+00> : vector<64x64xf32>
    %52 = tpu.matmul %51, %9, %cst_50 {dimension_numbers = #tpu.dot_dimension_numbers<[1], [0], [0], [1], [0, 0, 1, 1], [], []>} : vector<64x64xf32>, vector<64x64xf32>, vector<64x64xf32> -> vector<64x64xf32>
    %c6_51 = arith.constant 6 : index
    %c0_52 = arith.constant 0 : index
    %c0_53 = arith.constant 0 : index
    %53 = vector.load %arg5[%c6_51, %c0_52, %c0_53] : memref<9x64x32xf32, #tpu.memory_space<vmem>>, vector<1x64x32xf32>
    %54 = vector.shape_cast %53 : vector<1x64x32xf32> to vector<64x32xf32>
    %cst_54 = arith.constant dense<0.000000e+00> : vector<64x32xf32>
    %55 = tpu.matmul %52, %54, %cst_54 {dimension_numbers = #tpu.dot_dimension_numbers<[1], [0], [0], [1], [0, 0, 1, 1], [], []>} : vector<64x64xf32>, vector<64x32xf32>, vector<64x32xf32> -> vector<64x32xf32>
    %56 = arith.addf %49, %55 : vector<64x32xf32>
    %c7 = arith.constant 7 : index
    %c0_55 = arith.constant 0 : index
    %c0_56 = arith.constant 0 : index
    %57 = vector.load %arg4[%c7, %c0_55, %c0_56] : memref<9x64x64xf32, #tpu.memory_space<vmem>>, vector<1x64x64xf32>
    %58 = vector.shape_cast %57 : vector<1x64x64xf32> to vector<64x64xf32>
    %cst_57 = arith.constant dense<0.000000e+00> : vector<64x64xf32>
    %59 = tpu.matmul %58, %9, %cst_57 {dimension_numbers = #tpu.dot_dimension_numbers<[1], [0], [0], [1], [0, 0, 1, 1], [], []>} : vector<64x64xf32>, vector<64x64xf32>, vector<64x64xf32> -> vector<64x64xf32>
    %c7_58 = arith.constant 7 : index
    %c0_59 = arith.constant 0 : index
    %c0_60 = arith.constant 0 : index
    %60 = vector.load %arg5[%c7_58, %c0_59, %c0_60] : memref<9x64x32xf32, #tpu.memory_space<vmem>>, vector<1x64x32xf32>
    %61 = vector.shape_cast %60 : vector<1x64x32xf32> to vector<64x32xf32>
    %cst_61 = arith.constant dense<0.000000e+00> : vector<64x32xf32>
    %62 = tpu.matmul %59, %61, %cst_61 {dimension_numbers = #tpu.dot_dimension_numbers<[1], [0], [0], [1], [0, 0, 1, 1], [], []>} : vector<64x64xf32>, vector<64x32xf32>, vector<64x32xf32> -> vector<64x32xf32>
    %63 = arith.addf %56, %62 : vector<64x32xf32>
    %c8 = arith.constant 8 : index
    %c0_62 = arith.constant 0 : index
    %c0_63 = arith.constant 0 : index
    %64 = vector.load %arg4[%c8, %c0_62, %c0_63] : memref<9x64x64xf32, #tpu.memory_space<vmem>>, vector<1x64x64xf32>
    %65 = vector.shape_cast %64 : vector<1x64x64xf32> to vector<64x64xf32>
    %cst_64 = arith.constant dense<0.000000e+00> : vector<64x64xf32>
    %66 = tpu.matmul %65, %9, %cst_64 {dimension_numbers = #tpu.dot_dimension_numbers<[1], [0], [0], [1], [0, 0, 1, 1], [], []>} : vector<64x64xf32>, vector<64x64xf32>, vector<64x64xf32> -> vector<64x64xf32>
    %c8_65 = arith.constant 8 : index
    %c0_66 = arith.constant 0 : index
    %c0_67 = arith.constant 0 : index
    %67 = vector.load %arg5[%c8_65, %c0_66, %c0_67] : memref<9x64x32xf32, #tpu.memory_space<vmem>>, vector<1x64x32xf32>
    %68 = vector.shape_cast %67 : vector<1x64x32xf32> to vector<64x32xf32>
    %cst_68 = arith.constant dense<0.000000e+00> : vector<64x32xf32>
    %69 = tpu.matmul %66, %68, %cst_68 {dimension_numbers = #tpu.dot_dimension_numbers<[1], [0], [0], [1], [0, 0, 1, 1], [], []>} : vector<64x64xf32>, vector<64x32xf32>, vector<64x32xf32> -> vector<64x32xf32>
    %70 = arith.addf %63, %69 : vector<64x32xf32>
    %c0_69 = arith.constant 0 : index
    %c0_70 = arith.constant 0 : index
    %71 = vector.load %arg6[%c0_69, %c0_70] : memref<1x32xf32, #tpu.memory_space<vmem>>, vector<1x32xf32>
    %72 = vector.broadcast %71 : vector<1x32xf32> to vector<64x32xf32>
    %73 = arith.addf %70, %72 : vector<64x32xf32>
    %cst_71 = arith.constant 0.000000e+00 : f32
    %74 = vector.broadcast %cst_71 : f32 to vector<64x32xf32>
    %75 = arith.maximumf %73, %74 : vector<64x32xf32>
    %c0_72 = arith.constant 0 : index
    %c0_73 = arith.constant 0 : index
    %76 = vector.load %arg7[%c0_72, %c0_73] : memref<16x64xf32, #tpu.memory_space<vmem>>, vector<16x64xf32>
    %cst_74 = arith.constant dense<0.000000e+00> : vector<16x32xf32>
    %77 = tpu.matmul %76, %75, %cst_74 {dimension_numbers = #tpu.dot_dimension_numbers<[1], [0], [0], [1], [0, 0, 1, 1], [], []>} : vector<16x64xf32>, vector<64x32xf32>, vector<16x32xf32> -> vector<16x32xf32>
    %c0_75 = arith.constant 0 : index
    %c0_76 = arith.constant 0 : index
    %78 = vector.load %arg9[%c0_75, %c0_76] : memref<1x64xf32, #tpu.memory_space<vmem>>, vector<1x64xf32>
    %79 = vector.extract_strided_slice %77 {offsets = [0, 0], sizes = [1, 32], strides = [1, 1]} : vector<16x32xf32> to vector<1x32xf32>
    %c0_77 = arith.constant 0 : index
    %c0_78 = arith.constant 0 : index
    %c0_79 = arith.constant 0 : index
    %80 = vector.load %arg8[%c0_77, %c0_78, %c0_79] : memref<16x32x64xf32, #tpu.memory_space<vmem>>, vector<1x32x64xf32>
    %81 = vector.shape_cast %80 : vector<1x32x64xf32> to vector<32x64xf32>
    %cst_80 = arith.constant dense<0.000000e+00> : vector<1x64xf32>
    %82 = tpu.matmul %79, %81, %cst_80 {dimension_numbers = #tpu.dot_dimension_numbers<[1], [0], [0], [1], [0, 0, 1, 1], [], []>} : vector<1x32xf32>, vector<32x64xf32>, vector<1x64xf32> -> vector<1x64xf32>
    %83 = arith.addf %78, %82 : vector<1x64xf32>
    %84 = vector.extract_strided_slice %77 {offsets = [1, 0], sizes = [1, 32], strides = [1, 1]} : vector<16x32xf32> to vector<1x32xf32>
    %c1_81 = arith.constant 1 : index
    %c0_82 = arith.constant 0 : index
    %c0_83 = arith.constant 0 : index
    %85 = vector.load %arg8[%c1_81, %c0_82, %c0_83] : memref<16x32x64xf32, #tpu.memory_space<vmem>>, vector<1x32x64xf32>
    %86 = vector.shape_cast %85 : vector<1x32x64xf32> to vector<32x64xf32>
    %cst_84 = arith.constant dense<0.000000e+00> : vector<1x64xf32>
    %87 = tpu.matmul %84, %86, %cst_84 {dimension_numbers = #tpu.dot_dimension_numbers<[1], [0], [0], [1], [0, 0, 1, 1], [], []>} : vector<1x32xf32>, vector<32x64xf32>, vector<1x64xf32> -> vector<1x64xf32>
    %88 = arith.addf %83, %87 : vector<1x64xf32>
    %89 = vector.extract_strided_slice %77 {offsets = [2, 0], sizes = [1, 32], strides = [1, 1]} : vector<16x32xf32> to vector<1x32xf32>
    %c2_85 = arith.constant 2 : index
    %c0_86 = arith.constant 0 : index
    %c0_87 = arith.constant 0 : index
    %90 = vector.load %arg8[%c2_85, %c0_86, %c0_87] : memref<16x32x64xf32, #tpu.memory_space<vmem>>, vector<1x32x64xf32>
    %91 = vector.shape_cast %90 : vector<1x32x64xf32> to vector<32x64xf32>
    %cst_88 = arith.constant dense<0.000000e+00> : vector<1x64xf32>
    %92 = tpu.matmul %89, %91, %cst_88 {dimension_numbers = #tpu.dot_dimension_numbers<[1], [0], [0], [1], [0, 0, 1, 1], [], []>} : vector<1x32xf32>, vector<32x64xf32>, vector<1x64xf32> -> vector<1x64xf32>
    %93 = arith.addf %88, %92 : vector<1x64xf32>
    %94 = vector.extract_strided_slice %77 {offsets = [3, 0], sizes = [1, 32], strides = [1, 1]} : vector<16x32xf32> to vector<1x32xf32>
    %c3_89 = arith.constant 3 : index
    %c0_90 = arith.constant 0 : index
    %c0_91 = arith.constant 0 : index
    %95 = vector.load %arg8[%c3_89, %c0_90, %c0_91] : memref<16x32x64xf32, #tpu.memory_space<vmem>>, vector<1x32x64xf32>
    %96 = vector.shape_cast %95 : vector<1x32x64xf32> to vector<32x64xf32>
    %cst_92 = arith.constant dense<0.000000e+00> : vector<1x64xf32>
    %97 = tpu.matmul %94, %96, %cst_92 {dimension_numbers = #tpu.dot_dimension_numbers<[1], [0], [0], [1], [0, 0, 1, 1], [], []>} : vector<1x32xf32>, vector<32x64xf32>, vector<1x64xf32> -> vector<1x64xf32>
    %98 = arith.addf %93, %97 : vector<1x64xf32>
    %99 = vector.extract_strided_slice %77 {offsets = [4, 0], sizes = [1, 32], strides = [1, 1]} : vector<16x32xf32> to vector<1x32xf32>
    %c4_93 = arith.constant 4 : index
    %c0_94 = arith.constant 0 : index
    %c0_95 = arith.constant 0 : index
    %100 = vector.load %arg8[%c4_93, %c0_94, %c0_95] : memref<16x32x64xf32, #tpu.memory_space<vmem>>, vector<1x32x64xf32>
    %101 = vector.shape_cast %100 : vector<1x32x64xf32> to vector<32x64xf32>
    %cst_96 = arith.constant dense<0.000000e+00> : vector<1x64xf32>
    %102 = tpu.matmul %99, %101, %cst_96 {dimension_numbers = #tpu.dot_dimension_numbers<[1], [0], [0], [1], [0, 0, 1, 1], [], []>} : vector<1x32xf32>, vector<32x64xf32>, vector<1x64xf32> -> vector<1x64xf32>
    %103 = arith.addf %98, %102 : vector<1x64xf32>
    %104 = vector.extract_strided_slice %77 {offsets = [5, 0], sizes = [1, 32], strides = [1, 1]} : vector<16x32xf32> to vector<1x32xf32>
    %c5_97 = arith.constant 5 : index
    %c0_98 = arith.constant 0 : index
    %c0_99 = arith.constant 0 : index
    %105 = vector.load %arg8[%c5_97, %c0_98, %c0_99] : memref<16x32x64xf32, #tpu.memory_space<vmem>>, vector<1x32x64xf32>
    %106 = vector.shape_cast %105 : vector<1x32x64xf32> to vector<32x64xf32>
    %cst_100 = arith.constant dense<0.000000e+00> : vector<1x64xf32>
    %107 = tpu.matmul %104, %106, %cst_100 {dimension_numbers = #tpu.dot_dimension_numbers<[1], [0], [0], [1], [0, 0, 1, 1], [], []>} : vector<1x32xf32>, vector<32x64xf32>, vector<1x64xf32> -> vector<1x64xf32>
    %108 = arith.addf %103, %107 : vector<1x64xf32>
    %109 = vector.extract_strided_slice %77 {offsets = [6, 0], sizes = [1, 32], strides = [1, 1]} : vector<16x32xf32> to vector<1x32xf32>
    %c6_101 = arith.constant 6 : index
    %c0_102 = arith.constant 0 : index
    %c0_103 = arith.constant 0 : index
    %110 = vector.load %arg8[%c6_101, %c0_102, %c0_103] : memref<16x32x64xf32, #tpu.memory_space<vmem>>, vector<1x32x64xf32>
    %111 = vector.shape_cast %110 : vector<1x32x64xf32> to vector<32x64xf32>
    %cst_104 = arith.constant dense<0.000000e+00> : vector<1x64xf32>
    %112 = tpu.matmul %109, %111, %cst_104 {dimension_numbers = #tpu.dot_dimension_numbers<[1], [0], [0], [1], [0, 0, 1, 1], [], []>} : vector<1x32xf32>, vector<32x64xf32>, vector<1x64xf32> -> vector<1x64xf32>
    %113 = arith.addf %108, %112 : vector<1x64xf32>
    %114 = vector.extract_strided_slice %77 {offsets = [7, 0], sizes = [1, 32], strides = [1, 1]} : vector<16x32xf32> to vector<1x32xf32>
    %c7_105 = arith.constant 7 : index
    %c0_106 = arith.constant 0 : index
    %c0_107 = arith.constant 0 : index
    %115 = vector.load %arg8[%c7_105, %c0_106, %c0_107] : memref<16x32x64xf32, #tpu.memory_space<vmem>>, vector<1x32x64xf32>
    %116 = vector.shape_cast %115 : vector<1x32x64xf32> to vector<32x64xf32>
    %cst_108 = arith.constant dense<0.000000e+00> : vector<1x64xf32>
    %117 = tpu.matmul %114, %116, %cst_108 {dimension_numbers = #tpu.dot_dimension_numbers<[1], [0], [0], [1], [0, 0, 1, 1], [], []>} : vector<1x32xf32>, vector<32x64xf32>, vector<1x64xf32> -> vector<1x64xf32>
    %118 = arith.addf %113, %117 : vector<1x64xf32>
    %119 = vector.extract_strided_slice %77 {offsets = [8, 0], sizes = [1, 32], strides = [1, 1]} : vector<16x32xf32> to vector<1x32xf32>
    %c8_109 = arith.constant 8 : index
    %c0_110 = arith.constant 0 : index
    %c0_111 = arith.constant 0 : index
    %120 = vector.load %arg8[%c8_109, %c0_110, %c0_111] : memref<16x32x64xf32, #tpu.memory_space<vmem>>, vector<1x32x64xf32>
    %121 = vector.shape_cast %120 : vector<1x32x64xf32> to vector<32x64xf32>
    %cst_112 = arith.constant dense<0.000000e+00> : vector<1x64xf32>
    %122 = tpu.matmul %119, %121, %cst_112 {dimension_numbers = #tpu.dot_dimension_numbers<[1], [0], [0], [1], [0, 0, 1, 1], [], []>} : vector<1x32xf32>, vector<32x64xf32>, vector<1x64xf32> -> vector<1x64xf32>
    %123 = arith.addf %118, %122 : vector<1x64xf32>
    %124 = vector.extract_strided_slice %77 {offsets = [9, 0], sizes = [1, 32], strides = [1, 1]} : vector<16x32xf32> to vector<1x32xf32>
    %c9 = arith.constant 9 : index
    %c0_113 = arith.constant 0 : index
    %c0_114 = arith.constant 0 : index
    %125 = vector.load %arg8[%c9, %c0_113, %c0_114] : memref<16x32x64xf32, #tpu.memory_space<vmem>>, vector<1x32x64xf32>
    %126 = vector.shape_cast %125 : vector<1x32x64xf32> to vector<32x64xf32>
    %cst_115 = arith.constant dense<0.000000e+00> : vector<1x64xf32>
    %127 = tpu.matmul %124, %126, %cst_115 {dimension_numbers = #tpu.dot_dimension_numbers<[1], [0], [0], [1], [0, 0, 1, 1], [], []>} : vector<1x32xf32>, vector<32x64xf32>, vector<1x64xf32> -> vector<1x64xf32>
    %128 = arith.addf %123, %127 : vector<1x64xf32>
    %129 = vector.extract_strided_slice %77 {offsets = [10, 0], sizes = [1, 32], strides = [1, 1]} : vector<16x32xf32> to vector<1x32xf32>
    %c10 = arith.constant 10 : index
    %c0_116 = arith.constant 0 : index
    %c0_117 = arith.constant 0 : index
    %130 = vector.load %arg8[%c10, %c0_116, %c0_117] : memref<16x32x64xf32, #tpu.memory_space<vmem>>, vector<1x32x64xf32>
    %131 = vector.shape_cast %130 : vector<1x32x64xf32> to vector<32x64xf32>
    %cst_118 = arith.constant dense<0.000000e+00> : vector<1x64xf32>
    %132 = tpu.matmul %129, %131, %cst_118 {dimension_numbers = #tpu.dot_dimension_numbers<[1], [0], [0], [1], [0, 0, 1, 1], [], []>} : vector<1x32xf32>, vector<32x64xf32>, vector<1x64xf32> -> vector<1x64xf32>
    %133 = arith.addf %128, %132 : vector<1x64xf32>
    %134 = vector.extract_strided_slice %77 {offsets = [11, 0], sizes = [1, 32], strides = [1, 1]} : vector<16x32xf32> to vector<1x32xf32>
    %c11 = arith.constant 11 : index
    %c0_119 = arith.constant 0 : index
    %c0_120 = arith.constant 0 : index
    %135 = vector.load %arg8[%c11, %c0_119, %c0_120] : memref<16x32x64xf32, #tpu.memory_space<vmem>>, vector<1x32x64xf32>
    %136 = vector.shape_cast %135 : vector<1x32x64xf32> to vector<32x64xf32>
    %cst_121 = arith.constant dense<0.000000e+00> : vector<1x64xf32>
    %137 = tpu.matmul %134, %136, %cst_121 {dimension_numbers = #tpu.dot_dimension_numbers<[1], [0], [0], [1], [0, 0, 1, 1], [], []>} : vector<1x32xf32>, vector<32x64xf32>, vector<1x64xf32> -> vector<1x64xf32>
    %138 = arith.addf %133, %137 : vector<1x64xf32>
    %139 = vector.extract_strided_slice %77 {offsets = [12, 0], sizes = [1, 32], strides = [1, 1]} : vector<16x32xf32> to vector<1x32xf32>
    %c12 = arith.constant 12 : index
    %c0_122 = arith.constant 0 : index
    %c0_123 = arith.constant 0 : index
    %140 = vector.load %arg8[%c12, %c0_122, %c0_123] : memref<16x32x64xf32, #tpu.memory_space<vmem>>, vector<1x32x64xf32>
    %141 = vector.shape_cast %140 : vector<1x32x64xf32> to vector<32x64xf32>
    %cst_124 = arith.constant dense<0.000000e+00> : vector<1x64xf32>
    %142 = tpu.matmul %139, %141, %cst_124 {dimension_numbers = #tpu.dot_dimension_numbers<[1], [0], [0], [1], [0, 0, 1, 1], [], []>} : vector<1x32xf32>, vector<32x64xf32>, vector<1x64xf32> -> vector<1x64xf32>
    %143 = arith.addf %138, %142 : vector<1x64xf32>
    %144 = vector.extract_strided_slice %77 {offsets = [13, 0], sizes = [1, 32], strides = [1, 1]} : vector<16x32xf32> to vector<1x32xf32>
    %c13 = arith.constant 13 : index
    %c0_125 = arith.constant 0 : index
    %c0_126 = arith.constant 0 : index
    %145 = vector.load %arg8[%c13, %c0_125, %c0_126] : memref<16x32x64xf32, #tpu.memory_space<vmem>>, vector<1x32x64xf32>
    %146 = vector.shape_cast %145 : vector<1x32x64xf32> to vector<32x64xf32>
    %cst_127 = arith.constant dense<0.000000e+00> : vector<1x64xf32>
    %147 = tpu.matmul %144, %146, %cst_127 {dimension_numbers = #tpu.dot_dimension_numbers<[1], [0], [0], [1], [0, 0, 1, 1], [], []>} : vector<1x32xf32>, vector<32x64xf32>, vector<1x64xf32> -> vector<1x64xf32>
    %148 = arith.addf %143, %147 : vector<1x64xf32>
    %149 = vector.extract_strided_slice %77 {offsets = [14, 0], sizes = [1, 32], strides = [1, 1]} : vector<16x32xf32> to vector<1x32xf32>
    %c14 = arith.constant 14 : index
    %c0_128 = arith.constant 0 : index
    %c0_129 = arith.constant 0 : index
    %150 = vector.load %arg8[%c14, %c0_128, %c0_129] : memref<16x32x64xf32, #tpu.memory_space<vmem>>, vector<1x32x64xf32>
    %151 = vector.shape_cast %150 : vector<1x32x64xf32> to vector<32x64xf32>
    %cst_130 = arith.constant dense<0.000000e+00> : vector<1x64xf32>
    %152 = tpu.matmul %149, %151, %cst_130 {dimension_numbers = #tpu.dot_dimension_numbers<[1], [0], [0], [1], [0, 0, 1, 1], [], []>} : vector<1x32xf32>, vector<32x64xf32>, vector<1x64xf32> -> vector<1x64xf32>
    %153 = arith.addf %148, %152 : vector<1x64xf32>
    %154 = vector.extract_strided_slice %77 {offsets = [15, 0], sizes = [1, 32], strides = [1, 1]} : vector<16x32xf32> to vector<1x32xf32>
    %c15 = arith.constant 15 : index
    %c0_131 = arith.constant 0 : index
    %c0_132 = arith.constant 0 : index
    %155 = vector.load %arg8[%c15, %c0_131, %c0_132] : memref<16x32x64xf32, #tpu.memory_space<vmem>>, vector<1x32x64xf32>
    %156 = vector.shape_cast %155 : vector<1x32x64xf32> to vector<32x64xf32>
    %cst_133 = arith.constant dense<0.000000e+00> : vector<1x64xf32>
    %157 = tpu.matmul %154, %156, %cst_133 {dimension_numbers = #tpu.dot_dimension_numbers<[1], [0], [0], [1], [0, 0, 1, 1], [], []>} : vector<1x32xf32>, vector<32x64xf32>, vector<1x64xf32> -> vector<1x64xf32>
    %158 = arith.addf %153, %157 : vector<1x64xf32>
    %c0_134 = arith.constant 0 : index
    %c0_135 = arith.constant 0 : index
    %c0_136 = arith.constant 0 : index
    %159 = vector.load %arg10[%c0_134, %c0_135, %c0_136] : memref<1x1x64xf32, #tpu.memory_space<vmem>>, vector<1x1x64xf32>
    %160 = vector.shape_cast %159 : vector<1x1x64xf32> to vector<1x64xf32>
    %161 = vector.shape_cast %158 : vector<1x64xf32> to vector<1x1x64xf32>
    tpu.vector_store %arg10[%c0_134, %c0_135, %c0_136], %161 {strides = array<i32>} : memref<1x1x64xf32, #tpu.memory_space<vmem>>, vector<1x1x64xf32>,
    return
  }
  func.func @transform_0(%arg0: i32) -> (i32, i32, i32, i32) {
    %c0_i32 = arith.constant 0 : i32
    %c0_i32_0 = arith.constant 0 : i32
    %c0_i32_1 = arith.constant 0 : i32
    %c0_i32_2 = arith.constant 0 : i32
    return %arg0, %c0_i32, %c0_i32_0, %c0_i32_1 : i32, i32, i32, i32
  }
  func.func @transform_1(%arg0: i32) -> (i32, i32) {
    %c0_i32 = arith.constant 0 : i32
    %c0_i32_0 = arith.constant 0 : i32
    %c0_i32_1 = arith.constant 0 : i32
    return %c0_i32, %c0_i32_0 : i32, i32
  }
  func.func @transform_2(%arg0: i32) -> (i32, i32) {
    %c0_i32 = arith.constant 0 : i32
    %c0_i32_0 = arith.constant 0 : i32
    %c0_i32_1 = arith.constant 0 : i32
    return %c0_i32, %c0_i32_0 : i32, i32
  }
  func.func @transform_3(%arg0: i32) -> (i32, i32, i32) {
    %c0_i32 = arith.constant 0 : i32
    %c0_i32_0 = arith.constant 0 : i32
    %c0_i32_1 = arith.constant 0 : i32
    %c0_i32_2 = arith.constant 0 : i32
    return %c0_i32, %c0_i32_0, %c0_i32_1 : i32, i32, i32
  }
  func.func @transform_4(%arg0: i32) -> (i32, i32, i32) {
    %c0_i32 = arith.constant 0 : i32
    %c0_i32_0 = arith.constant 0 : i32
    %c0_i32_1 = arith.constant 0 : i32
    %c0_i32_2 = arith.constant 0 : i32
    return %c0_i32, %c0_i32_0, %c0_i32_1 : i32, i32, i32
  }
  func.func @transform_5(%arg0: i32) -> (i32, i32) {
    %c0_i32 = arith.constant 0 : i32
    %c0_i32_0 = arith.constant 0 : i32
    %c0_i32_1 = arith.constant 0 : i32
    return %c0_i32, %c0_i32_0 : i32, i32
  }
  func.func @transform_6(%arg0: i32) -> (i32, i32) {
    %c0_i32 = arith.constant 0 : i32
    %c0_i32_0 = arith.constant 0 : i32
    %c0_i32_1 = arith.constant 0 : i32
    return %c0_i32, %c0_i32_0 : i32, i32
  }
  func.func @transform_7(%arg0: i32) -> (i32, i32, i32) {
    %c0_i32 = arith.constant 0 : i32
    %c0_i32_0 = arith.constant 0 : i32
    %c0_i32_1 = arith.constant 0 : i32
    %c0_i32_2 = arith.constant 0 : i32
    return %c0_i32, %c0_i32_0, %c0_i32_1 : i32, i32, i32
  }
  func.func @transform_8(%arg0: i32) -> (i32, i32) {
    %c0_i32 = arith.constant 0 : i32
    %c0_i32_0 = arith.constant 0 : i32
    %c0_i32_1 = arith.constant 0 : i32
    return %c0_i32, %c0_i32_0 : i32, i32
  }
  func.func @transform_9(%arg0: i32) -> (i32, i32, i32) {
    %c0_i32 = arith.constant 0 : i32
    %c0_i32_0 = arith.constant 0 : i32
    %c0_i32_1 = arith.constant 0 : i32
    return %arg0, %c0_i32, %c0_i32_0 : i32, i32, i32
  }
}

</mosaic_0001>

<llo_original>
// kernel: feature_extractor_forward.1
$region0: #{feature_extractor_forward.1}
  #allocation0 [shape = 'u32[]', space=smem, size = 0x4, offset = 0x4, fixed_abs, tag = 'smem constant byte address 0x4 - core index']
  #allocation1 [shape = 'u32[144,128]{1,0:T(1,128)}', space=vmem, size = 0x12000, scoped, tag = 'internal scratch']
  %s0 = inlined_call_operand.vmem [shape: f32[2,8,8,192], index: 0, kind: input, shape index: {}]
  %s1 = inlined_call_operand.vmem [shape: f32[192,64], index: 1, kind: input, shape index: {}]
  %s2 = inlined_call_operand.vmem [shape: f32[1,64], index: 2, kind: input, shape index: {}]
  %s3 = inlined_call_operand.vmem [shape: f32[9,64,64], index: 3, kind: input, shape index: {}]
  %s4 = inlined_call_operand.vmem [shape: f32[9,64,32], index: 4, kind: input, shape index: {}]
  %s5 = inlined_call_operand.vmem [shape: f32[1,32], index: 5, kind: input, shape index: {}]
  %s6 = inlined_call_operand.vmem [shape: f32[16,64], index: 6, kind: input, shape index: {}]
  %s7 = inlined_call_operand.vmem [shape: f32[16,32,64], index: 7, kind: input, shape index: {}]
  %s8 = inlined_call_operand.vmem [shape: f32[1,64], index: 8, kind: input, shape index: {}]
  %s9 = inlined_call_operand.hbm [shape: f32[2,1,64], index: 9, kind: output, shape index: {}]
  %s10 = sld [smem:[#allocation0]]
  $region69: #{feature_extractor_forward.1} parent=0
    _
  %s12 = ssub.s32 1, %s10
  %s13 = scalar_select 0, %s12, %s10
  $region1: #{feature_extractor_forward.1} parent=0
    #allocation2 [shape = 'u8[1024]{0}', space=vmem, size = 0x400, scoped, tag = 'output window, operand 0']
    #allocation3 [shape = 's32[2]{0}', space=sflag, size = 0x8, scoped, tag = 'scoped memory for feature_extractor_forward.1']
    %14 = vsyncpa [#allocation3], 0
    %s15 = scalar_lea.sflag [#allocation3], 1
    %16 = vsyncpa %s15, 0
    loop: start=0, step=1, limit=4
    $region2: #{feature_extractor_forward.1} parent=1 // loop_pre_header
      _
    $region3: #{feature_extractor_forward.1} parent=1 // loop_header
      %s18 = sphi 0, %s22
      %p19 = scmp.ge.s32.totalorder %s18, 4
      %s28 = sphi 0, %s30
      %s31 = sphi 0, %s28
      %s32 = sphi 0, %s31
      %s48 = sphi 0, %s32
      %s52 = sphi 0, %s52
      %s54 = sphi 0, %s52
      %s55 = sphi 0, %s54
      %s69 = sphi 0, %s55
      %s73 = sphi 0, %s73
      %s75 = sphi 0, %s73
      %s76 = sphi 0, %s75
      %s90 = sphi 0, %s76
      %s94 = sphi 0, %s94
      %s96 = sphi 0, %s94
      %s97 = sphi 0, %s96
      %s111 = sphi 0, %s97
      %s115 = sphi 0, %s115
      %s117 = sphi 0, %s115
      %s118 = sphi 0, %s117
      %s132 = sphi 0, %s118
      %s136 = sphi 0, %s136
      %s138 = sphi 0, %s136
      %s139 = sphi 0, %s138
      %s153 = sphi 0, %s139
      %s157 = sphi 0, %s157
      %s159 = sphi 0, %s157
      %s160 = sphi 0, %s159
      %s174 = sphi 0, %s160
      %s178 = sphi 0, %s178
      %s180 = sphi 0, %s178
      %s181 = sphi 0, %s180
      %s195 = sphi 0, %s181
      %s199 = sphi 0, %s199
      %s201 = sphi 0, %s199
      %s202 = sphi 0, %s201
      %s216 = sphi 0, %s202
      %s222 = sphi 0, %s224
      %s225 = sphi 0, %s222
      %s226 = sphi 0, %s225
      %s242 = sphi 0, %s226
    $region4: #{feature_extractor_forward.1} parent=1 // loop_header_branch
      %21 = sbr.rel (%p19) target = $region8
    $region5: #{feature_extractor_forward.1} parent=1 // loop_body
      %s23 = ssub.s32 %s18, 1
      %s24 = ssub.s32 %s18, 2
      %s25 = sadd.s32 %s18, 1
      %s26 = ssub.s32 %s18, %s25
      %p27 = scmp.eq.s32.totalorder %s26, 0
      %s29 = sadd.s32 %s28, 1
      %s30 = scalar_select %p27, %s28, %s29
      %p33 = pneg %p27
      %p34 = scmp.eq.s32.totalorder %s18, 1
      %p35 = por %p33, %p34
      %p36 = scmp.ne.s32.totalorder %s28, %s31
      %p37 = scmp.eq.s32.totalorder %s18, 0
      %p38 = por %p36, %p37
      %p39 = scmp.ne.s32.totalorder %s28, %s31
      %p40 = scmp.eq.s32.totalorder %s23, 1
      %p41 = por %p39, %p40
      %p42 = scmp.ne.s32.totalorder %s31, %s32
      %p43 = scmp.eq.s32.totalorder %s23, 0
      %p44 = por %p42, %p43
      %p45 = scmp.ne.s32.totalorder %s31, %s32
      %p46 = scmp.eq.s32.totalorder %s24, 1
      %p47 = por %p45, %p46
      %p49 = scmp.ne.s32.totalorder %s32, %s48
      %p50 = scmp.eq.s32.totalorder %s24, 0
      %p51 = por %p49, %p50
      %s53 = sadd.s32 %s52, 1
      %p56 = scmp.eq.s32.totalorder %s18, 1
      %p57 = scmp.ne.s32.totalorder %s52, %s54
      %p58 = scmp.eq.s32.totalorder %s18, 0
      %p59 = por %p57, %p58
      %p60 = scmp.ne.s32.totalorder %s52, %s54
      %p61 = scmp.eq.s32.totalorder %s23, 1
      %p62 = por %p60, %p61
      %p63 = scmp.ne.s32.totalorder %s54, %s55
      %p64 = scmp.eq.s32.totalorder %s23, 0
      %p65 = por %p63, %p64
      %p66 = scmp.ne.s32.totalorder %s54, %s55
      %p67 = scmp.eq.s32.totalorder %s24, 1
      %p68 = por %p66, %p67
      %p70 = scmp.ne.s32.totalorder %s55, %s69
      %p71 = scmp.eq.s32.totalorder %s24, 0
      %p72 = por %p70, %p71
      %s74 = sadd.s32 %s73, 1
      %p77 = scmp.eq.s32.totalorder %s18, 1
      %p78 = scmp.ne.s32.totalorder %s73, %s75
      %p79 = scmp.eq.s32.totalorder %s18, 0
      %p80 = por %p78, %p79
      %p81 = scmp.ne.s32.totalorder %s73, %s75
      %p82 = scmp.eq.s32.totalorder %s23, 1
      %p83 = por %p81, %p82
      %p84 = scmp.ne.s32.totalorder %s75, %s76
      %p85 = scmp.eq.s32.totalorder %s23, 0
      %p86 = por %p84, %p85
      %p87 = scmp.ne.s32.totalorder %s75, %s76
      %p88 = scmp.eq.s32.totalorder %s24, 1
      %p89 = por %p87, %p88
      %p91 = scmp.ne.s32.totalorder %s76, %s90
      %p92 = scmp.eq.s32.totalorder %s24, 0
      %p93 = por %p91, %p92
      %s95 = sadd.s32 %s94, 1
      %p98 = scmp.eq.s32.totalorder %s18, 1
      %p99 = scmp.ne.s32.totalorder %s94, %s96
      %p100 = scmp.eq.s32.totalorder %s18, 0
      %p101 = por %p99, %p100
      %p102 = scmp.ne.s32.totalorder %s94, %s96
      %p103 = scmp.eq.s32.totalorder %s23, 1
      %p104 = por %p102, %p103
      %p105 = scmp.ne.s32.totalorder %s96, %s97
      %p106 = scmp.eq.s32.totalorder %s23, 0
      %p107 = por %p105, %p106
      %p108 = scmp.ne.s32.totalorder %s96, %s97
      %p109 = scmp.eq.s32.totalorder %s24, 1
      %p110 = por %p108, %p109
      %p112 = scmp.ne.s32.totalorder %s97, %s111
      %p113 = scmp.eq.s32.totalorder %s24, 0
      %p114 = por %p112, %p113
      %s116 = sadd.s32 %s115, 1
      %p119 = scmp.eq.s32.totalorder %s18, 1
      %p120 = scmp.ne.s32.totalorder %s115, %s117
      %p121 = scmp.eq.s32.totalorder %s18, 0
      %p122 = por %p120, %p121
      %p123 = scmp.ne.s32.totalorder %s115, %s117
      %p124 = scmp.eq.s32.totalorder %s23, 1
      %p125 = por %p123, %p124
      %p126 = scmp.ne.s32.totalorder %s117, %s118
      %p127 = scmp.eq.s32.totalorder %s23, 0
      %p128 = por %p126, %p127
      %p129 = scmp.ne.s32.totalorder %s117, %s118
      %p130 = scmp.eq.s32.totalorder %s24, 1
      %p131 = por %p129, %p130
      %p133 = scmp.ne.s32.totalorder %s118, %s132
      %p134 = scmp.eq.s32.totalorder %s24, 0
      %p135 = por %p133, %p134
      %s137 = sadd.s32 %s136, 1
      %p140 = scmp.eq.s32.totalorder %s18, 1
      %p141 = scmp.ne.s32.totalorder %s136, %s138
      %p142 = scmp.eq.s32.totalorder %s18, 0
      %p143 = por %p141, %p142
      %p144 = scmp.ne.s32.totalorder %s136, %s138
      %p145 = scmp.eq.s32.totalorder %s23, 1
      %p146 = por %p144, %p145
      %p147 = scmp.ne.s32.totalorder %s138, %s139
      %p148 = scmp.eq.s32.totalorder %s23, 0
      %p149 = por %p147, %p148
      %p150 = scmp.ne.s32.totalorder %s138, %s139
      %p151 = scmp.eq.s32.totalorder %s24, 1
      %p152 = por %p150, %p151
      %p154 = scmp.ne.s32.totalorder %s139, %s153
      %p155 = scmp.eq.s32.totalorder %s24, 0
      %p156 = por %p154, %p155
      %s158 = sadd.s32 %s157, 1
      %p161 = scmp.eq.s32.totalorder %s18, 1
      %p162 = scmp.ne.s32.totalorder %s157, %s159
      %p163 = scmp.eq.s32.totalorder %s18, 0
      %p164 = por %p162, %p163
      %p165 = scmp.ne.s32.totalorder %s157, %s159
      %p166 = scmp.eq.s32.totalorder %s23, 1
      %p167 = por %p165, %p166
      %p168 = scmp.ne.s32.totalorder %s159, %s160
      %p169 = scmp.eq.s32.totalorder %s23, 0
      %p170 = por %p168, %p169
      %p171 = scmp.ne.s32.totalorder %s159, %s160
      %p172 = scmp.eq.s32.totalorder %s24, 1
      %p173 = por %p171, %p172
      %p175 = scmp.ne.s32.totalorder %s160, %s174
      %p176 = scmp.eq.s32.totalorder %s24, 0
      %p177 = por %p175, %p176
      %s179 = sadd.s32 %s178, 1
      %p182 = scmp.eq.s32.totalorder %s18, 1
      %p183 = scmp.ne.s32.totalorder %s178, %s180
      %p184 = scmp.eq.s32.totalorder %s18, 0
      %p185 = por %p183, %p184
      %p186 = scmp.ne.s32.totalorder %s178, %s180
      %p187 = scmp.eq.s32.totalorder %s23, 1
      %p188 = por %p186, %p187
      %p189 = scmp.ne.s32.totalorder %s180, %s181
      %p190 = scmp.eq.s32.totalorder %s23, 0
      %p191 = por %p189, %p190
      %p192 = scmp.ne.s32.totalorder %s180, %s181
      %p193 = scmp.eq.s32.totalorder %s24, 1
      %p194 = por %p192, %p193
      %p196 = scmp.ne.s32.totalorder %s181, %s195
      %p197 = scmp.eq.s32.totalorder %s24, 0
      %p198 = por %p196, %p197
      %s200 = sadd.s32 %s199, 1
      %p203 = scmp.eq.s32.totalorder %s18, 1
      %p204 = scmp.ne.s32.totalorder %s199, %s201
      %p205 = scmp.eq.s32.totalorder %s18, 0
      %p206 = por %p204, %p205
      %p207 = scmp.ne.s32.totalorder %s199, %s201
      %p208 = scmp.eq.s32.totalorder %s23, 1
      %p209 = por %p207, %p208
      %p210 = scmp.ne.s32.totalorder %s201, %s202
      %p211 = scmp.eq.s32.totalorder %s23, 0
      %p212 = por %p210, %p211
      %p213 = scmp.ne.s32.totalorder %s201, %s202
      %p214 = scmp.eq.s32.totalorder %s24, 1
      %p215 = por %p213, %p214
      %p217 = scmp.ne.s32.totalorder %s202, %s216
      %p218 = scmp.eq.s32.totalorder %s24, 0
      %p219 = por %p217, %p218
      %s220 = ssub.s32 %s18, %s25
      %p221 = scmp.eq.s32.totalorder %s220, 0
      %s223 = sadd.s32 %s222, 1
      %s224 = scalar_select %p221, %s222, %s223
      %p227 = pneg %p221
      %p228 = scmp.eq.s32.totalorder %s18, 1
      %p229 = por %p227, %p228
      %p230 = scmp.ne.s32.totalorder %s222, %s225
      %p231 = scmp.eq.s32.totalorder %s18, 0
      %p232 = por %p230, %p231
      %p233 = scmp.ne.s32.totalorder %s222, %s225
      %p234 = scmp.eq.s32.totalorder %s23, 1
      %p235 = por %p233, %p234
      %p236 = scmp.ne.s32.totalorder %s225, %s226
      %p237 = scmp.eq.s32.totalorder %s23, 0
      %p238 = por %p236, %p237
      %p239 = scmp.ne.s32.totalorder %s225, %s226
      %p240 = scmp.eq.s32.totalorder %s24, 1
      %p241 = por %p239, %p240
      %p243 = scmp.ne.s32.totalorder %s226, %s242
      %p244 = scmp.eq.s32.totalorder %s24, 0
      %p245 = por %p243, %p244
      %p246 = scmp.le.s32.totalorder 1, %s18
      %p247 = scmp.lt.s32.totalorder %s18, 3
      %p248 = pnand %p246, %p247
      %p249 = pneg %p248
      // Predicated region
      $region9: #{feature_extractor_forward.1} parent=5 // pred_check
        _
      $region10: #{feature_extractor_forward.1} parent=5 // pred_check_branch
        %251 = sbr.rel (%p248) target = $region12
      $region11: #{feature_extractor_forward.1} parent=5 // pred_region
        %s252 = ssub.s32 %s18, 1
        // Predicated region
        $region13: #{feature_extractor_forward.1} parent=11 // pred_check
          %p253 = pneg %p65
        $region14: #{feature_extractor_forward.1} parent=11 // pred_check_branch
          %255 = sbr.rel (%p253) target = $region16
        $region15: #{feature_extractor_forward.1} parent=11 // pred_region
          _
        $region16: #{feature_extractor_forward.1} parent=11 // pred_fallthru
          _
        // Predicated region
        $region17: #{feature_extractor_forward.1} parent=11 // pred_check
          %p256 = pneg %p86
        $region18: #{feature_extractor_forward.1} parent=11 // pred_check_branch
          %258 = sbr.rel (%p256) target = $region20
        $region19: #{feature_extractor_forward.1} parent=11 // pred_region
          _
        $region20: #{feature_extractor_forward.1} parent=11 // pred_fallthru
          _
        // Predicated region
        $region21: #{feature_extractor_forward.1} parent=11 // pred_check
          %p259 = pneg %p107
        $region22: #{feature_extractor_forward.1} parent=11 // pred_check_branch
          %261 = sbr.rel (%p259) target = $region24
        $region23: #{feature_extractor_forward.1} parent=11 // pred_region
          _
        $region24: #{feature_extractor_forward.1} parent=11 // pred_fallthru
          _
        // Predicated region
        $region25: #{feature_extractor_forward.1} parent=11 // pred_check
          %p262 = pneg %p128
        $region26: #{feature_extractor_forward.1} parent=11 // pred_check_branch
          %264 = sbr.rel (%p262) target = $region28
        $region27: #{feature_extractor_forward.1} parent=11 // pred_region
          _
        $region28: #{feature_extractor_forward.1} parent=11 // pred_fallthru
          _
        // Predicated region
        $region29: #{feature_extractor_forward.1} parent=11 // pred_check
          %p265 = pneg %p149
        $region30: #{feature_extractor_forward.1} parent=11 // pred_check_branch
          %267 = sbr.rel (%p265) target = $region32
        $region31: #{feature_extractor_forward.1} parent=11 // pred_region
          _
        $region32: #{feature_extractor_forward.1} parent=11 // pred_fallthru
          _
        // Predicated region
        $region33: #{feature_extractor_forward.1} parent=11 // pred_check
          %p268 = pneg %p170
        $region34: #{feature_extractor_forward.1} parent=11 // pred_check_branch
          %270 = sbr.rel (%p268) target = $region36
        $region35: #{feature_extractor_forward.1} parent=11 // pred_region
          _
        $region36: #{feature_extractor_forward.1} parent=11 // pred_fallthru
          _
        // Predicated region
        $region37: #{feature_extractor_forward.1} parent=11 // pred_check
          %p271 = pneg %p191
        $region38: #{feature_extractor_forward.1} parent=11 // pred_check_branch
          %273 = sbr.rel (%p271) target = $region40
        $region39: #{feature_extractor_forward.1} parent=11 // pred_region
          _
        $region40: #{feature_extractor_forward.1} parent=11 // pred_fallthru
          _
        // Predicated region
        $region41: #{feature_extractor_forward.1} parent=11 // pred_check
          %p274 = pneg %p212
        $region42: #{feature_extractor_forward.1} parent=11 // pred_check_branch
          %276 = sbr.rel (%p274) target = $region44
        $region43: #{feature_extractor_forward.1} parent=11 // pred_region
          _
        $region44: #{feature_extractor_forward.1} parent=11 // pred_fallthru
          _
      $region12: #{feature_extractor_forward.1} parent=5 // pred_fallthru
        _
      %p277 = scmp.lt.s32.totalorder %s18, 2
      // Predicated region
      $region45: #{feature_extractor_forward.1} parent=5 // pred_check
        %p278 = pneg %p277
      $region46: #{feature_extractor_forward.1} parent=5 // pred_check_branch
        %280 = sbr.rel (%p278) target = $region48
      $region47: #{feature_extractor_forward.1} parent=5 // pred_region
        // Predicated region
        $region49: #{feature_extractor_forward.1} parent=47 // pred_check
          %p281 = pneg %p38
        $region50: #{feature_extractor_forward.1} parent=47 // pred_check_branch
          %283 = sbr.rel (%p281) target = $region52
        $region51: #{feature_extractor_forward.1} parent=47 // pred_region
          %p284 = scmp.lt.s32.totalorder %s18, 1
          %s285 = scalar_select %p284, %s18, 1
          %s286 = smul.addr %s285, 16
          %s287 = smul.addr %s286, 8
          %s288 = scalar_lea.vmem %s0, %s287
        $region52: #{feature_extractor_forward.1} parent=47 // pred_fallthru
          _
      $region48: #{feature_extractor_forward.1} parent=5 // pred_fallthru
        _
      %p289 = scmp.le.s32.totalorder 1, %s18
      %p290 = scmp.lt.s32.totalorder %s18, 3
      %p291 = pnand %p289, %p290
      %p292 = pneg %p291
      // Predicated region
      $region53: #{feature_extractor_forward.1} parent=5 // pred_check
        _
      $region54: #{feature_extractor_forward.1} parent=5 // pred_check_branch
        %294 = sbr.rel (%p291) target = $region56
      $region55: #{feature_extractor_forward.1} parent=5 // pred_region
        %s295 = ssub.s32 %s18, 1
        %p296 = scmp.lt.s32.totalorder %s23, 1
        %s297 = scalar_select %p296, %s23, 1
        %s298 = smul.addr %s297, 16
        %s299 = smul.addr %s298, 8
        %s300 = scalar_lea.vmem %s0, %s299
        %p301 = pneg %p44
        %p302 = pneg %p41
        %p303 = pneg %p65
        %p304 = pneg %p62
        %p305 = pneg %p86
        %p306 = pneg %p83
        %p307 = pneg %p107
        %p308 = pneg %p104
        %p309 = pneg %p128
        %p310 = pneg %p125
        %p311 = pneg %p149
        %p312 = pneg %p146
        %p313 = pneg %p170
        %p314 = pneg %p167
        %p315 = pneg %p191
        %p316 = pneg %p188
        %p317 = pneg %p212
        %p318 = pneg %p209
        %p319 = pneg %p238
        %p320 = pneg %p235
        %s321 = sand.u32 %s225, 1
        %s322 = scalar_lea.sflag [#allocation3], %s321
        %s323 = sand.u32 %s225, 1
        %s324 = scalar_lea.vmem [#allocation2], %s323
        %p325 = scmp.lt.s32.totalorder %s23, 1
        %s326 = scalar_select %p325, %s23, 1
        %s327 = smul.addr %s326, 16
        %s328 = smul.addr %s327, 8
        %s329 = scalar_lea.vmem %s0, %s328
        %v330 = vld [vmem:[%s329] sm:$0xff]
        %v331 = vld [vmem:[%s329 + $0x8] sm:$0xff]
        %v332 = vld [vmem:[%s329 + $0x10] sm:$0xff]
        %v333 = vld [vmem:[%s329 + $0x18] sm:$0xff]
        %v334 = vld [vmem:[%s329 + $0x20] sm:$0xff]
        %v335 = vld [vmem:[%s329 + $0x28] sm:$0xff]
        %v336 = vld [vmem:[%s329 + $0x30] sm:$0xff]
        %v337 = vld [vmem:[%s329 + $0x38] sm:$0xff]
        %v338 = vld [vmem:[%s329 + $0x40] sm:$0xff]
        %v339 = vld [vmem:[%s329 + $0x48] sm:$0xff]
        %v340 = vld [vmem:[%s329 + $0x50] sm:$0xff]
        %v341 = vld [vmem:[%s329 + $0x58] sm:$0xff]
        %v342 = vld [vmem:[%s329 + $0x60] sm:$0xff]
        %v343 = vld [vmem:[%s329 + $0x68] sm:$0xff]
        %v344 = vld [vmem:[%s329 + $0x70] sm:$0xff]
        %v345 = vld [vmem:[%s329 + $0x78] sm:$0xff]
        %v346 = vld [vmem:[%s1] sm:$0xff]
        %v347 = vld [vmem:[%s1 + $0x8] sm:$0xff]
        %v348 = vld [vmem:[%s1 + $0x10] sm:$0xff]
        %v349 = vld [vmem:[%s1 + $0x18] sm:$0xff]
        %v350 = vld [vmem:[%s1 + $0x20] sm:$0xff]
        %v351 = vld [vmem:[%s1 + $0x28] sm:$0xff]
        %v352 = vld [vmem:[%s1 + $0x30] sm:$0xff]
        %v353 = vld [vmem:[%s1 + $0x38] sm:$0xff]
        %v354 = vld [vmem:[%s1 + $0x40] sm:$0xff]
        %v355 = vld [vmem:[%s1 + $0x48] sm:$0xff]
        %v356 = vld [vmem:[%s1 + $0x50] sm:$0xff]
        %v357 = vld [vmem:[%s1 + $0x58] sm:$0xff]
        %v358 = vld [vmem:[%s1 + $0x60] sm:$0xff]
        %v359 = vld [vmem:[%s1 + $0x68] sm:$0xff]
        %v360 = vld [vmem:[%s1 + $0x70] sm:$0xff]
        %v361 = vld [vmem:[%s1 + $0x78] sm:$0xff]
        %v362 = vld [vmem:[%s1 + $0x80] sm:$0xff]
        %v363 = vld [vmem:[%s1 + $0x88] sm:$0xff]
        %v364 = vld [vmem:[%s1 + $0x90] sm:$0xff]
        %v365 = vld [vmem:[%s1 + $0x98] sm:$0xff]
        %v366 = vld [vmem:[%s1 + $0xa0] sm:$0xff]
        %v367 = vld [vmem:[%s1 + $0xa8] sm:$0xff]
        %v368 = vld [vmem:[%s1 + $0xb0] sm:$0xff]
        %v369 = vld [vmem:[%s1 + $0xb8] sm:$0xff]
        %v370 = vld [vmem:[%s2] sm:$0x1]
        %v372 = vlaneseq
        %v373 = vshrl.u32 %v372, 7
        %v374 = vsub.s32 0, %v373
        %v375 = vrot.slane %v370, %v374
        %vm377 = vcmask 523264
        %v379 = vsel %vm377, %v331, 0
        %v382 = vsel %vm377, %v333, 0
        %v385 = vsel %vm377, %v335, 0
        %v388 = vsel %vm377, %v337, 0
        %v391 = vsel %vm377, %v339, 0
        %v394 = vsel %vm377, %v341, 0
        %v397 = vsel %vm377, %v343, 0
        %v400 = vsel %vm377, %v345, 0
        %402 = vmatprep.subr.mxu0 0.0
        %403 = vmatpush1.msra.mxu0 %v361
        %404 = vmatprep.subr.mxu0 0.0
        %405 = vmatpush1.msra.mxu0 %v360
        %406 = vmatprep.subr.mxu0 0.0
        %407 = vmatpush1.msra.mxu0 %v359
        %408 = vmatprep.subr.mxu0 0.0
        %409 = vmatpush1.msra.mxu0 %v358
        %410 = vmatprep.subr.mxu0 0.0
        %411 = vmatpush1.msra.mxu0 %v357
        %412 = vmatprep.subr.mxu0 0.0
        %413 = vmatpush1.msra.mxu0 %v356
        %414 = vmatprep.subr.mxu0 0.0
        %415 = vmatpush1.msra.mxu0 %v355
        %416 = vmatprep.subr.mxu0 0.0
        %417 = vmatpush1.msra.mxu0 %v354
        %418 = vmatprep.subr.mxu0 0.0
        %419 = vmatpush1.msra.mxu0 %v353
        %420 = vmatprep.subr.mxu0 0.0
        %421 = vmatpush1.msra.mxu0 %v352
        %422 = vmatprep.subr.mxu0 0.0
        %423 = vmatpush1.msra.mxu0 %v351
        %424 = vmatprep.subr.mxu0 0.0
        %425 = vmatpush1.msra.mxu0 %v350
        %426 = vmatprep.subr.mxu0 0.0
        %427 = vmatpush1.msra.mxu0 %v349
        %428 = vmatprep.subr.mxu0 0.0
        %429 = vmatpush1.msra.mxu0 %v348
        %430 = vmatprep.subr.mxu0 0.0
        %431 = vmatpush1.msra.mxu0 %v347
        %432 = vmatprep.subr.mxu0 0.0
        %433 = vmatpush1.msra.mxu0 %v346
        %434 = vmatprep.subr.mxu0 0.0
        %435 = vmatpush2.msra.mxu0 0.0
        %436 = vmatprep.subr.mxu0 0.0
        %437 = vmatpush2.msra.mxu0 0.0
        %438 = vmatprep.subr.mxu0 0.0
        %439 = vmatpush2.msra.mxu0 0.0
        %440 = vmatprep.subr.mxu0 0.0
        %441 = vmatpush2.msra.mxu0 0.0
        %442 = vmatprep.subr.mxu0 0.0
        %443 = vmatpush2.msra.mxu0 0.0
        %444 = vmatprep.subr.mxu0 0.0
        %445 = vmatpush2.msra.mxu0 0.0
        %446 = vmatprep.subr.mxu0 0.0
        %447 = vmatpush2.msra.mxu0 0.0
        %448 = vmatprep.subr.mxu0 0.0
        %449 = vmatpush2.msra.mxu0 0.0
        %450 = vmatprep.subr.mxu0 0.0
        %451 = vmatpush2.msra.mxu0 %v369
        %452 = vmatprep.subr.mxu0 0.0
        %453 = vmatpush2.msra.mxu0 %v368
        %454 = vmatprep.subr.mxu0 0.0
        %455 = vmatpush2.msra.mxu0 %v367
        %456 = vmatprep.subr.mxu0 0.0
        %457 = vmatpush2.msra.mxu0 %v366
        %458 = vmatprep.subr.mxu0 0.0
        %459 = vmatpush2.msra.mxu0 %v365
        %460 = vmatprep.subr.mxu0 0.0
        %461 = vmatpush2.msra.mxu0 %v364
        %462 = vmatprep.subr.mxu0 0.0
        %463 = vmatpush2.msra.mxu0 %v363
        %464 = vmatprep.subr.mxu0 0.0
        %465 = vmatpush2.msra.mxu0 %v362
        %466 = vmatprep.mubr.f32.mxu0 %v379
        %467 = vmatmul.mubr.f32.gmra.mxu0 %v330
        %v468 = vpop.f32.mrf.mxu0
        %v469 = vadd.f32 %v375, %v468
        %v470 = vpop.f32.mrf.mxu0
        %471 = vmatprep.mubr.f32.mxu0 %v382
        %472 = vmatmul.mubr.f32.gmra.mxu0 %v332
        %v473 = vpop.f32.mrf.mxu0
        %v474 = vadd.f32 %v375, %v473
        %v475 = vpop.f32.mrf.mxu0
        %476 = vmatprep.mubr.f32.mxu0 %v385
        %477 = vmatmul.mubr.f32.gmra.mxu0 %v334
        %v478 = vpop.f32.mrf.mxu0
        %v479 = vadd.f32 %v375, %v478
        %v480 = vpop.f32.mrf.mxu0
        %481 = vmatprep.mubr.f32.mxu0 %v388
        %482 = vmatmul.mubr.f32.gmra.mxu0 %v336
        %v483 = vpop.f32.mrf.mxu0
        %v484 = vadd.f32 %v375, %v483
        %v485 = vpop.f32.mrf.mxu0
        %486 = vmatprep.mubr.f32.mxu0 %v391
        %487 = vmatmul.mubr.f32.gmra.mxu0 %v338
        %v488 = vpop.f32.mrf.mxu0
        %v489 = vadd.f32 %v375, %v488
        %v490 = vpop.f32.mrf.mxu0
        %491 = vmatprep.mubr.f32.mxu0 %v394
        %492 = vmatmul.mubr.f32.gmra.mxu0 %v340
        %v493 = vpop.f32.mrf.mxu0
        %v494 = vadd.f32 %v375, %v493
        %v495 = vpop.f32.mrf.mxu0
        %496 = vmatprep.mubr.f32.mxu0 %v397
        %497 = vmatmul.mubr.f32.gmra.mxu0 %v342
        %v498 = vpop.f32.mrf.mxu0
        %v499 = vadd.f32 %v375, %v498
        %v500 = vpop.f32.mrf.mxu0
        %501 = vmatprep.mubr.f32.mxu0 %v400
        %502 = vmatmul.mubr.f32.gmra.mxu0 %v344
        %v503 = vpop.f32.mrf.mxu0
        %v504 = vadd.f32 %v375, %v503
        %v505 = vpop.f32.mrf.mxu0
        %506 = vdwg.mxu0
        %v507 = vmax.f32 %v469, 0.0
        %v508 = vmax.f32 %v474, 0.0
        %v509 = vmax.f32 %v479, 0.0
        %v510 = vmax.f32 %v484, 0.0
        %v511 = vmax.f32 %v489, 0.0
        %v512 = vmax.f32 %v494, 0.0
        %v513 = vmax.f32 %v499, 0.0
        %v514 = vmax.f32 %v504, 0.0
        %v515 = vld [vmem:[%s3] sm:$0xff]
        %v516 = vld [vmem:[%s3 + $0x8] sm:$0xff]
        %v517 = vld [vmem:[%s3 + $0x10] sm:$0xff]
        %v518 = vld [vmem:[%s3 + $0x18] sm:$0xff]
        %v519 = vld [vmem:[%s3 + $0x20] sm:$0xff]
        %v520 = vld [vmem:[%s3 + $0x28] sm:$0xff]
        %v521 = vld [vmem:[%s3 + $0x30] sm:$0xff]
        %v522 = vld [vmem:[%s3 + $0x38] sm:$0xff]
        %v524 = vsel %vm377, %v515, 0
        %v527 = vsel %vm377, %v516, 0
        %v530 = vsel %vm377, %v517, 0
        %v533 = vsel %vm377, %v518, 0
        %v536 = vsel %vm377, %v519, 0
        %v539 = vsel %vm377, %v520, 0
        %v542 = vsel %vm377, %v521, 0
        %v545 = vsel %vm377, %v522, 0
        %547 = vmatprep.subr.mxu0 0.0
        %548 = vmatpush1.msra.mxu0 0.0
        %549 = vmatprep.subr.mxu0 0.0
        %550 = vmatpush1.msra.mxu0 0.0
        %551 = vmatprep.subr.mxu0 0.0
        %552 = vmatpush1.msra.mxu0 0.0
        %553 = vmatprep.subr.mxu0 0.0
        %554 = vmatpush1.msra.mxu0 0.0
        %555 = vmatprep.subr.mxu0 0.0
        %556 = vmatpush1.msra.mxu0 0.0
        %557 = vmatprep.subr.mxu0 0.0
        %558 = vmatpush1.msra.mxu0 0.0
        %559 = vmatprep.subr.mxu0 0.0
        %560 = vmatpush1.msra.mxu0 0.0
        %561 = vmatprep.subr.mxu0 0.0
        %562 = vmatpush1.msra.mxu0 0.0
        %563 = vmatprep.subr.mxu0 0.0
        %564 = vmatpush1.msra.mxu0 %v514
        %565 = vmatprep.subr.mxu0 0.0
        %566 = vmatpush1.msra.mxu0 %v513
        %567 = vmatprep.subr.mxu0 0.0
        %568 = vmatpush1.msra.mxu0 %v512
        %569 = vmatprep.subr.mxu0 0.0
        %570 = vmatpush1.msra.mxu0 %v511
        %571 = vmatprep.subr.mxu0 0.0
        %572 = vmatpush1.msra.mxu0 %v510
        %573 = vmatprep.subr.mxu0 0.0
        %574 = vmatpush1.msra.mxu0 %v509
        %575 = vmatprep.subr.mxu0 0.0
        %576 = vmatpush1.msra.mxu0 %v508
        %577 = vmatprep.subr.mxu0 0.0
        %578 = vmatpush1.msra.mxu0 %v507
        %579 = vmatprep.subr.mxu0 0.0
        %580 = vmatpush2.msra.mxu0 0.0
        %581 = vmatprep.subr.mxu0 0.0
        %582 = vmatpush2.msra.mxu0 0.0
        %583 = vmatprep.subr.mxu0 0.0
        %584 = vmatpush2.msra.mxu0 0.0
        %585 = vmatprep.subr.mxu0 0.0
        %586 = vmatpush2.msra.mxu0 0.0
        %587 = vmatprep.subr.mxu0 0.0
        %588 = vmatpush2.msra.mxu0 0.0
        %589 = vmatprep.subr.mxu0 0.0
        %590 = vmatpush2.msra.mxu0 0.0
        %591 = vmatprep.subr.mxu0 0.0
        %592 = vmatpush2.msra.mxu0 0.0
        %593 = vmatprep.subr.mxu0 0.0
        %594 = vmatpush2.msra.mxu0 0.0
        %595 = vmatprep.subr.mxu0 0.0
        %596 = vmatpush2.msra.mxu0 0.0
        %597 = vmatprep.subr.mxu0 0.0
        %598 = vmatpush2.msra.mxu0 0.0
        %599 = vmatprep.subr.mxu0 0.0
        %600 = vmatpush2.msra.mxu0 0.0
        %601 = vmatprep.subr.mxu0 0.0
        %602 = vmatpush2.msra.mxu0 0.0
        %603 = vmatprep.subr.mxu0 0.0
        %604 = vmatpush2.msra.mxu0 0.0
        %605 = vmatprep.subr.mxu0 0.0
        %606 = vmatpush2.msra.mxu0 0.0
        %607 = vmatprep.subr.mxu0 0.0
        %608 = vmatpush2.msra.mxu0 0.0
        %609 = vmatprep.subr.mxu0 0.0
        %610 = vmatpush2.msra.mxu0 0.0
        %611 = vmatprep.mubr.f32.mxu0 0.0
        %612 = vmatmul.mubr.f32.gmra.mxu0 %v524
        %v613 = vpop.f32.mrf.mxu0
        %v614 = vadd.f32 0.0, %v613
        %v615 = vpop.f32.mrf.mxu0
        %616 = vmatprep.mubr.f32.mxu0 0.0
        %617 = vmatmul.mubr.f32.gmra.mxu0 %v527
        %v618 = vpop.f32.mrf.mxu0
        %v619 = vadd.f32 0.0, %v618
        %v620 = vpop.f32.mrf.mxu0
        %621 = vmatprep.mubr.f32.mxu0 0.0
        %622 = vmatmul.mubr.f32.gmra.mxu0 %v530
        %v623 = vpop.f32.mrf.mxu0
        %v624 = vadd.f32 0.0, %v623
        %v625 = vpop.f32.mrf.mxu0
        %626 = vmatprep.mubr.f32.mxu0 0.0
        %627 = vmatmul.mubr.f32.gmra.mxu0 %v533
        %v628 = vpop.f32.mrf.mxu0
        %v629 = vadd.f32 0.0, %v628
        %v630 = vpop.f32.mrf.mxu0
        %631 = vmatprep.mubr.f32.mxu0 0.0
        %632 = vmatmul.mubr.f32.gmra.mxu0 %v536
        %v633 = vpop.f32.mrf.mxu0
        %v634 = vadd.f32 0.0, %v633
        %v635 = vpop.f32.mrf.mxu0
        %636 = vmatprep.mubr.f32.mxu0 0.0
        %637 = vmatmul.mubr.f32.gmra.mxu0 %v539
        %v638 = vpop.f32.mrf.mxu0
        %v639 = vadd.f32 0.0, %v638
        %v640 = vpop.f32.mrf.mxu0
        %641 = vmatprep.mubr.f32.mxu0 0.0
        %642 = vmatmul.mubr.f32.gmra.mxu0 %v542
        %v643 = vpop.f32.mrf.mxu0
        %v644 = vadd.f32 0.0, %v643
        %v645 = vpop.f32.mrf.mxu0
        %646 = vmatprep.mubr.f32.mxu0 0.0
        %647 = vmatmul.mubr.f32.gmra.mxu0 %v545
        %v648 = vpop.f32.mrf.mxu0
        %v649 = vadd.f32 0.0, %v648
        %v650 = vpop.f32.mrf.mxu0
        %651 = vdwg.mxu0
        %v652 = vld [vmem:[%s4] sm:$0xff]
        %v653 = vld [vmem:[%s4 + $0x8] sm:$0xff]
        %v654 = vld [vmem:[%s4 + $0x10] sm:$0xff]
        %v655 = vld [vmem:[%s4 + $0x18] sm:$0xff]
        %v656 = vld [vmem:[%s4 + $0x20] sm:$0xff]
        %v657 = vld [vmem:[%s4 + $0x28] sm:$0xff]
        %v658 = vld [vmem:[%s4 + $0x30] sm:$0xff]
        %v659 = vld [vmem:[%s4 + $0x38] sm:$0xff]
        %s660 = scalar_lea.vmem %s3, 64
        %v661 = vld [vmem:[%s660] sm:$0xff]
        %v662 = vld [vmem:[%s660 + $0x8] sm:$0xff]
        %v663 = vld [vmem:[%s660 + $0x10] sm:$0xff]
        %v664 = vld [vmem:[%s660 + $0x18] sm:$0xff]
        %v665 = vld [vmem:[%s660 + $0x20] sm:$0xff]
        %v666 = vld [vmem:[%s660 + $0x28] sm:$0xff]
        %v667 = vld [vmem:[%s660 + $0x30] sm:$0xff]
        %v668 = vld [vmem:[%s660 + $0x38] sm:$0xff]
        %v670 = vsel %vm377, %v661, 0
        %v673 = vsel %vm377, %v662, 0
        %v676 = vsel %vm377, %v663, 0
        %v679 = vsel %vm377, %v664, 0
        %v682 = vsel %vm377, %v665, 0
        %v685 = vsel %vm377, %v666, 0
        %v688 = vsel %vm377, %v667, 0
        %v691 = vsel %vm377, %v668, 0
        %693 = vmatprep.subr.mxu0 0.0
        %694 = vmatpush1.msra.mxu0 0.0
        %695 = vmatprep.subr.mxu0 0.0
        %696 = vmatpush1.msra.mxu0 0.0
        %697 = vmatprep.subr.mxu0 0.0
        %698 = vmatpush1.msra.mxu0 0.0
        %699 = vmatprep.subr.mxu0 0.0
        %700 = vmatpush1.msra.mxu0 0.0
        %701 = vmatprep.subr.mxu0 0.0
        %702 = vmatpush1.msra.mxu0 0.0
        %703 = vmatprep.subr.mxu0 0.0
        %704 = vmatpush1.msra.mxu0 0.0
        %705 = vmatprep.subr.mxu0 0.0
        %706 = vmatpush1.msra.mxu0 0.0
        %707 = vmatprep.subr.mxu0 0.0
        %708 = vmatpush1.msra.mxu0 0.0
        %709 = vmatprep.subr.mxu0 0.0
        %710 = vmatpush1.msra.mxu0 %v514
        %711 = vmatprep.subr.mxu0 0.0
        %712 = vmatpush1.msra.mxu0 %v513
        %713 = vmatprep.subr.mxu0 0.0
        %714 = vmatpush1.msra.mxu0 %v512
        %715 = vmatprep.subr.mxu0 0.0
        %716 = vmatpush1.msra.mxu0 %v511
        %717 = vmatprep.subr.mxu0 0.0
        %718 = vmatpush1.msra.mxu0 %v510
        %719 = vmatprep.subr.mxu0 0.0
        %720 = vmatpush1.msra.mxu0 %v509
        %721 = vmatprep.subr.mxu0 0.0
        %722 = vmatpush1.msra.mxu0 %v508
        %723 = vmatprep.subr.mxu0 0.0
        %724 = vmatpush1.msra.mxu0 %v507
        %725 = vmatprep.subr.mxu0 0.0
        %726 = vmatpush2.msra.mxu0 0.0
        %727 = vmatprep.subr.mxu0 0.0
        %728 = vmatpush2.msra.mxu0 0.0
        %729 = vmatprep.subr.mxu0 0.0
        %730 = vmatpush2.msra.mxu0 0.0
        %731 = vmatprep.subr.mxu0 0.0
        %732 = vmatpush2.msra.mxu0 0.0
        %733 = vmatprep.subr.mxu0 0.0
        %734 = vmatpush2.msra.mxu0 0.0
        %735 = vmatprep.subr.mxu0 0.0
        %736 = vmatpush2.msra.mxu0 0.0
        %737 = vmatprep.subr.mxu0 0.0
        %738 = vmatpush2.msra.mxu0 0.0
        %739 = vmatprep.subr.mxu0 0.0
        %740 = vmatpush2.msra.mxu0 0.0
        %741 = vmatprep.subr.mxu0 0.0
        %742 = vmatpush2.msra.mxu0 0.0
        %743 = vmatprep.subr.mxu0 0.0
        %744 = vmatpush2.msra.mxu0 0.0
        %745 = vmatprep.subr.mxu0 0.0
        %746 = vmatpush2.msra.mxu0 0.0
        %747 = vmatprep.subr.mxu0 0.0
        %748 = vmatpush2.msra.mxu0 0.0
        %749 = vmatprep.subr.mxu0 0.0
        %750 = vmatpush2.msra.mxu0 0.0
        %751 = vmatprep.subr.mxu0 0.0
        %752 = vmatpush2.msra.mxu0 0.0
        %753 = vmatprep.subr.mxu0 0.0
        %754 = vmatpush2.msra.mxu0 0.0
        %755 = vmatprep.subr.mxu0 0.0
        %756 = vmatpush2.msra.mxu0 0.0
        %757 = vmatprep.mubr.f32.mxu0 0.0
        %758 = vmatmul.mubr.f32.gmra.mxu0 %v670
        %v759 = vpop.f32.mrf.mxu0
        %v760 = vadd.f32 0.0, %v759
        %v761 = vpop.f32.mrf.mxu0
        %762 = vmatprep.mubr.f32.mxu0 0.0
        %763 = vmatmul.mubr.f32.gmra.mxu0 %v673
        %v764 = vpop.f32.mrf.mxu0
        %v765 = vadd.f32 0.0, %v764
        %v766 = vpop.f32.mrf.mxu0
        %767 = vmatprep.mubr.f32.mxu0 0.0
        %768 = vmatmul.mubr.f32.gmra.mxu0 %v676
        %v769 = vpop.f32.mrf.mxu0
        %v770 = vadd.f32 0.0, %v769
        %v771 = vpop.f32.mrf.mxu0
        %772 = vmatprep.mubr.f32.mxu0 0.0
        %773 = vmatmul.mubr.f32.gmra.mxu0 %v679
        %v774 = vpop.f32.mrf.mxu0
        %v775 = vadd.f32 0.0, %v774
        %v776 = vpop.f32.mrf.mxu0
        %777 = vmatprep.mubr.f32.mxu0 0.0
        %778 = vmatmul.mubr.f32.gmra.mxu0 %v682
        %v779 = vpop.f32.mrf.mxu0
        %v780 = vadd.f32 0.0, %v779
        %v781 = vpop.f32.mrf.mxu0
        %782 = vmatprep.mubr.f32.mxu0 0.0
        %783 = vmatmul.mubr.f32.gmra.mxu0 %v685
        %v784 = vpop.f32.mrf.mxu0
        %v785 = vadd.f32 0.0, %v784
        %v786 = vpop.f32.mrf.mxu0
        %787 = vmatprep.mubr.f32.mxu0 0.0
        %788 = vmatmul.mubr.f32.gmra.mxu0 %v688
        %v789 = vpop.f32.mrf.mxu0
        %v790 = vadd.f32 0.0, %v789
        %v791 = vpop.f32.mrf.mxu0
        %792 = vmatprep.mubr.f32.mxu0 0.0
        %793 = vmatmul.mubr.f32.gmra.mxu0 %v691
        %v794 = vpop.f32.mrf.mxu0
        %v795 = vadd.f32 0.0, %v794
        %v796 = vpop.f32.mrf.mxu0
        %797 = vdwg.mxu0
        %s798 = scalar_lea.vmem %s4, 64
        %v799 = vld [vmem:[%s798] sm:$0xff]
        %v800 = vld [vmem:[%s798 + $0x8] sm:$0xff]
        %v801 = vld [vmem:[%s798 + $0x10] sm:$0xff]
        %v802 = vld [vmem:[%s798 + $0x18] sm:$0xff]
        %v803 = vld [vmem:[%s798 + $0x20] sm:$0xff]
        %v804 = vld [vmem:[%s798 + $0x28] sm:$0xff]
        %v805 = vld [vmem:[%s798 + $0x30] sm:$0xff]
        %v806 = vld [vmem:[%s798 + $0x38] sm:$0xff]
        %v808 = vsel %vm377, %v760, 0
        %v811 = vsel %vm377, %v765, 0
        %v814 = vsel %vm377, %v770, 0
        %v817 = vsel %vm377, %v775, 0
        %v820 = vsel %vm377, %v780, 0
        %v823 = vsel %vm377, %v785, 0
        %v826 = vsel %vm377, %v790, 0
        %v829 = vsel %vm377, %v795, 0
        %831 = vmatprep.subr.mxu0 0.0
        %832 = vmatpush1.msra.mxu0 0.0
        %833 = vmatprep.subr.mxu0 0.0
        %834 = vmatpush1.msra.mxu0 0.0
        %835 = vmatprep.subr.mxu0 0.0
        %836 = vmatpush1.msra.mxu0 0.0
        %837 = vmatprep.subr.mxu0 0.0
        %838 = vmatpush1.msra.mxu0 0.0
        %839 = vmatprep.subr.mxu0 0.0
        %840 = vmatpush1.msra.mxu0 0.0
        %841 = vmatprep.subr.mxu0 0.0
        %842 = vmatpush1.msra.mxu0 0.0
        %843 = vmatprep.subr.mxu0 0.0
        %844 = vmatpush1.msra.mxu0 0.0
        %845 = vmatprep.subr.mxu0 0.0
        %846 = vmatpush1.msra.mxu0 0.0
        %847 = vmatprep.subr.mxu0 0.0
        %848 = vmatpush1.msra.mxu0 %v806
        %849 = vmatprep.subr.mxu0 0.0
        %850 = vmatpush1.msra.mxu0 %v805
        %851 = vmatprep.subr.mxu0 0.0
        %852 = vmatpush1.msra.mxu0 %v804
        %853 = vmatprep.subr.mxu0 0.0
        %854 = vmatpush1.msra.mxu0 %v803
        %855 = vmatprep.subr.mxu0 0.0
        %856 = vmatpush1.msra.mxu0 %v802
        %857 = vmatprep.subr.mxu0 0.0
        %858 = vmatpush1.msra.mxu0 %v801
        %859 = vmatprep.subr.mxu0 0.0
        %860 = vmatpush1.msra.mxu0 %v800
        %861 = vmatprep.subr.mxu0 0.0
        %862 = vmatpush1.msra.mxu0 %v799
        %863 = vmatprep.subr.mxu0 0.0
        %864 = vmatpush2.msra.mxu0 0.0
        %865 = vmatprep.subr.mxu0 0.0
        %866 = vmatpush2.msra.mxu0 0.0
        %867 = vmatprep.subr.mxu0 0.0
        %868 = vmatpush2.msra.mxu0 0.0
        %869 = vmatprep.subr.mxu0 0.0
        %870 = vmatpush2.msra.mxu0 0.0
        %871 = vmatprep.subr.mxu0 0.0
        %872 = vmatpush2.msra.mxu0 0.0
        %873 = vmatprep.subr.mxu0 0.0
        %874 = vmatpush2.msra.mxu0 0.0
        %875 = vmatprep.subr.mxu0 0.0
        %876 = vmatpush2.msra.mxu0 0.0
        %877 = vmatprep.subr.mxu0 0.0
        %878 = vmatpush2.msra.mxu0 0.0
        %879 = vmatprep.subr.mxu0 0.0
        %880 = vmatpush2.msra.mxu0 0.0
        %881 = vmatprep.subr.mxu0 0.0
        %882 = vmatpush2.msra.mxu0 0.0
        %883 = vmatprep.subr.mxu0 0.0
        %884 = vmatpush2.msra.mxu0 0.0
        %885 = vmatprep.subr.mxu0 0.0
        %886 = vmatpush2.msra.mxu0 0.0
        %887 = vmatprep.subr.mxu0 0.0
        %888 = vmatpush2.msra.mxu0 0.0
        %889 = vmatprep.subr.mxu0 0.0
        %890 = vmatpush2.msra.mxu0 0.0
        %891 = vmatprep.subr.mxu0 0.0
        %892 = vmatpush2.msra.mxu0 0.0
        %893 = vmatprep.subr.mxu0 0.0
        %894 = vmatpush2.msra.mxu0 0.0
        %895 = vmatprep.mubr.f32.mxu0 0.0
        %896 = vmatmul.mubr.f32.gmra.mxu0 %v808
        %v897 = vpop.f32.mrf.mxu0
        %v898 = vadd.f32 0.0, %v897
        %v899 = vpop.f32.mrf.mxu0
        %900 = vmatprep.mubr.f32.mxu0 0.0
        %901 = vmatmul.mubr.f32.gmra.mxu0 %v811
        %v902 = vpop.f32.mrf.mxu0
        %v903 = vadd.f32 0.0, %v902
        %v904 = vpop.f32.mrf.mxu0
        %905 = vmatprep.mubr.f32.mxu0 0.0
        %906 = vmatmul.mubr.f32.gmra.mxu0 %v814
        %v907 = vpop.f32.mrf.mxu0
        %v908 = vadd.f32 0.0, %v907
        %v909 = vpop.f32.mrf.mxu0
        %910 = vmatprep.mubr.f32.mxu0 0.0
        %911 = vmatmul.mubr.f32.gmra.mxu0 %v817
        %v912 = vpop.f32.mrf.mxu0
        %v913 = vadd.f32 0.0, %v912
        %v914 = vpop.f32.mrf.mxu0
        %915 = vmatprep.mubr.f32.mxu0 0.0
        %916 = vmatmul.mubr.f32.gmra.mxu0 %v820
        %v917 = vpop.f32.mrf.mxu0
        %v918 = vadd.f32 0.0, %v917
        %v919 = vpop.f32.mrf.mxu0
        %920 = vmatprep.mubr.f32.mxu0 0.0
        %921 = vmatmul.mubr.f32.gmra.mxu0 %v823
        %v922 = vpop.f32.mrf.mxu0
        %v923 = vadd.f32 0.0, %v922
        %v924 = vpop.f32.mrf.mxu0
        %925 = vmatprep.mubr.f32.mxu0 0.0
        %926 = vmatmul.mubr.f32.gmra.mxu0 %v826
        %v927 = vpop.f32.mrf.mxu0
        %v928 = vadd.f32 0.0, %v927
        %v929 = vpop.f32.mrf.mxu0
        %930 = vmatprep.mubr.f32.mxu0 0.0
        %931 = vmatmul.mubr.f32.gmra.mxu0 %v829
        %v932 = vpop.f32.mrf.mxu0
        %v933 = vadd.f32 0.0, %v932
        %v934 = vpop.f32.mrf.mxu0
        %935 = vdwg.mxu0
        %v937 = vsel %vm377, %v614, 0
        %v940 = vsel %vm377, %v619, 0
        %v943 = vsel %vm377, %v624, 0
        %v946 = vsel %vm377, %v629, 0
        %v949 = vsel %vm377, %v634, 0
        %v952 = vsel %vm377, %v639, 0
        %v955 = vsel %vm377, %v644, 0
        %v958 = vsel %vm377, %v649, 0
        %960 = vmatprep.subr.mxu0 0.0
        %961 = vmatpush1.msra.mxu0 0.0
        %962 = vmatprep.subr.mxu0 0.0
        %963 = vmatpush1.msra.mxu0 0.0
        %964 = vmatprep.subr.mxu0 0.0
        %965 = vmatpush1.msra.mxu0 0.0
        %966 = vmatprep.subr.mxu0 0.0
        %967 = vmatpush1.msra.mxu0 0.0
        %968 = vmatprep.subr.mxu0 0.0
        %969 = vmatpush1.msra.mxu0 0.0
        %970 = vmatprep.subr.mxu0 0.0
        %971 = vmatpush1.msra.mxu0 0.0
        %972 = vmatprep.subr.mxu0 0.0
        %973 = vmatpush1.msra.mxu0 0.0
        %974 = vmatprep.subr.mxu0 0.0
        %975 = vmatpush1.msra.mxu0 0.0
        %976 = vmatprep.subr.mxu0 0.0
        %977 = vmatpush1.msra.mxu0 %v659
        %978 = vmatprep.subr.mxu0 0.0
        %979 = vmatpush1.msra.mxu0 %v658
        %980 = vmatprep.subr.mxu0 0.0
        %981 = vmatpush1.msra.mxu0 %v657
        %982 = vmatprep.subr.mxu0 0.0
        %983 = vmatpush1.msra.mxu0 %v656
        %984 = vmatprep.subr.mxu0 0.0
        %985 = vmatpush1.msra.mxu0 %v655
        %986 = vmatprep.subr.mxu0 0.0
        %987 = vmatpush1.msra.mxu0 %v654
        %988 = vmatprep.subr.mxu0 0.0
        %989 = vmatpush1.msra.mxu0 %v653
        %990 = vmatprep.subr.mxu0 0.0
        %991 = vmatpush1.msra.mxu0 %v652
        %992 = vmatprep.subr.mxu0 0.0
        %993 = vmatpush2.msra.mxu0 0.0
        %994 = vmatprep.subr.mxu0 0.0
        %995 = vmatpush2.msra.mxu0 0.0
        %996 = vmatprep.subr.mxu0 0.0
        %997 = vmatpush2.msra.mxu0 0.0
        %998 = vmatprep.subr.mxu0 0.0
        %999 = vmatpush2.msra.mxu0 0.0
        %1000 = vmatprep.subr.mxu0 0.0
        %1001 = vmatpush2.msra.mxu0 0.0
        %1002 = vmatprep.subr.mxu0 0.0
        %1003 = vmatpush2.msra.mxu0 0.0
        %1004 = vmatprep.subr.mxu0 0.0
        %1005 = vmatpush2.msra.mxu0 0.0
        %1006 = vmatprep.subr.mxu0 0.0
        %1007 = vmatpush2.msra.mxu0 0.0
        %1008 = vmatprep.subr.mxu0 0.0
        %1009 = vmatpush2.msra.mxu0 0.0
        %1010 = vmatprep.subr.mxu0 0.0
        %1011 = vmatpush2.msra.mxu0 0.0
        %1012 = vmatprep.subr.mxu0 0.0
        %1013 = vmatpush2.msra.mxu0 0.0
        %1014 = vmatprep.subr.mxu0 0.0
        %1015 = vmatpush2.msra.mxu0 0.0
        %1016 = vmatprep.subr.mxu0 0.0
        %1017 = vmatpush2.msra.mxu0 0.0
        %1018 = vmatprep.subr.mxu0 0.0
        %1019 = vmatpush2.msra.mxu0 0.0
        %1020 = vmatprep.subr.mxu0 0.0
        %1021 = vmatpush2.msra.mxu0 0.0
        %1022 = vmatprep.subr.mxu0 0.0
        %1023 = vmatpush2.msra.mxu0 0.0
        %1024 = vmatprep.mubr.f32.mxu0 0.0
        %1025 = vmatmul.mubr.f32.gmra.mxu0 %v937
        %v1026 = vpop.f32.mrf.mxu0
        %v1027 = vadd.f32 %v898, %v1026
        %v1028 = vpop.f32.mrf.mxu0
        %1029 = vmatprep.mubr.f32.mxu0 0.0
        %1030 = vmatmul.mubr.f32.gmra.mxu0 %v940
        %v1031 = vpop.f32.mrf.mxu0
        %v1032 = vadd.f32 %v903, %v1031
        %v1033 = vpop.f32.mrf.mxu0
        %1034 = vmatprep.mubr.f32.mxu0 0.0
        %1035 = vmatmul.mubr.f32.gmra.mxu0 %v943
        %v1036 = vpop.f32.mrf.mxu0
        %v1037 = vadd.f32 %v908, %v1036
        %v1038 = vpop.f32.mrf.mxu0
        %1039 = vmatprep.mubr.f32.mxu0 0.0
        %1040 = vmatmul.mubr.f32.gmra.mxu0 %v946
        %v1041 = vpop.f32.mrf.mxu0
        %v1042 = vadd.f32 %v913, %v1041
        %v1043 = vpop.f32.mrf.mxu0
        %1044 = vmatprep.mubr.f32.mxu0 0.0
        %1045 = vmatmul.mubr.f32.gmra.mxu0 %v949
        %v1046 = vpop.f32.mrf.mxu0
        %v1047 = vadd.f32 %v918, %v1046
        %v1048 = vpop.f32.mrf.mxu0
        %1049 = vmatprep.mubr.f32.mxu0 0.0
        %1050 = vmatmul.mubr.f32.gmra.mxu0 %v952
        %v1051 = vpop.f32.mrf.mxu0
        %v1052 = vadd.f32 %v923, %v1051
        %v1053 = vpop.f32.mrf.mxu0
        %1054 = vmatprep.mubr.f32.mxu0 0.0
        %1055 = vmatmul.mubr.f32.gmra.mxu0 %v955
        %v1056 = vpop.f32.mrf.mxu0
        %v1057 = vadd.f32 %v928, %v1056
        %v1058 = vpop.f32.mrf.mxu0
        %1059 = vmatprep.mubr.f32.mxu0 0.0
        %1060 = vmatmul.mubr.f32.gmra.mxu0 %v958
        %v1061 = vpop.f32.mrf.mxu0
        %v1062 = vadd.f32 %v933, %v1061
        %v1063 = vpop.f32.mrf.mxu0
        %1064 = vdwg.mxu0
        %s1065 = scalar_lea.vmem %s3, 128
        %v1066 = vld [vmem:[%s1065] sm:$0xff]
        %v1067 = vld [vmem:[%s1065 + $0x8] sm:$0xff]
        %v1068 = vld [vmem:[%s1065 + $0x10] sm:$0xff]
        %v1069 = vld [vmem:[%s1065 + $0x18] sm:$0xff]
        %v1070 = vld [vmem:[%s1065 + $0x20] sm:$0xff]
        %v1071 = vld [vmem:[%s1065 + $0x28] sm:$0xff]
        %v1072 = vld [vmem:[%s1065 + $0x30] sm:$0xff]
        %v1073 = vld [vmem:[%s1065 + $0x38] sm:$0xff]
        %v1075 = vsel %vm377, %v1066, 0
        %v1078 = vsel %vm377, %v1067, 0
        %v1081 = vsel %vm377, %v1068, 0
        %v1084 = vsel %vm377, %v1069, 0
        %v1087 = vsel %vm377, %v1070, 0
        %v1090 = vsel %vm377, %v1071, 0
        %v1093 = vsel %vm377, %v1072, 0
        %v1096 = vsel %vm377, %v1073, 0
        %1098 = vmatprep.subr.mxu0 0.0
        %1099 = vmatpush1.msra.mxu0 0.0
        %1100 = vmatprep.subr.mxu0 0.0
        %1101 = vmatpush1.msra.mxu0 0.0
        %1102 = vmatprep.subr.mxu0 0.0
        %1103 = vmatpush1.msra.mxu0 0.0
        %1104 = vmatprep.subr.mxu0 0.0
        %1105 = vmatpush1.msra.mxu0 0.0
        %1106 = vmatprep.subr.mxu0 0.0
        %1107 = vmatpush1.msra.mxu0 0.0
        %1108 = vmatprep.subr.mxu0 0.0
        %1109 = vmatpush1.msra.mxu0 0.0
        %1110 = vmatprep.subr.mxu0 0.0
        %1111 = vmatpush1.msra.mxu0 0.0
        %1112 = vmatprep.subr.mxu0 0.0
        %1113 = vmatpush1.msra.mxu0 0.0
        %1114 = vmatprep.subr.mxu0 0.0
        %1115 = vmatpush1.msra.mxu0 %v514
        %1116 = vmatprep.subr.mxu0 0.0
        %1117 = vmatpush1.msra.mxu0 %v513
        %1118 = vmatprep.subr.mxu0 0.0
        %1119 = vmatpush1.msra.mxu0 %v512
        %1120 = vmatprep.subr.mxu0 0.0
        %1121 = vmatpush1.msra.mxu0 %v511
        %1122 = vmatprep.subr.mxu0 0.0
        %1123 = vmatpush1.msra.mxu0 %v510
        %1124 = vmatprep.subr.mxu0 0.0
        %1125 = vmatpush1.msra.mxu0 %v509
        %1126 = vmatprep.subr.mxu0 0.0
        %1127 = vmatpush1.msra.mxu0 %v508
        %1128 = vmatprep.subr.mxu0 0.0
        %1129 = vmatpush1.msra.mxu0 %v507
        %1130 = vmatprep.subr.mxu0 0.0
        %1131 = vmatpush2.msra.mxu0 0.0
        %1132 = vmatprep.subr.mxu0 0.0
        %1133 = vmatpush2.msra.mxu0 0.0
        %1134 = vmatprep.subr.mxu0 0.0
        %1135 = vmatpush2.msra.mxu0 0.0
        %1136 = vmatprep.subr.mxu0 0.0
        %1137 = vmatpush2.msra.mxu0 0.0
        %1138 = vmatprep.subr.mxu0 0.0
        %1139 = vmatpush2.msra.mxu0 0.0
        %1140 = vmatprep.subr.mxu0 0.0
        %1141 = vmatpush2.msra.mxu0 0.0
        %1142 = vmatprep.subr.mxu0 0.0
        %1143 = vmatpush2.msra.mxu0 0.0
        %1144 = vmatprep.subr.mxu0 0.0
        %1145 = vmatpush2.msra.mxu0 0.0
        %1146 = vmatprep.subr.mxu0 0.0
        %1147 = vmatpush2.msra.mxu0 0.0
        %1148 = vmatprep.subr.mxu0 0.0
        %1149 = vmatpush2.msra.mxu0 0.0
        %1150 = vmatprep.subr.mxu0 0.0
        %1151 = vmatpush2.msra.mxu0 0.0
        %1152 = vmatprep.subr.mxu0 0.0
        %1153 = vmatpush2.msra.mxu0 0.0
        %1154 = vmatprep.subr.mxu0 0.0
        %1155 = vmatpush2.msra.mxu0 0.0
        %1156 = vmatprep.subr.mxu0 0.0
        %1157 = vmatpush2.msra.mxu0 0.0
        %1158 = vmatprep.subr.mxu0 0.0
        %1159 = vmatpush2.msra.mxu0 0.0
        %1160 = vmatprep.subr.mxu0 0.0
        %1161 = vmatpush2.msra.mxu0 0.0
        %1162 = vmatprep.mubr.f32.mxu0 0.0
        %1163 = vmatmul.mubr.f32.gmra.mxu0 %v1075
        %v1164 = vpop.f32.mrf.mxu0
        %v1165 = vadd.f32 0.0, %v1164
        %v1166 = vpop.f32.mrf.mxu0
        %1167 = vmatprep.mubr.f32.mxu0 0.0
        %1168 = vmatmul.mubr.f32.gmra.mxu0 %v1078
        %v1169 = vpop.f32.mrf.mxu0
        %v1170 = vadd.f32 0.0, %v1169
        %v1171 = vpop.f32.mrf.mxu0
        %1172 = vmatprep.mubr.f32.mxu0 0.0
        %1173 = vmatmul.mubr.f32.gmra.mxu0 %v1081
        %v1174 = vpop.f32.mrf.mxu0
        %v1175 = vadd.f32 0.0, %v1174
        %v1176 = vpop.f32.mrf.mxu0
        %1177 = vmatprep.mubr.f32.mxu0 0.0
        %1178 = vmatmul.mubr.f32.gmra.mxu0 %v1084
        %v1179 = vpop.f32.mrf.mxu0
        %v1180 = vadd.f32 0.0, %v1179
        %v1181 = vpop.f32.mrf.mxu0
        %1182 = vmatprep.mubr.f32.mxu0 0.0
        %1183 = vmatmul.mubr.f32.gmra.mxu0 %v1087
        %v1184 = vpop.f32.mrf.mxu0
        %v1185 = vadd.f32 0.0, %v1184
        %v1186 = vpop.f32.mrf.mxu0
        %1187 = vmatprep.mubr.f32.mxu0 0.0
        %1188 = vmatmul.mubr.f32.gmra.mxu0 %v1090
        %v1189 = vpop.f32.mrf.mxu0
        %v1190 = vadd.f32 0.0, %v1189
        %v1191 = vpop.f32.mrf.mxu0
        %1192 = vmatprep.mubr.f32.mxu0 0.0
        %1193 = vmatmul.mubr.f32.gmra.mxu0 %v1093
        %v1194 = vpop.f32.mrf.mxu0
        %v1195 = vadd.f32 0.0, %v1194
        %v1196 = vpop.f32.mrf.mxu0
        %1197 = vmatprep.mubr.f32.mxu0 0.0
        %1198 = vmatmul.mubr.f32.gmra.mxu0 %v1096
        %v1199 = vpop.f32.mrf.mxu0
        %v1200 = vadd.f32 0.0, %v1199
        %v1201 = vpop.f32.mrf.mxu0
        %1202 = vdwg.mxu0
        %s1203 = scalar_lea.vmem %s4, 128
        %v1204 = vld [vmem:[%s1203] sm:$0xff]
        %v1205 = vld [vmem:[%s1203 + $0x8] sm:$0xff]
        %v1206 = vld [vmem:[%s1203 + $0x10] sm:$0xff]
        %v1207 = vld [vmem:[%s1203 + $0x18] sm:$0xff]
        %v1208 = vld [vmem:[%s1203 + $0x20] sm:$0xff]
        %v1209 = vld [vmem:[%s1203 + $0x28] sm:$0xff]
        %v1210 = vld [vmem:[%s1203 + $0x30] sm:$0xff]
        %v1211 = vld [vmem:[%s1203 + $0x38] sm:$0xff]
        %v1213 = vsel %vm377, %v1165, 0
        %v1216 = vsel %vm377, %v1170, 0
        %v1219 = vsel %vm377, %v1175, 0
        %v1222 = vsel %vm377, %v1180, 0
        %v1225 = vsel %vm377, %v1185, 0
        %v1228 = vsel %vm377, %v1190, 0
        %v1231 = vsel %vm377, %v1195, 0
        %v1234 = vsel %vm377, %v1200, 0
        %1236 = vmatprep.subr.mxu0 0.0
        %1237 = vmatpush1.msra.mxu0 0.0
        %1238 = vmatprep.subr.mxu0 0.0
        %1239 = vmatpush1.msra.mxu0 0.0
        %1240 = vmatprep.subr.mxu0 0.0
        %1241 = vmatpush1.msra.mxu0 0.0
        %1242 = vmatprep.subr.mxu0 0.0
        %1243 = vmatpush1.msra.mxu0 0.0
        %1244 = vmatprep.subr.mxu0 0.0
        %1245 = vmatpush1.msra.mxu0 0.0
        %1246 = vmatprep.subr.mxu0 0.0
        %1247 = vmatpush1.msra.mxu0 0.0
        %1248 = vmatprep.subr.mxu0 0.0
        %1249 = vmatpush1.msra.mxu0 0.0
        %1250 = vmatprep.subr.mxu0 0.0
        %1251 = vmatpush1.msra.mxu0 0.0
        %1252 = vmatprep.subr.mxu0 0.0
        %1253 = vmatpush1.msra.mxu0 %v1211
        %1254 = vmatprep.subr.mxu0 0.0
        %1255 = vmatpush1.msra.mxu0 %v1210
        %1256 = vmatprep.subr.mxu0 0.0
        %1257 = vmatpush1.msra.mxu0 %v1209
        %1258 = vmatprep.subr.mxu0 0.0
        %1259 = vmatpush1.msra.mxu0 %v1208
        %1260 = vmatprep.subr.mxu0 0.0
        %1261 = vmatpush1.msra.mxu0 %v1207
        %1262 = vmatprep.subr.mxu0 0.0
        %1263 = vmatpush1.msra.mxu0 %v1206
        %1264 = vmatprep.subr.mxu0 0.0
        %1265 = vmatpush1.msra.mxu0 %v1205
        %1266 = vmatprep.subr.mxu0 0.0
        %1267 = vmatpush1.msra.mxu0 %v1204
        %1268 = vmatprep.subr.mxu0 0.0
        %1269 = vmatpush2.msra.mxu0 0.0
        %1270 = vmatprep.subr.mxu0 0.0
        %1271 = vmatpush2.msra.mxu0 0.0
        %1272 = vmatprep.subr.mxu0 0.0
        %1273 = vmatpush2.msra.mxu0 0.0
        %1274 = vmatprep.subr.mxu0 0.0
        %1275 = vmatpush2.msra.mxu0 0.0
        %1276 = vmatprep.subr.mxu0 0.0
        %1277 = vmatpush2.msra.mxu0 0.0
        %1278 = vmatprep.subr.mxu0 0.0
        %1279 = vmatpush2.msra.mxu0 0.0
        %1280 = vmatprep.subr.mxu0 0.0
        %1281 = vmatpush2.msra.mxu0 0.0
        %1282 = vmatprep.subr.mxu0 0.0
        %1283 = vmatpush2.msra.mxu0 0.0
        %1284 = vmatprep.subr.mxu0 0.0
        %1285 = vmatpush2.msra.mxu0 0.0
        %1286 = vmatprep.subr.mxu0 0.0
        %1287 = vmatpush2.msra.mxu0 0.0
        %1288 = vmatprep.subr.mxu0 0.0
        %1289 = vmatpush2.msra.mxu0 0.0
        %1290 = vmatprep.subr.mxu0 0.0
        %1291 = vmatpush2.msra.mxu0 0.0
        %1292 = vmatprep.subr.mxu0 0.0
        %1293 = vmatpush2.msra.mxu0 0.0
        %1294 = vmatprep.subr.mxu0 0.0
        %1295 = vmatpush2.msra.mxu0 0.0
        %1296 = vmatprep.subr.mxu0 0.0
        %1297 = vmatpush2.msra.mxu0 0.0
        %1298 = vmatprep.subr.mxu0 0.0
        %1299 = vmatpush2.msra.mxu0 0.0
        %1300 = vmatprep.mubr.f32.mxu0 0.0
        %1301 = vmatmul.mubr.f32.gmra.mxu0 %v1213
        %v1302 = vpop.f32.mrf.mxu0
        %v1303 = vadd.f32 0.0, %v1302
        %v1304 = vpop.f32.mrf.mxu0
        %1305 = vmatprep.mubr.f32.mxu0 0.0
        %1306 = vmatmul.mubr.f32.gmra.mxu0 %v1216
        %v1307 = vpop.f32.mrf.mxu0
        %v1308 = vadd.f32 0.0, %v1307
        %v1309 = vpop.f32.mrf.mxu0
        %1310 = vmatprep.mubr.f32.mxu0 0.0
        %1311 = vmatmul.mubr.f32.gmra.mxu0 %v1219
        %v1312 = vpop.f32.mrf.mxu0
        %v1313 = vadd.f32 0.0, %v1312
        %v1314 = vpop.f32.mrf.mxu0
        %1315 = vmatprep.mubr.f32.mxu0 0.0
        %1316 = vmatmul.mubr.f32.gmra.mxu0 %v1222
        %v1317 = vpop.f32.mrf.mxu0
        %v1318 = vadd.f32 0.0, %v1317
        %v1319 = vpop.f32.mrf.mxu0
        %1320 = vmatprep.mubr.f32.mxu0 0.0
        %1321 = vmatmul.mubr.f32.gmra.mxu0 %v1225
        %v1322 = vpop.f32.mrf.mxu0
        %v1323 = vadd.f32 0.0, %v1322
        %v1324 = vpop.f32.mrf.mxu0
        %1325 = vmatprep.mubr.f32.mxu0 0.0
        %1326 = vmatmul.mubr.f32.gmra.mxu0 %v1228
        %v1327 = vpop.f32.mrf.mxu0
        %v1328 = vadd.f32 0.0, %v1327
        %v1329 = vpop.f32.mrf.mxu0
        %1330 = vmatprep.mubr.f32.mxu0 0.0
        %1331 = vmatmul.mubr.f32.gmra.mxu0 %v1231
        %v1332 = vpop.f32.mrf.mxu0
        %v1333 = vadd.f32 0.0, %v1332
        %v1334 = vpop.f32.mrf.mxu0
        %1335 = vmatprep.mubr.f32.mxu0 0.0
        %1336 = vmatmul.mubr.f32.gmra.mxu0 %v1234
        %v1337 = vpop.f32.mrf.mxu0
        %v1338 = vadd.f32 0.0, %v1337
        %v1339 = vpop.f32.mrf.mxu0
        %1340 = vdwg.mxu0
        %v1341 = vadd.f32 %v1027, %v1303
        %v1342 = vadd.f32 %v1032, %v1308
        %v1343 = vadd.f32 %v1037, %v1313
        %v1344 = vadd.f32 %v1042, %v1318
        %v1345 = vadd.f32 %v1047, %v1323
        %v1346 = vadd.f32 %v1052, %v1328
        %v1347 = vadd.f32 %v1057, %v1333
        %v1348 = vadd.f32 %v1062, %v1338
        %s1349 = scalar_lea.vmem %s3, 192
        %v1350 = vld [vmem:[%s1349] sm:$0xff]
        %v1351 = vld [vmem:[%s1349 + $0x8] sm:$0xff]
        %v1352 = vld [vmem:[%s1349 + $0x10] sm:$0xff]
        %v1353 = vld [vmem:[%s1349 + $0x18] sm:$0xff]
        %v1354 = vld [vmem:[%s1349 + $0x20] sm:$0xff]
        %v1355 = vld [vmem:[%s1349 + $0x28] sm:$0xff]
        %v1356 = vld [vmem:[%s1349 + $0x30] sm:$0xff]
        %v1357 = vld [vmem:[%s1349 + $0x38] sm:$0xff]
        %v1359 = vsel %vm377, %v1350, 0
        %v1362 = vsel %vm377, %v1351, 0
        %v1365 = vsel %vm377, %v1352, 0
        %v1368 = vsel %vm377, %v1353, 0
        %v1371 = vsel %vm377, %v1354, 0
        %v1374 = vsel %vm377, %v1355, 0
        %v1377 = vsel %vm377, %v1356, 0
        %v1380 = vsel %vm377, %v1357, 0
        %1382 = vmatprep.subr.mxu0 0.0
        %1383 = vmatpush1.msra.mxu0 0.0
        %1384 = vmatprep.subr.mxu0 0.0
        %1385 = vmatpush1.msra.mxu0 0.0
        %1386 = vmatprep.subr.mxu0 0.0
        %1387 = vmatpush1.msra.mxu0 0.0
        %1388 = vmatprep.subr.mxu0 0.0
        %1389 = vmatpush1.msra.mxu0 0.0
        %1390 = vmatprep.subr.mxu0 0.0
        %1391 = vmatpush1.msra.mxu0 0.0
        %1392 = vmatprep.subr.mxu0 0.0
        %1393 = vmatpush1.msra.mxu0 0.0
        %1394 = vmatprep.subr.mxu0 0.0
        %1395 = vmatpush1.msra.mxu0 0.0
        %1396 = vmatprep.subr.mxu0 0.0
        %1397 = vmatpush1.msra.mxu0 0.0
        %1398 = vmatprep.subr.mxu0 0.0
        %1399 = vmatpush1.msra.mxu0 %v514
        %1400 = vmatprep.subr.mxu0 0.0
        %1401 = vmatpush1.msra.mxu0 %v513
        %1402 = vmatprep.subr.mxu0 0.0
        %1403 = vmatpush1.msra.mxu0 %v512
        %1404 = vmatprep.subr.mxu0 0.0
        %1405 = vmatpush1.msra.mxu0 %v511
        %1406 = vmatprep.subr.mxu0 0.0
        %1407 = vmatpush1.msra.mxu0 %v510
        %1408 = vmatprep.subr.mxu0 0.0
        %1409 = vmatpush1.msra.mxu0 %v509
        %1410 = vmatprep.subr.mxu0 0.0
        %1411 = vmatpush1.msra.mxu0 %v508
        %1412 = vmatprep.subr.mxu0 0.0
        %1413 = vmatpush1.msra.mxu0 %v507
        %1414 = vmatprep.subr.mxu0 0.0
        %1415 = vmatpush2.msra.mxu0 0.0
        %1416 = vmatprep.subr.mxu0 0.0
        %1417 = vmatpush2.msra.mxu0 0.0
        %1418 = vmatprep.subr.mxu0 0.0
        %1419 = vmatpush2.msra.mxu0 0.0
        %1420 = vmatprep.subr.mxu0 0.0
        %1421 = vmatpush2.msra.mxu0 0.0
        %1422 = vmatprep.subr.mxu0 0.0
        %1423 = vmatpush2.msra.mxu0 0.0
        %1424 = vmatprep.subr.mxu0 0.0
        %1425 = vmatpush2.msra.mxu0 0.0
        %1426 = vmatprep.subr.mxu0 0.0
        %1427 = vmatpush2.msra.mxu0 0.0
        %1428 = vmatprep.subr.mxu0 0.0
        %1429 = vmatpush2.msra.mxu0 0.0
        %1430 = vmatprep.subr.mxu0 0.0
        %1431 = vmatpush2.msra.mxu0 0.0
        %1432 = vmatprep.subr.mxu0 0.0
        %1433 = vmatpush2.msra.mxu0 0.0
        %1434 = vmatprep.subr.mxu0 0.0
        %1435 = vmatpush2.msra.mxu0 0.0
        %1436 = vmatprep.subr.mxu0 0.0
        %1437 = vmatpush2.msra.mxu0 0.0
        %1438 = vmatprep.subr.mxu0 0.0
        %1439 = vmatpush2.msra.mxu0 0.0
        %1440 = vmatprep.subr.mxu0 0.0
        %1441 = vmatpush2.msra.mxu0 0.0
        %1442 = vmatprep.subr.mxu0 0.0
        %1443 = vmatpush2.msra.mxu0 0.0
        %1444 = vmatprep.subr.mxu0 0.0
        %1445 = vmatpush2.msra.mxu0 0.0
        %1446 = vmatprep.mubr.f32.mxu0 0.0
        %1447 = vmatmul.mubr.f32.gmra.mxu0 %v1359
        %v1448 = vpop.f32.mrf.mxu0
        %v1449 = vadd.f32 0.0, %v1448
        %v1450 = vpop.f32.mrf.mxu0
        %1451 = vmatprep.mubr.f32.mxu0 0.0
        %1452 = vmatmul.mubr.f32.gmra.mxu0 %v1362
        %v1453 = vpop.f32.mrf.mxu0
        %v1454 = vadd.f32 0.0, %v1453
        %v1455 = vpop.f32.mrf.mxu0
        %1456 = vmatprep.mubr.f32.mxu0 0.0
        %1457 = vmatmul.mubr.f32.gmra.mxu0 %v1365
        %v1458 = vpop.f32.mrf.mxu0
        %v1459 = vadd.f32 0.0, %v1458
        %v1460 = vpop.f32.mrf.mxu0
        %1461 = vmatprep.mubr.f32.mxu0 0.0
        %1462 = vmatmul.mubr.f32.gmra.mxu0 %v1368
        %v1463 = vpop.f32.mrf.mxu0
        %v1464 = vadd.f32 0.0, %v1463
        %v1465 = vpop.f32.mrf.mxu0
        %1466 = vmatprep.mubr.f32.mxu0 0.0
        %1467 = vmatmul.mubr.f32.gmra.mxu0 %v1371
        %v1468 = vpop.f32.mrf.mxu0
        %v1469 = vadd.f32 0.0, %v1468
        %v1470 = vpop.f32.mrf.mxu0
        %1471 = vmatprep.mubr.f32.mxu0 0.0
        %1472 = vmatmul.mubr.f32.gmra.mxu0 %v1374
        %v1473 = vpop.f32.mrf.mxu0
        %v1474 = vadd.f32 0.0, %v1473
        %v1475 = vpop.f32.mrf.mxu0
        %1476 = vmatprep.mubr.f32.mxu0 0.0
        %1477 = vmatmul.mubr.f32.gmra.mxu0 %v1377
        %v1478 = vpop.f32.mrf.mxu0
        %v1479 = vadd.f32 0.0, %v1478
        %v1480 = vpop.f32.mrf.mxu0
        %1481 = vmatprep.mubr.f32.mxu0 0.0
        %1482 = vmatmul.mubr.f32.gmra.mxu0 %v1380
        %v1483 = vpop.f32.mrf.mxu0
        %v1484 = vadd.f32 0.0, %v1483
        %v1485 = vpop.f32.mrf.mxu0
        %1486 = vdwg.mxu0
        %s1487 = scalar_lea.vmem %s4, 192
        %v1488 = vld [vmem:[%s1487] sm:$0xff]
        %v1489 = vld [vmem:[%s1487 + $0x8] sm:$0xff]
        %v1490 = vld [vmem:[%s1487 + $0x10] sm:$0xff]
        %v1491 = vld [vmem:[%s1487 + $0x18] sm:$0xff]
        %v1492 = vld [vmem:[%s1487 + $0x20] sm:$0xff]
        %v1493 = vld [vmem:[%s1487 + $0x28] sm:$0xff]
        %v1494 = vld [vmem:[%s1487 + $0x30] sm:$0xff]
        %v1495 = vld [vmem:[%s1487 + $0x38] sm:$0xff]
        %v1497 = vsel %vm377, %v1449, 0
        %v1500 = vsel %vm377, %v1454, 0
        %v1503 = vsel %vm377, %v1459, 0
        %v1506 = vsel %vm377, %v1464, 0
        %v1509 = vsel %vm377, %v1469, 0
        %v1512 = vsel %vm377, %v1474, 0
        %v1515 = vsel %vm377, %v1479, 0
        %v1518 = vsel %vm377, %v1484, 0
        %1520 = vmatprep.subr.mxu0 0.0
        %1521 = vmatpush1.msra.mxu0 0.0
        %1522 = vmatprep.subr.mxu0 0.0
        %1523 = vmatpush1.msra.mxu0 0.0
        %1524 = vmatprep.subr.mxu0 0.0
        %1525 = vmatpush1.msra.mxu0 0.0
        %1526 = vmatprep.subr.mxu0 0.0
        %1527 = vmatpush1.msra.mxu0 0.0
        %1528 = vmatprep.subr.mxu0 0.0
        %1529 = vmatpush1.msra.mxu0 0.0
        %1530 = vmatprep.subr.mxu0 0.0
        %1531 = vmatpush1.msra.mxu0 0.0
        %1532 = vmatprep.subr.mxu0 0.0
        %1533 = vmatpush1.msra.mxu0 0.0
        %1534 = vmatprep.subr.mxu0 0.0
        %1535 = vmatpush1.msra.mxu0 0.0
        %1536 = vmatprep.subr.mxu0 0.0
        %1537 = vmatpush1.msra.mxu0 %v1495
        %1538 = vmatprep.subr.mxu0 0.0
        %1539 = vmatpush1.msra.mxu0 %v1494
        %1540 = vmatprep.subr.mxu0 0.0
        %1541 = vmatpush1.msra.mxu0 %v1493
        %1542 = vmatprep.subr.mxu0 0.0
        %1543 = vmatpush1.msra.mxu0 %v1492
        %1544 = vmatprep.subr.mxu0 0.0
        %1545 = vmatpush1.msra.mxu0 %v1491
        %1546 = vmatprep.subr.mxu0 0.0
        %1547 = vmatpush1.msra.mxu0 %v1490
        %1548 = vmatprep.subr.mxu0 0.0
        %1549 = vmatpush1.msra.mxu0 %v1489
        %1550 = vmatprep.subr.mxu0 0.0
        %1551 = vmatpush1.msra.mxu0 %v1488
        %1552 = vmatprep.subr.mxu0 0.0
        %1553 = vmatpush2.msra.mxu0 0.0
        %1554 = vmatprep.subr.mxu0 0.0
        %1555 = vmatpush2.msra.mxu0 0.0
        %1556 = vmatprep.subr.mxu0 0.0
        %1557 = vmatpush2.msra.mxu0 0.0
        %1558 = vmatprep.subr.mxu0 0.0
        %1559 = vmatpush2.msra.mxu0 0.0
        %1560 = vmatprep.subr.mxu0 0.0
        %1561 = vmatpush2.msra.mxu0 0.0
        %1562 = vmatprep.subr.mxu0 0.0
        %1563 = vmatpush2.msra.mxu0 0.0
        %1564 = vmatprep.subr.mxu0 0.0
        %1565 = vmatpush2.msra.mxu0 0.0
        %1566 = vmatprep.subr.mxu0 0.0
        %1567 = vmatpush2.msra.mxu0 0.0
        %1568 = vmatprep.subr.mxu0 0.0
        %1569 = vmatpush2.msra.mxu0 0.0
        %1570 = vmatprep.subr.mxu0 0.0
        %1571 = vmatpush2.msra.mxu0 0.0
        %1572 = vmatprep.subr.mxu0 0.0
        %1573 = vmatpush2.msra.mxu0 0.0
        %1574 = vmatprep.subr.mxu0 0.0
        %1575 = vmatpush2.msra.mxu0 0.0
        %1576 = vmatprep.subr.mxu0 0.0
        %1577 = vmatpush2.msra.mxu0 0.0
        %1578 = vmatprep.subr.mxu0 0.0
        %1579 = vmatpush2.msra.mxu0 0.0
        %1580 = vmatprep.subr.mxu0 0.0
        %1581 = vmatpush2.msra.mxu0 0.0
        %1582 = vmatprep.subr.mxu0 0.0
        %1583 = vmatpush2.msra.mxu0 0.0
        %1584 = vmatprep.mubr.f32.mxu0 0.0
        %1585 = vmatmul.mubr.f32.gmra.mxu0 %v1497
        %v1586 = vpop.f32.mrf.mxu0
        %v1587 = vadd.f32 0.0, %v1586
        %v1588 = vpop.f32.mrf.mxu0
        %1589 = vmatprep.mubr.f32.mxu0 0.0
        %1590 = vmatmul.mubr.f32.gmra.mxu0 %v1500
        %v1591 = vpop.f32.mrf.mxu0
        %v1592 = vadd.f32 0.0, %v1591
        %v1593 = vpop.f32.mrf.mxu0
        %1594 = vmatprep.mubr.f32.mxu0 0.0
        %1595 = vmatmul.mubr.f32.gmra.mxu0 %v1503
        %v1596 = vpop.f32.mrf.mxu0
        %v1597 = vadd.f32 0.0, %v1596
        %v1598 = vpop.f32.mrf.mxu0
        %1599 = vmatprep.mubr.f32.mxu0 0.0
        %1600 = vmatmul.mubr.f32.gmra.mxu0 %v1506
        %v1601 = vpop.f32.mrf.mxu0
        %v1602 = vadd.f32 0.0, %v1601
        %v1603 = vpop.f32.mrf.mxu0
        %1604 = vmatprep.mubr.f32.mxu0 0.0
        %1605 = vmatmul.mubr.f32.gmra.mxu0 %v1509
        %v1606 = vpop.f32.mrf.mxu0
        %v1607 = vadd.f32 0.0, %v1606
        %v1608 = vpop.f32.mrf.mxu0
        %1609 = vmatprep.mubr.f32.mxu0 0.0
        %1610 = vmatmul.mubr.f32.gmra.mxu0 %v1512
        %v1611 = vpop.f32.mrf.mxu0
        %v1612 = vadd.f32 0.0, %v1611
        %v1613 = vpop.f32.mrf.mxu0
        %1614 = vmatprep.mubr.f32.mxu0 0.0
        %1615 = vmatmul.mubr.f32.gmra.mxu0 %v1515
        %v1616 = vpop.f32.mrf.mxu0
        %v1617 = vadd.f32 0.0, %v1616
        %v1618 = vpop.f32.mrf.mxu0
        %1619 = vmatprep.mubr.f32.mxu0 0.0
        %1620 = vmatmul.mubr.f32.gmra.mxu0 %v1518
        %v1621 = vpop.f32.mrf.mxu0
        %v1622 = vadd.f32 0.0, %v1621
        %v1623 = vpop.f32.mrf.mxu0
        %1624 = vdwg.mxu0
        %v1625 = vadd.f32 %v1341, %v1587
        %v1626 = vadd.f32 %v1342, %v1592
        %v1627 = vadd.f32 %v1343, %v1597
        %v1628 = vadd.f32 %v1344, %v1602
        %v1629 = vadd.f32 %v1345, %v1607
        %v1630 = vadd.f32 %v1346, %v1612
        %v1631 = vadd.f32 %v1347, %v1617
        %v1632 = vadd.f32 %v1348, %v1622
        %s1633 = scalar_lea.vmem %s4, 256
        %v1634 = vld [vmem:[%s1633] sm:$0xff]
        %v1635 = vld [vmem:[%s1633 + $0x8] sm:$0xff]
        %v1636 = vld [vmem:[%s1633 + $0x10] sm:$0xff]
        %v1637 = vld [vmem:[%s1633 + $0x18] sm:$0xff]
        %v1638 = vld [vmem:[%s1633 + $0x20] sm:$0xff]
        %v1639 = vld [vmem:[%s1633 + $0x28] sm:$0xff]
        %v1640 = vld [vmem:[%s1633 + $0x30] sm:$0xff]
        %v1641 = vld [vmem:[%s1633 + $0x38] sm:$0xff]
        %v1643 = vsel %vm377, %v507, 0
        %v1646 = vsel %vm377, %v508, 0
        %v1649 = vsel %vm377, %v509, 0
        %v1652 = vsel %vm377, %v510, 0
        %v1655 = vsel %vm377, %v511, 0
        %v1658 = vsel %vm377, %v512, 0
        %v1661 = vsel %vm377, %v513, 0
        %v1664 = vsel %vm377, %v514, 0
        %1666 = vmatprep.subr.mxu0 0.0
        %1667 = vmatpush1.msra.mxu0 0.0
        %1668 = vmatprep.subr.mxu0 0.0
        %1669 = vmatpush1.msra.mxu0 0.0
        %1670 = vmatprep.subr.mxu0 0.0
        %1671 = vmatpush1.msra.mxu0 0.0
        %1672 = vmatprep.subr.mxu0 0.0
        %1673 = vmatpush1.msra.mxu0 0.0
        %1674 = vmatprep.subr.mxu0 0.0
        %1675 = vmatpush1.msra.mxu0 0.0
        %1676 = vmatprep.subr.mxu0 0.0
        %1677 = vmatpush1.msra.mxu0 0.0
        %1678 = vmatprep.subr.mxu0 0.0
        %1679 = vmatpush1.msra.mxu0 0.0
        %1680 = vmatprep.subr.mxu0 0.0
        %1681 = vmatpush1.msra.mxu0 0.0
        %1682 = vmatprep.subr.mxu0 0.0
        %1683 = vmatpush1.msra.mxu0 %v1641
        %1684 = vmatprep.subr.mxu0 0.0
        %1685 = vmatpush1.msra.mxu0 %v1640
        %1686 = vmatprep.subr.mxu0 0.0
        %1687 = vmatpush1.msra.mxu0 %v1639
        %1688 = vmatprep.subr.mxu0 0.0
        %1689 = vmatpush1.msra.mxu0 %v1638
        %1690 = vmatprep.subr.mxu0 0.0
        %1691 = vmatpush1.msra.mxu0 %v1637
        %1692 = vmatprep.subr.mxu0 0.0
        %1693 = vmatpush1.msra.mxu0 %v1636
        %1694 = vmatprep.subr.mxu0 0.0
        %1695 = vmatpush1.msra.mxu0 %v1635
        %1696 = vmatprep.subr.mxu0 0.0
        %1697 = vmatpush1.msra.mxu0 %v1634
        %1698 = vmatprep.subr.mxu0 0.0
        %1699 = vmatpush2.msra.mxu0 0.0
        %1700 = vmatprep.subr.mxu0 0.0
        %1701 = vmatpush2.msra.mxu0 0.0
        %1702 = vmatprep.subr.mxu0 0.0
        %1703 = vmatpush2.msra.mxu0 0.0
        %1704 = vmatprep.subr.mxu0 0.0
        %1705 = vmatpush2.msra.mxu0 0.0
        %1706 = vmatprep.subr.mxu0 0.0
        %1707 = vmatpush2.msra.mxu0 0.0
        %1708 = vmatprep.subr.mxu0 0.0
        %1709 = vmatpush2.msra.mxu0 0.0
        %1710 = vmatprep.subr.mxu0 0.0
        %1711 = vmatpush2.msra.mxu0 0.0
        %1712 = vmatprep.subr.mxu0 0.0
        %1713 = vmatpush2.msra.mxu0 0.0
        %1714 = vmatprep.subr.mxu0 0.0
        %1715 = vmatpush2.msra.mxu0 0.0
        %1716 = vmatprep.subr.mxu0 0.0
        %1717 = vmatpush2.msra.mxu0 0.0
        %1718 = vmatprep.subr.mxu0 0.0
        %1719 = vmatpush2.msra.mxu0 0.0
        %1720 = vmatprep.subr.mxu0 0.0
        %1721 = vmatpush2.msra.mxu0 0.0
        %1722 = vmatprep.subr.mxu0 0.0
        %1723 = vmatpush2.msra.mxu0 0.0
        %1724 = vmatprep.subr.mxu0 0.0
        %1725 = vmatpush2.msra.mxu0 0.0
        %1726 = vmatprep.subr.mxu0 0.0
        %1727 = vmatpush2.msra.mxu0 0.0
        %1728 = vmatprep.subr.mxu0 0.0
        %1729 = vmatpush2.msra.mxu0 0.0
        %1730 = vmatprep.mubr.f32.mxu0 0.0
        %1731 = vmatmul.mubr.f32.gmra.mxu0 %v1643
        %v1732 = vpop.f32.mrf.mxu0
        %v1733 = vadd.f32 0.0, %v1732
        %v1734 = vpop.f32.mrf.mxu0
        %1735 = vmatprep.mubr.f32.mxu0 0.0
        %1736 = vmatmul.mubr.f32.gmra.mxu0 %v1646
        %v1737 = vpop.f32.mrf.mxu0
        %v1738 = vadd.f32 0.0, %v1737
        %v1739 = vpop.f32.mrf.mxu0
        %1740 = vmatprep.mubr.f32.mxu0 0.0
        %1741 = vmatmul.mubr.f32.gmra.mxu0 %v1649
        %v1742 = vpop.f32.mrf.mxu0
        %v1743 = vadd.f32 0.0, %v1742
        %v1744 = vpop.f32.mrf.mxu0
        %1745 = vmatprep.mubr.f32.mxu0 0.0
        %1746 = vmatmul.mubr.f32.gmra.mxu0 %v1652
        %v1747 = vpop.f32.mrf.mxu0
        %v1748 = vadd.f32 0.0, %v1747
        %v1749 = vpop.f32.mrf.mxu0
        %1750 = vmatprep.mubr.f32.mxu0 0.0
        %1751 = vmatmul.mubr.f32.gmra.mxu0 %v1655
        %v1752 = vpop.f32.mrf.mxu0
        %v1753 = vadd.f32 0.0, %v1752
        %v1754 = vpop.f32.mrf.mxu0
        %1755 = vmatprep.mubr.f32.mxu0 0.0
        %1756 = vmatmul.mubr.f32.gmra.mxu0 %v1658
        %v1757 = vpop.f32.mrf.mxu0
        %v1758 = vadd.f32 0.0, %v1757
        %v1759 = vpop.f32.mrf.mxu0
        %1760 = vmatprep.mubr.f32.mxu0 0.0
        %1761 = vmatmul.mubr.f32.gmra.mxu0 %v1661
        %v1762 = vpop.f32.mrf.mxu0
        %v1763 = vadd.f32 0.0, %v1762
        %v1764 = vpop.f32.mrf.mxu0
        %1765 = vmatprep.mubr.f32.mxu0 0.0
        %1766 = vmatmul.mubr.f32.gmra.mxu0 %v1664
        %v1767 = vpop.f32.mrf.mxu0
        %v1768 = vadd.f32 0.0, %v1767
        %v1769 = vpop.f32.mrf.mxu0
        %1770 = vdwg.mxu0
        %v1771 = vadd.f32 %v1625, %v1733
        %v1772 = vadd.f32 %v1626, %v1738
        %v1773 = vadd.f32 %v1627, %v1743
        %v1774 = vadd.f32 %v1628, %v1748
        %v1775 = vadd.f32 %v1629, %v1753
        %v1776 = vadd.f32 %v1630, %v1758
        %v1777 = vadd.f32 %v1631, %v1763
        %v1778 = vadd.f32 %v1632, %v1768
        %s1779 = scalar_lea.vmem %s3, 320
        %v1780 = vld [vmem:[%s1779] sm:$0xff]
        %v1781 = vld [vmem:[%s1779 + $0x8] sm:$0xff]
        %v1782 = vld [vmem:[%s1779 + $0x10] sm:$0xff]
        %v1783 = vld [vmem:[%s1779 + $0x18] sm:$0xff]
        %v1784 = vld [vmem:[%s1779 + $0x20] sm:$0xff]
        %v1785 = vld [vmem:[%s1779 + $0x28] sm:$0xff]
        %v1786 = vld [vmem:[%s1779 + $0x30] sm:$0xff]
        %v1787 = vld [vmem:[%s1779 + $0x38] sm:$0xff]
        %v1789 = vsel %vm377, %v1780, 0
        %v1792 = vsel %vm377, %v1781, 0
        %v1795 = vsel %vm377, %v1782, 0
        %v1798 = vsel %vm377, %v1783, 0
        %v1801 = vsel %vm377, %v1784, 0
        %v1804 = vsel %vm377, %v1785, 0
        %v1807 = vsel %vm377, %v1786, 0
        %v1810 = vsel %vm377, %v1787, 0
        %1812 = vmatprep.subr.mxu0 0.0
        %1813 = vmatpush1.msra.mxu0 0.0
        %1814 = vmatprep.subr.mxu0 0.0
        %1815 = vmatpush1.msra.mxu0 0.0
        %1816 = vmatprep.subr.mxu0 0.0
        %1817 = vmatpush1.msra.mxu0 0.0
        %1818 = vmatprep.subr.mxu0 0.0
        %1819 = vmatpush1.msra.mxu0 0.0
        %1820 = vmatprep.subr.mxu0 0.0
        %1821 = vmatpush1.msra.mxu0 0.0
        %1822 = vmatprep.subr.mxu0 0.0
        %1823 = vmatpush1.msra.mxu0 0.0
        %1824 = vmatprep.subr.mxu0 0.0
        %1825 = vmatpush1.msra.mxu0 0.0
        %1826 = vmatprep.subr.mxu0 0.0
        %1827 = vmatpush1.msra.mxu0 0.0
        %1828 = vmatprep.subr.mxu0 0.0
        %1829 = vmatpush1.msra.mxu0 %v514
        %1830 = vmatprep.subr.mxu0 0.0
        %1831 = vmatpush1.msra.mxu0 %v513
        %1832 = vmatprep.subr.mxu0 0.0
        %1833 = vmatpush1.msra.mxu0 %v512
        %1834 = vmatprep.subr.mxu0 0.0
        %1835 = vmatpush1.msra.mxu0 %v511
        %1836 = vmatprep.subr.mxu0 0.0
        %1837 = vmatpush1.msra.mxu0 %v510
        %1838 = vmatprep.subr.mxu0 0.0
        %1839 = vmatpush1.msra.mxu0 %v509
        %1840 = vmatprep.subr.mxu0 0.0
        %1841 = vmatpush1.msra.mxu0 %v508
        %1842 = vmatprep.subr.mxu0 0.0
        %1843 = vmatpush1.msra.mxu0 %v507
        %1844 = vmatprep.subr.mxu0 0.0
        %1845 = vmatpush2.msra.mxu0 0.0
        %1846 = vmatprep.subr.mxu0 0.0
        %1847 = vmatpush2.msra.mxu0 0.0
        %1848 = vmatprep.subr.mxu0 0.0
        %1849 = vmatpush2.msra.mxu0 0.0
        %1850 = vmatprep.subr.mxu0 0.0
        %1851 = vmatpush2.msra.mxu0 0.0
        %1852 = vmatprep.subr.mxu0 0.0
        %1853 = vmatpush2.msra.mxu0 0.0
        %1854 = vmatprep.subr.mxu0 0.0
        %1855 = vmatpush2.msra.mxu0 0.0
        %1856 = vmatprep.subr.mxu0 0.0
        %1857 = vmatpush2.msra.mxu0 0.0
        %1858 = vmatprep.subr.mxu0 0.0
        %1859 = vmatpush2.msra.mxu0 0.0
        %1860 = vmatprep.subr.mxu0 0.0
        %1861 = vmatpush2.msra.mxu0 0.0
        %1862 = vmatprep.subr.mxu0 0.0
        %1863 = vmatpush2.msra.mxu0 0.0
        %1864 = vmatprep.subr.mxu0 0.0
        %1865 = vmatpush2.msra.mxu0 0.0
        %1866 = vmatprep.subr.mxu0 0.0
        %1867 = vmatpush2.msra.mxu0 0.0
        %1868 = vmatprep.subr.mxu0 0.0
        %1869 = vmatpush2.msra.mxu0 0.0
        %1870 = vmatprep.subr.mxu0 0.0
        %1871 = vmatpush2.msra.mxu0 0.0
        %1872 = vmatprep.subr.mxu0 0.0
        %1873 = vmatpush2.msra.mxu0 0.0
        %1874 = vmatprep.subr.mxu0 0.0
        %1875 = vmatpush2.msra.mxu0 0.0
        %1876 = vmatprep.mubr.f32.mxu0 0.0
        %1877 = vmatmul.mubr.f32.gmra.mxu0 %v1789
        %v1878 = vpop.f32.mrf.mxu0
        %v1879 = vadd.f32 0.0, %v1878
        %v1880 = vpop.f32.mrf.mxu0
        %1881 = vmatprep.mubr.f32.mxu0 0.0
        %1882 = vmatmul.mubr.f32.gmra.mxu0 %v1792
        %v1883 = vpop.f32.mrf.mxu0
        %v1884 = vadd.f32 0.0, %v1883
        %v1885 = vpop.f32.mrf.mxu0
        %1886 = vmatprep.mubr.f32.mxu0 0.0
        %1887 = vmatmul.mubr.f32.gmra.mxu0 %v1795
        %v1888 = vpop.f32.mrf.mxu0
        %v1889 = vadd.f32 0.0, %v1888
        %v1890 = vpop.f32.mrf.mxu0
        %1891 = vmatprep.mubr.f32.mxu0 0.0
        %1892 = vmatmul.mubr.f32.gmra.mxu0 %v1798
        %v1893 = vpop.f32.mrf.mxu0
        %v1894 = vadd.f32 0.0, %v1893
        %v1895 = vpop.f32.mrf.mxu0
        %1896 = vmatprep.mubr.f32.mxu0 0.0
        %1897 = vmatmul.mubr.f32.gmra.mxu0 %v1801
        %v1898 = vpop.f32.mrf.mxu0
        %v1899 = vadd.f32 0.0, %v1898
        %v1900 = vpop.f32.mrf.mxu0
        %1901 = vmatprep.mubr.f32.mxu0 0.0
        %1902 = vmatmul.mubr.f32.gmra.mxu0 %v1804
        %v1903 = vpop.f32.mrf.mxu0
        %v1904 = vadd.f32 0.0, %v1903
        %v1905 = vpop.f32.mrf.mxu0
        %1906 = vmatprep.mubr.f32.mxu0 0.0
        %1907 = vmatmul.mubr.f32.gmra.mxu0 %v1807
        %v1908 = vpop.f32.mrf.mxu0
        %v1909 = vadd.f32 0.0, %v1908
        %v1910 = vpop.f32.mrf.mxu0
        %1911 = vmatprep.mubr.f32.mxu0 0.0
        %1912 = vmatmul.mubr.f32.gmra.mxu0 %v1810
        %v1913 = vpop.f32.mrf.mxu0
        %v1914 = vadd.f32 0.0, %v1913
        %v1915 = vpop.f32.mrf.mxu0
        %1916 = vdwg.mxu0
        %s1917 = scalar_lea.vmem %s4, 320
        %v1918 = vld [vmem:[%s1917] sm:$0xff]
        %v1919 = vld [vmem:[%s1917 + $0x8] sm:$0xff]
        %v1920 = vld [vmem:[%s1917 + $0x10] sm:$0xff]
        %v1921 = vld [vmem:[%s1917 + $0x18] sm:$0xff]
        %v1922 = vld [vmem:[%s1917 + $0x20] sm:$0xff]
        %v1923 = vld [vmem:[%s1917 + $0x28] sm:$0xff]
        %v1924 = vld [vmem:[%s1917 + $0x30] sm:$0xff]
        %v1925 = vld [vmem:[%s1917 + $0x38] sm:$0xff]
        %v1927 = vsel %vm377, %v1879, 0
        %v1930 = vsel %vm377, %v1884, 0
        %v1933 = vsel %vm377, %v1889, 0
        %v1936 = vsel %vm377, %v1894, 0
        %v1939 = vsel %vm377, %v1899, 0
        %v1942 = vsel %vm377, %v1904, 0
        %v1945 = vsel %vm377, %v1909, 0
        %v1948 = vsel %vm377, %v1914, 0
        %1950 = vmatprep.subr.mxu0 0.0
        %1951 = vmatpush1.msra.mxu0 0.0
        %1952 = vmatprep.subr.mxu0 0.0
        %1953 = vmatpush1.msra.mxu0 0.0
        %1954 = vmatprep.subr.mxu0 0.0
        %1955 = vmatpush1.msra.mxu0 0.0
        %1956 = vmatprep.subr.mxu0 0.0
        %1957 = vmatpush1.msra.mxu0 0.0
        %1958 = vmatprep.subr.mxu0 0.0
        %1959 = vmatpush1.msra.mxu0 0.0
        %1960 = vmatprep.subr.mxu0 0.0
        %1961 = vmatpush1.msra.mxu0 0.0
        %1962 = vmatprep.subr.mxu0 0.0
        %1963 = vmatpush1.msra.mxu0 0.0
        %1964 = vmatprep.subr.mxu0 0.0
        %1965 = vmatpush1.msra.mxu0 0.0
        %1966 = vmatprep.subr.mxu0 0.0
        %1967 = vmatpush1.msra.mxu0 %v1925
        %1968 = vmatprep.subr.mxu0 0.0
        %1969 = vmatpush1.msra.mxu0 %v1924
        %1970 = vmatprep.subr.mxu0 0.0
        %1971 = vmatpush1.msra.mxu0 %v1923
        %1972 = vmatprep.subr.mxu0 0.0
        %1973 = vmatpush1.msra.mxu0 %v1922
        %1974 = vmatprep.subr.mxu0 0.0
        %1975 = vmatpush1.msra.mxu0 %v1921
        %1976 = vmatprep.subr.mxu0 0.0
        %1977 = vmatpush1.msra.mxu0 %v1920
        %1978 = vmatprep.subr.mxu0 0.0
        %1979 = vmatpush1.msra.mxu0 %v1919
        %1980 = vmatprep.subr.mxu0 0.0
        %1981 = vmatpush1.msra.mxu0 %v1918
        %1982 = vmatprep.subr.mxu0 0.0
        %1983 = vmatpush2.msra.mxu0 0.0
        %1984 = vmatprep.subr.mxu0 0.0
        %1985 = vmatpush2.msra.mxu0 0.0
        %1986 = vmatprep.subr.mxu0 0.0
        %1987 = vmatpush2.msra.mxu0 0.0
        %1988 = vmatprep.subr.mxu0 0.0
        %1989 = vmatpush2.msra.mxu0 0.0
        %1990 = vmatprep.subr.mxu0 0.0
        %1991 = vmatpush2.msra.mxu0 0.0
        %1992 = vmatprep.subr.mxu0 0.0
        %1993 = vmatpush2.msra.mxu0 0.0
        %1994 = vmatprep.subr.mxu0 0.0
        %1995 = vmatpush2.msra.mxu0 0.0
        %1996 = vmatprep.subr.mxu0 0.0
        %1997 = vmatpush2.msra.mxu0 0.0
        %1998 = vmatprep.subr.mxu0 0.0
        %1999 = vmatpush2.msra.mxu0 0.0
        %2000 = vmatprep.subr.mxu0 0.0
        %2001 = vmatpush2.msra.mxu0 0.0
        %2002 = vmatprep.subr.mxu0 0.0
        %2003 = vmatpush2.msra.mxu0 0.0
        %2004 = vmatprep.subr.mxu0 0.0
        %2005 = vmatpush2.msra.mxu0 0.0
        %2006 = vmatprep.subr.mxu0 0.0
        %2007 = vmatpush2.msra.mxu0 0.0
        %2008 = vmatprep.subr.mxu0 0.0
        %2009 = vmatpush2.msra.mxu0 0.0
        %2010 = vmatprep.subr.mxu0 0.0
        %2011 = vmatpush2.msra.mxu0 0.0
        %2012 = vmatprep.subr.mxu0 0.0
        %2013 = vmatpush2.msra.mxu0 0.0
        %2014 = vmatprep.mubr.f32.mxu0 0.0
        %2015 = vmatmul.mubr.f32.gmra.mxu0 %v1927
        %v2016 = vpop.f32.mrf.mxu0
        %v2017 = vadd.f32 0.0, %v2016
        %v2018 = vpop.f32.mrf.mxu0
        %2019 = vmatprep.mubr.f32.mxu0 0.0
        %2020 = vmatmul.mubr.f32.gmra.mxu0 %v1930
        %v2021 = vpop.f32.mrf.mxu0
        %v2022 = vadd.f32 0.0, %v2021
        %v2023 = vpop.f32.mrf.mxu0
        %2024 = vmatprep.mubr.f32.mxu0 0.0
        %2025 = vmatmul.mubr.f32.gmra.mxu0 %v1933
        %v2026 = vpop.f32.mrf.mxu0
        %v2027 = vadd.f32 0.0, %v2026
        %v2028 = vpop.f32.mrf.mxu0
        %2029 = vmatprep.mubr.f32.mxu0 0.0
        %2030 = vmatmul.mubr.f32.gmra.mxu0 %v1936
        %v2031 = vpop.f32.mrf.mxu0
        %v2032 = vadd.f32 0.0, %v2031
        %v2033 = vpop.f32.mrf.mxu0
        %2034 = vmatprep.mubr.f32.mxu0 0.0
        %2035 = vmatmul.mubr.f32.gmra.mxu0 %v1939
        %v2036 = vpop.f32.mrf.mxu0
        %v2037 = vadd.f32 0.0, %v2036
        %v2038 = vpop.f32.mrf.mxu0
        %2039 = vmatprep.mubr.f32.mxu0 0.0
        %2040 = vmatmul.mubr.f32.gmra.mxu0 %v1942
        %v2041 = vpop.f32.mrf.mxu0
        %v2042 = vadd.f32 0.0, %v2041
        %v2043 = vpop.f32.mrf.mxu0
        %2044 = vmatprep.mubr.f32.mxu0 0.0
        %2045 = vmatmul.mubr.f32.gmra.mxu0 %v1945
        %v2046 = vpop.f32.mrf.mxu0
        %v2047 = vadd.f32 0.0, %v2046
        %v2048 = vpop.f32.mrf.mxu0
        %2049 = vmatprep.mubr.f32.mxu0 0.0
        %2050 = vmatmul.mubr.f32.gmra.mxu0 %v1948
        %v2051 = vpop.f32.mrf.mxu0
        %v2052 = vadd.f32 0.0, %v2051
        %v2053 = vpop.f32.mrf.mxu0
        %2054 = vdwg.mxu0
        %v2055 = vadd.f32 %v1771, %v2017
        %v2056 = vadd.f32 %v1772, %v2022
        %v2057 = vadd.f32 %v1773, %v2027
        %v2058 = vadd.f32 %v1774, %v2032
        %v2059 = vadd.f32 %v1775, %v2037
        %v2060 = vadd.f32 %v1776, %v2042
        %v2061 = vadd.f32 %v1777, %v2047
        %v2062 = vadd.f32 %v1778, %v2052
        %s2063 = scalar_lea.vmem %s3, 384
        %v2064 = vld [vmem:[%s2063] sm:$0xff]
        %v2065 = vld [vmem:[%s2063 + $0x8] sm:$0xff]
        %v2066 = vld [vmem:[%s2063 + $0x10] sm:$0xff]
        %v2067 = vld [vmem:[%s2063 + $0x18] sm:$0xff]
        %v2068 = vld [vmem:[%s2063 + $0x20] sm:$0xff]
        %v2069 = vld [vmem:[%s2063 + $0x28] sm:$0xff]
        %v2070 = vld [vmem:[%s2063 + $0x30] sm:$0xff]
        %v2071 = vld [vmem:[%s2063 + $0x38] sm:$0xff]
        %v2073 = vsel %vm377, %v2064, 0
        %v2076 = vsel %vm377, %v2065, 0
        %v2079 = vsel %vm377, %v2066, 0
        %v2082 = vsel %vm377, %v2067, 0
        %v2085 = vsel %vm377, %v2068, 0
        %v2088 = vsel %vm377, %v2069, 0
        %v2091 = vsel %vm377, %v2070, 0
        %v2094 = vsel %vm377, %v2071, 0
        %2096 = vmatprep.subr.mxu0 0.0
        %2097 = vmatpush1.msra.mxu0 0.0
        %2098 = vmatprep.subr.mxu0 0.0
        %2099 = vmatpush1.msra.mxu0 0.0
        %2100 = vmatprep.subr.mxu0 0.0
        %2101 = vmatpush1.msra.mxu0 0.0
        %2102 = vmatprep.subr.mxu0 0.0
        %2103 = vmatpush1.msra.mxu0 0.0
        %2104 = vmatprep.subr.mxu0 0.0
        %2105 = vmatpush1.msra.mxu0 0.0
        %2106 = vmatprep.subr.mxu0 0.0
        %2107 = vmatpush1.msra.mxu0 0.0
        %2108 = vmatprep.subr.mxu0 0.0
        %2109 = vmatpush1.msra.mxu0 0.0
        %2110 = vmatprep.subr.mxu0 0.0
        %2111 = vmatpush1.msra.mxu0 0.0
        %2112 = vmatprep.subr.mxu0 0.0
        %2113 = vmatpush1.msra.mxu0 %v514
        %2114 = vmatprep.subr.mxu0 0.0
        %2115 = vmatpush1.msra.mxu0 %v513
        %2116 = vmatprep.subr.mxu0 0.0
        %2117 = vmatpush1.msra.mxu0 %v512
        %2118 = vmatprep.subr.mxu0 0.0
        %2119 = vmatpush1.msra.mxu0 %v511
        %2120 = vmatprep.subr.mxu0 0.0
        %2121 = vmatpush1.msra.mxu0 %v510
        %2122 = vmatprep.subr.mxu0 0.0
        %2123 = vmatpush1.msra.mxu0 %v509
        %2124 = vmatprep.subr.mxu0 0.0
        %2125 = vmatpush1.msra.mxu0 %v508
        %2126 = vmatprep.subr.mxu0 0.0
        %2127 = vmatpush1.msra.mxu0 %v507
        %2128 = vmatprep.subr.mxu0 0.0
        %2129 = vmatpush2.msra.mxu0 0.0
        %2130 = vmatprep.subr.mxu0 0.0
        %2131 = vmatpush2.msra.mxu0 0.0
        %2132 = vmatprep.subr.mxu0 0.0
        %2133 = vmatpush2.msra.mxu0 0.0
        %2134 = vmatprep.subr.mxu0 0.0
        %2135 = vmatpush2.msra.mxu0 0.0
        %2136 = vmatprep.subr.mxu0 0.0
        %2137 = vmatpush2.msra.mxu0 0.0
        %2138 = vmatprep.subr.mxu0 0.0
        %2139 = vmatpush2.msra.mxu0 0.0
        %2140 = vmatprep.subr.mxu0 0.0
        %2141 = vmatpush2.msra.mxu0 0.0
        %2142 = vmatprep.subr.mxu0 0.0
        %2143 = vmatpush2.msra.mxu0 0.0
        %2144 = vmatprep.subr.mxu0 0.0
        %2145 = vmatpush2.msra.mxu0 0.0
        %2146 = vmatprep.subr.mxu0 0.0
        %2147 = vmatpush2.msra.mxu0 0.0
        %2148 = vmatprep.subr.mxu0 0.0
        %2149 = vmatpush2.msra.mxu0 0.0
        %2150 = vmatprep.subr.mxu0 0.0
        %2151 = vmatpush2.msra.mxu0 0.0
        %2152 = vmatprep.subr.mxu0 0.0
        %2153 = vmatpush2.msra.mxu0 0.0
        %2154 = vmatprep.subr.mxu0 0.0
        %2155 = vmatpush2.msra.mxu0 0.0
        %2156 = vmatprep.subr.mxu0 0.0
        %2157 = vmatpush2.msra.mxu0 0.0
        %2158 = vmatprep.subr.mxu0 0.0
        %2159 = vmatpush2.msra.mxu0 0.0
        %2160 = vmatprep.mubr.f32.mxu0 0.0
        %2161 = vmatmul.mubr.f32.gmra.mxu0 %v2073
        %v2162 = vpop.f32.mrf.mxu0
        %v2163 = vadd.f32 0.0, %v2162
        %v2164 = vpop.f32.mrf.mxu0
        %2165 = vmatprep.mubr.f32.mxu0 0.0
        %2166 = vmatmul.mubr.f32.gmra.mxu0 %v2076
        %v2167 = vpop.f32.mrf.mxu0
        %v2168 = vadd.f32 0.0, %v2167
        %v2169 = vpop.f32.mrf.mxu0
        %2170 = vmatprep.mubr.f32.mxu0 0.0
        %2171 = vmatmul.mubr.f32.gmra.mxu0 %v2079
        %v2172 = vpop.f32.mrf.mxu0
        %v2173 = vadd.f32 0.0, %v2172
        %v2174 = vpop.f32.mrf.mxu0
        %2175 = vmatprep.mubr.f32.mxu0 0.0
        %2176 = vmatmul.mubr.f32.gmra.mxu0 %v2082
        %v2177 = vpop.f32.mrf.mxu0
        %v2178 = vadd.f32 0.0, %v2177
        %v2179 = vpop.f32.mrf.mxu0
        %2180 = vmatprep.mubr.f32.mxu0 0.0
        %2181 = vmatmul.mubr.f32.gmra.mxu0 %v2085
        %v2182 = vpop.f32.mrf.mxu0
        %v2183 = vadd.f32 0.0, %v2182
        %v2184 = vpop.f32.mrf.mxu0
        %2185 = vmatprep.mubr.f32.mxu0 0.0
        %2186 = vmatmul.mubr.f32.gmra.mxu0 %v2088
        %v2187 = vpop.f32.mrf.mxu0
        %v2188 = vadd.f32 0.0, %v2187
        %v2189 = vpop.f32.mrf.mxu0
        %2190 = vmatprep.mubr.f32.mxu0 0.0
        %2191 = vmatmul.mubr.f32.gmra.mxu0 %v2091
        %v2192 = vpop.f32.mrf.mxu0
        %v2193 = vadd.f32 0.0, %v2192
        %v2194 = vpop.f32.mrf.mxu0
        %2195 = vmatprep.mubr.f32.mxu0 0.0
        %2196 = vmatmul.mubr.f32.gmra.mxu0 %v2094
        %v2197 = vpop.f32.mrf.mxu0
        %v2198 = vadd.f32 0.0, %v2197
        %v2199 = vpop.f32.mrf.mxu0
        %2200 = vdwg.mxu0
        %s2201 = scalar_lea.vmem %s4, 384
        %v2202 = vld [vmem:[%s2201] sm:$0xff]
        %v2203 = vld [vmem:[%s2201 + $0x8] sm:$0xff]
        %v2204 = vld [vmem:[%s2201 + $0x10] sm:$0xff]
        %v2205 = vld [vmem:[%s2201 + $0x18] sm:$0xff]
        %v2206 = vld [vmem:[%s2201 + $0x20] sm:$0xff]
        %v2207 = vld [vmem:[%s2201 + $0x28] sm:$0xff]
        %v2208 = vld [vmem:[%s2201 + $0x30] sm:$0xff]
        %v2209 = vld [vmem:[%s2201 + $0x38] sm:$0xff]
        %v2211 = vsel %vm377, %v2163, 0
        %v2214 = vsel %vm377, %v2168, 0
        %v2217 = vsel %vm377, %v2173, 0
        %v2220 = vsel %vm377, %v2178, 0
        %v2223 = vsel %vm377, %v2183, 0
        %v2226 = vsel %vm377, %v2188, 0
        %v2229 = vsel %vm377, %v2193, 0
        %v2232 = vsel %vm377, %v2198, 0
        %2234 = vmatprep.subr.mxu0 0.0
        %2235 = vmatpush1.msra.mxu0 0.0
        %2236 = vmatprep.subr.mxu0 0.0
        %2237 = vmatpush1.msra.mxu0 0.0
        %2238 = vmatprep.subr.mxu0 0.0
        %2239 = vmatpush1.msra.mxu0 0.0
        %2240 = vmatprep.subr.mxu0 0.0
        %2241 = vmatpush1.msra.mxu0 0.0
        %2242 = vmatprep.subr.mxu0 0.0
        %2243 = vmatpush1.msra.mxu0 0.0
        %2244 = vmatprep.subr.mxu0 0.0
        %2245 = vmatpush1.msra.mxu0 0.0
        %2246 = vmatprep.subr.mxu0 0.0
        %2247 = vmatpush1.msra.mxu0 0.0
        %2248 = vmatprep.subr.mxu0 0.0
        %2249 = vmatpush1.msra.mxu0 0.0
        %2250 = vmatprep.subr.mxu0 0.0
        %2251 = vmatpush1.msra.mxu0 %v2209
        %2252 = vmatprep.subr.mxu0 0.0
        %2253 = vmatpush1.msra.mxu0 %v2208
        %2254 = vmatprep.subr.mxu0 0.0
        %2255 = vmatpush1.msra.mxu0 %v2207
        %2256 = vmatprep.subr.mxu0 0.0
        %2257 = vmatpush1.msra.mxu0 %v2206
        %2258 = vmatprep.subr.mxu0 0.0
        %2259 = vmatpush1.msra.mxu0 %v2205
        %2260 = vmatprep.subr.mxu0 0.0
        %2261 = vmatpush1.msra.mxu0 %v2204
        %2262 = vmatprep.subr.mxu0 0.0
        %2263 = vmatpush1.msra.mxu0 %v2203
        %2264 = vmatprep.subr.mxu0 0.0
        %2265 = vmatpush1.msra.mxu0 %v2202
        %2266 = vmatprep.subr.mxu0 0.0
        %2267 = vmatpush2.msra.mxu0 0.0
        %2268 = vmatprep.subr.mxu0 0.0
        %2269 = vmatpush2.msra.mxu0 0.0
        %2270 = vmatprep.subr.mxu0 0.0
        %2271 = vmatpush2.msra.mxu0 0.0
        %2272 = vmatprep.subr.mxu0 0.0
        %2273 = vmatpush2.msra.mxu0 0.0
        %2274 = vmatprep.subr.mxu0 0.0
        %2275 = vmatpush2.msra.mxu0 0.0
        %2276 = vmatprep.subr.mxu0 0.0
        %2277 = vmatpush2.msra.mxu0 0.0
        %2278 = vmatprep.subr.mxu0 0.0
        %2279 = vmatpush2.msra.mxu0 0.0
        %2280 = vmatprep.subr.mxu0 0.0
        %2281 = vmatpush2.msra.mxu0 0.0
        %2282 = vmatprep.subr.mxu0 0.0
        %2283 = vmatpush2.msra.mxu0 0.0
        %2284 = vmatprep.subr.mxu0 0.0
        %2285 = vmatpush2.msra.mxu0 0.0
        %2286 = vmatprep.subr.mxu0 0.0
        %2287 = vmatpush2.msra.mxu0 0.0
        %2288 = vmatprep.subr.mxu0 0.0
        %2289 = vmatpush2.msra.mxu0 0.0
        %2290 = vmatprep.subr.mxu0 0.0
        %2291 = vmatpush2.msra.mxu0 0.0
        %2292 = vmatprep.subr.mxu0 0.0
        %2293 = vmatpush2.msra.mxu0 0.0
        %2294 = vmatprep.subr.mxu0 0.0
        %2295 = vmatpush2.msra.mxu0 0.0
        %2296 = vmatprep.subr.mxu0 0.0
        %2297 = vmatpush2.msra.mxu0 0.0
        %2298 = vmatprep.mubr.f32.mxu0 0.0
        %2299 = vmatmul.mubr.f32.gmra.mxu0 %v2211
        %v2300 = vpop.f32.mrf.mxu0
        %v2301 = vadd.f32 0.0, %v2300
        %v2302 = vpop.f32.mrf.mxu0
        %2303 = vmatprep.mubr.f32.mxu0 0.0
        %2304 = vmatmul.mubr.f32.gmra.mxu0 %v2214
        %v2305 = vpop.f32.mrf.mxu0
        %v2306 = vadd.f32 0.0, %v2305
        %v2307 = vpop.f32.mrf.mxu0
        %2308 = vmatprep.mubr.f32.mxu0 0.0
        %2309 = vmatmul.mubr.f32.gmra.mxu0 %v2217
        %v2310 = vpop.f32.mrf.mxu0
        %v2311 = vadd.f32 0.0, %v2310
        %v2312 = vpop.f32.mrf.mxu0
        %2313 = vmatprep.mubr.f32.mxu0 0.0
        %2314 = vmatmul.mubr.f32.gmra.mxu0 %v2220
        %v2315 = vpop.f32.mrf.mxu0
        %v2316 = vadd.f32 0.0, %v2315
        %v2317 = vpop.f32.mrf.mxu0
        %2318 = vmatprep.mubr.f32.mxu0 0.0
        %2319 = vmatmul.mubr.f32.gmra.mxu0 %v2223
        %v2320 = vpop.f32.mrf.mxu0
        %v2321 = vadd.f32 0.0, %v2320
        %v2322 = vpop.f32.mrf.mxu0
        %2323 = vmatprep.mubr.f32.mxu0 0.0
        %2324 = vmatmul.mubr.f32.gmra.mxu0 %v2226
        %v2325 = vpop.f32.mrf.mxu0
        %v2326 = vadd.f32 0.0, %v2325
        %v2327 = vpop.f32.mrf.mxu0
        %2328 = vmatprep.mubr.f32.mxu0 0.0
        %2329 = vmatmul.mubr.f32.gmra.mxu0 %v2229
        %v2330 = vpop.f32.mrf.mxu0
        %v2331 = vadd.f32 0.0, %v2330
        %v2332 = vpop.f32.mrf.mxu0
        %2333 = vmatprep.mubr.f32.mxu0 0.0
        %2334 = vmatmul.mubr.f32.gmra.mxu0 %v2232
        %v2335 = vpop.f32.mrf.mxu0
        %v2336 = vadd.f32 0.0, %v2335
        %v2337 = vpop.f32.mrf.mxu0
        %2338 = vdwg.mxu0
        %v2339 = vadd.f32 %v2055, %v2301
        %v2340 = vadd.f32 %v2056, %v2306
        %v2341 = vadd.f32 %v2057, %v2311
        %v2342 = vadd.f32 %v2058, %v2316
        %v2343 = vadd.f32 %v2059, %v2321
        %v2344 = vadd.f32 %v2060, %v2326
        %v2345 = vadd.f32 %v2061, %v2331
        %v2346 = vadd.f32 %v2062, %v2336
        %s2347 = scalar_lea.vmem %s3, 448
        %v2348 = vld [vmem:[%s2347] sm:$0xff]
        %v2349 = vld [vmem:[%s2347 + $0x8] sm:$0xff]
        %v2350 = vld [vmem:[%s2347 + $0x10] sm:$0xff]
        %v2351 = vld [vmem:[%s2347 + $0x18] sm:$0xff]
        %v2352 = vld [vmem:[%s2347 + $0x20] sm:$0xff]
        %v2353 = vld [vmem:[%s2347 + $0x28] sm:$0xff]
        %v2354 = vld [vmem:[%s2347 + $0x30] sm:$0xff]
        %v2355 = vld [vmem:[%s2347 + $0x38] sm:$0xff]
        %v2357 = vsel %vm377, %v2348, 0
        %v2360 = vsel %vm377, %v2349, 0
        %v2363 = vsel %vm377, %v2350, 0
        %v2366 = vsel %vm377, %v2351, 0
        %v2369 = vsel %vm377, %v2352, 0
        %v2372 = vsel %vm377, %v2353, 0
        %v2375 = vsel %vm377, %v2354, 0
        %v2378 = vsel %vm377, %v2355, 0
        %2380 = vmatprep.subr.mxu0 0.0
        %2381 = vmatpush1.msra.mxu0 0.0
        %2382 = vmatprep.subr.mxu0 0.0
        %2383 = vmatpush1.msra.mxu0 0.0
        %2384 = vmatprep.subr.mxu0 0.0
        %2385 = vmatpush1.msra.mxu0 0.0
        %2386 = vmatprep.subr.mxu0 0.0
        %2387 = vmatpush1.msra.mxu0 0.0
        %2388 = vmatprep.subr.mxu0 0.0
        %2389 = vmatpush1.msra.mxu0 0.0
        %2390 = vmatprep.subr.mxu0 0.0
        %2391 = vmatpush1.msra.mxu0 0.0
        %2392 = vmatprep.subr.mxu0 0.0
        %2393 = vmatpush1.msra.mxu0 0.0
        %2394 = vmatprep.subr.mxu0 0.0
        %2395 = vmatpush1.msra.mxu0 0.0
        %2396 = vmatprep.subr.mxu0 0.0
        %2397 = vmatpush1.msra.mxu0 %v514
        %2398 = vmatprep.subr.mxu0 0.0
        %2399 = vmatpush1.msra.mxu0 %v513
        %2400 = vmatprep.subr.mxu0 0.0
        %2401 = vmatpush1.msra.mxu0 %v512
        %2402 = vmatprep.subr.mxu0 0.0
        %2403 = vmatpush1.msra.mxu0 %v511
        %2404 = vmatprep.subr.mxu0 0.0
        %2405 = vmatpush1.msra.mxu0 %v510
        %2406 = vmatprep.subr.mxu0 0.0
        %2407 = vmatpush1.msra.mxu0 %v509
        %2408 = vmatprep.subr.mxu0 0.0
        %2409 = vmatpush1.msra.mxu0 %v508
        %2410 = vmatprep.subr.mxu0 0.0
        %2411 = vmatpush1.msra.mxu0 %v507
        %2412 = vmatprep.subr.mxu0 0.0
        %2413 = vmatpush2.msra.mxu0 0.0
        %2414 = vmatprep.subr.mxu0 0.0
        %2415 = vmatpush2.msra.mxu0 0.0
        %2416 = vmatprep.subr.mxu0 0.0
        %2417 = vmatpush2.msra.mxu0 0.0
        %2418 = vmatprep.subr.mxu0 0.0
        %2419 = vmatpush2.msra.mxu0 0.0
        %2420 = vmatprep.subr.mxu0 0.0
        %2421 = vmatpush2.msra.mxu0 0.0
        %2422 = vmatprep.subr.mxu0 0.0
        %2423 = vmatpush2.msra.mxu0 0.0
        %2424 = vmatprep.subr.mxu0 0.0
        %2425 = vmatpush2.msra.mxu0 0.0
        %2426 = vmatprep.subr.mxu0 0.0
        %2427 = vmatpush2.msra.mxu0 0.0
        %2428 = vmatprep.subr.mxu0 0.0
        %2429 = vmatpush2.msra.mxu0 0.0
        %2430 = vmatprep.subr.mxu0 0.0
        %2431 = vmatpush2.msra.mxu0 0.0
        %2432 = vmatprep.subr.mxu0 0.0
        %2433 = vmatpush2.msra.mxu0 0.0
        %2434 = vmatprep.subr.mxu0 0.0
        %2435 = vmatpush2.msra.mxu0 0.0
        %2436 = vmatprep.subr.mxu0 0.0
        %2437 = vmatpush2.msra.mxu0 0.0
        %2438 = vmatprep.subr.mxu0 0.0
        %2439 = vmatpush2.msra.mxu0 0.0
        %2440 = vmatprep.subr.mxu0 0.0
        %2441 = vmatpush2.msra.mxu0 0.0
        %2442 = vmatprep.subr.mxu0 0.0
        %2443 = vmatpush2.msra.mxu0 0.0
        %2444 = vmatprep.mubr.f32.mxu0 0.0
        %2445 = vmatmul.mubr.f32.gmra.mxu0 %v2357
        %v2446 = vpop.f32.mrf.mxu0
        %v2447 = vadd.f32 0.0, %v2446
        %v2448 = vpop.f32.mrf.mxu0
        %2449 = vmatprep.mubr.f32.mxu0 0.0
        %2450 = vmatmul.mubr.f32.gmra.mxu0 %v2360
        %v2451 = vpop.f32.mrf.mxu0
        %v2452 = vadd.f32 0.0, %v2451
        %v2453 = vpop.f32.mrf.mxu0
        %2454 = vmatprep.mubr.f32.mxu0 0.0
        %2455 = vmatmul.mubr.f32.gmra.mxu0 %v2363
        %v2456 = vpop.f32.mrf.mxu0
        %v2457 = vadd.f32 0.0, %v2456
        %v2458 = vpop.f32.mrf.mxu0
        %2459 = vmatprep.mubr.f32.mxu0 0.0
        %2460 = vmatmul.mubr.f32.gmra.mxu0 %v2366
        %v2461 = vpop.f32.mrf.mxu0
        %v2462 = vadd.f32 0.0, %v2461
        %v2463 = vpop.f32.mrf.mxu0
        %2464 = vmatprep.mubr.f32.mxu0 0.0
        %2465 = vmatmul.mubr.f32.gmra.mxu0 %v2369
        %v2466 = vpop.f32.mrf.mxu0
        %v2467 = vadd.f32 0.0, %v2466
        %v2468 = vpop.f32.mrf.mxu0
        %2469 = vmatprep.mubr.f32.mxu0 0.0
        %2470 = vmatmul.mubr.f32.gmra.mxu0 %v2372
        %v2471 = vpop.f32.mrf.mxu0
        %v2472 = vadd.f32 0.0, %v2471
        %v2473 = vpop.f32.mrf.mxu0
        %2474 = vmatprep.mubr.f32.mxu0 0.0
        %2475 = vmatmul.mubr.f32.gmra.mxu0 %v2375
        %v2476 = vpop.f32.mrf.mxu0
        %v2477 = vadd.f32 0.0, %v2476
        %v2478 = vpop.f32.mrf.mxu0
        %2479 = vmatprep.mubr.f32.mxu0 0.0
        %2480 = vmatmul.mubr.f32.gmra.mxu0 %v2378
        %v2481 = vpop.f32.mrf.mxu0
        %v2482 = vadd.f32 0.0, %v2481
        %v2483 = vpop.f32.mrf.mxu0
        %2484 = vdwg.mxu0
        %s2485 = scalar_lea.vmem %s4, 448
        %v2486 = vld [vmem:[%s2485] sm:$0xff]
        %v2487 = vld [vmem:[%s2485 + $0x8] sm:$0xff]
        %v2488 = vld [vmem:[%s2485 + $0x10] sm:$0xff]
        %v2489 = vld [vmem:[%s2485 + $0x18] sm:$0xff]
        %v2490 = vld [vmem:[%s2485 + $0x20] sm:$0xff]
        %v2491 = vld [vmem:[%s2485 + $0x28] sm:$0xff]
        %v2492 = vld [vmem:[%s2485 + $0x30] sm:$0xff]
        %v2493 = vld [vmem:[%s2485 + $0x38] sm:$0xff]
        %v2495 = vsel %vm377, %v2447, 0
        %v2498 = vsel %vm377, %v2452, 0
        %v2501 = vsel %vm377, %v2457, 0
        %v2504 = vsel %vm377, %v2462, 0
        %v2507 = vsel %vm377, %v2467, 0
        %v2510 = vsel %vm377, %v2472, 0
        %v2513 = vsel %vm377, %v2477, 0
        %v2516 = vsel %vm377, %v2482, 0
        %2518 = vmatprep.subr.mxu0 0.0
        %2519 = vmatpush1.msra.mxu0 0.0
        %2520 = vmatprep.subr.mxu0 0.0
        %2521 = vmatpush1.msra.mxu0 0.0
        %2522 = vmatprep.subr.mxu0 0.0
        %2523 = vmatpush1.msra.mxu0 0.0
        %2524 = vmatprep.subr.mxu0 0.0
        %2525 = vmatpush1.msra.mxu0 0.0
        %2526 = vmatprep.subr.mxu0 0.0
        %2527 = vmatpush1.msra.mxu0 0.0
        %2528 = vmatprep.subr.mxu0 0.0
        %2529 = vmatpush1.msra.mxu0 0.0
        %2530 = vmatprep.subr.mxu0 0.0
        %2531 = vmatpush1.msra.mxu0 0.0
        %2532 = vmatprep.subr.mxu0 0.0
        %2533 = vmatpush1.msra.mxu0 0.0
        %2534 = vmatprep.subr.mxu0 0.0
        %2535 = vmatpush1.msra.mxu0 %v2493
        %2536 = vmatprep.subr.mxu0 0.0
        %2537 = vmatpush1.msra.mxu0 %v2492
        %2538 = vmatprep.subr.mxu0 0.0
        %2539 = vmatpush1.msra.mxu0 %v2491
        %2540 = vmatprep.subr.mxu0 0.0
        %2541 = vmatpush1.msra.mxu0 %v2490
        %2542 = vmatprep.subr.mxu0 0.0
        %2543 = vmatpush1.msra.mxu0 %v2489
        %2544 = vmatprep.subr.mxu0 0.0
        %2545 = vmatpush1.msra.mxu0 %v2488
        %2546 = vmatprep.subr.mxu0 0.0
        %2547 = vmatpush1.msra.mxu0 %v2487
        %2548 = vmatprep.subr.mxu0 0.0
        %2549 = vmatpush1.msra.mxu0 %v2486
        %2550 = vmatprep.subr.mxu0 0.0
        %2551 = vmatpush2.msra.mxu0 0.0
        %2552 = vmatprep.subr.mxu0 0.0
        %2553 = vmatpush2.msra.mxu0 0.0
        %2554 = vmatprep.subr.mxu0 0.0
        %2555 = vmatpush2.msra.mxu0 0.0
        %2556 = vmatprep.subr.mxu0 0.0
        %2557 = vmatpush2.msra.mxu0 0.0
        %2558 = vmatprep.subr.mxu0 0.0
        %2559 = vmatpush2.msra.mxu0 0.0
        %2560 = vmatprep.subr.mxu0 0.0
        %2561 = vmatpush2.msra.mxu0 0.0
        %2562 = vmatprep.subr.mxu0 0.0
        %2563 = vmatpush2.msra.mxu0 0.0
        %2564 = vmatprep.subr.mxu0 0.0
        %2565 = vmatpush2.msra.mxu0 0.0
        %2566 = vmatprep.subr.mxu0 0.0
        %2567 = vmatpush2.msra.mxu0 0.0
        %2568 = vmatprep.subr.mxu0 0.0
        %2569 = vmatpush2.msra.mxu0 0.0
        %2570 = vmatprep.subr.mxu0 0.0
        %2571 = vmatpush2.msra.mxu0 0.0
        %2572 = vmatprep.subr.mxu0 0.0
        %2573 = vmatpush2.msra.mxu0 0.0
        %2574 = vmatprep.subr.mxu0 0.0
        %2575 = vmatpush2.msra.mxu0 0.0
        %2576 = vmatprep.subr.mxu0 0.0
        %2577 = vmatpush2.msra.mxu0 0.0
        %2578 = vmatprep.subr.mxu0 0.0
        %2579 = vmatpush2.msra.mxu0 0.0
        %2580 = vmatprep.subr.mxu0 0.0
        %2581 = vmatpush2.msra.mxu0 0.0
        %2582 = vmatprep.mubr.f32.mxu0 0.0
        %2583 = vmatmul.mubr.f32.gmra.mxu0 %v2495
        %v2584 = vpop.f32.mrf.mxu0
        %v2585 = vadd.f32 0.0, %v2584
        %v2586 = vpop.f32.mrf.mxu0
        %2587 = vmatprep.mubr.f32.mxu0 0.0
        %2588 = vmatmul.mubr.f32.gmra.mxu0 %v2498
        %v2589 = vpop.f32.mrf.mxu0
        %v2590 = vadd.f32 0.0, %v2589
        %v2591 = vpop.f32.mrf.mxu0
        %2592 = vmatprep.mubr.f32.mxu0 0.0
        %2593 = vmatmul.mubr.f32.gmra.mxu0 %v2501
        %v2594 = vpop.f32.mrf.mxu0
        %v2595 = vadd.f32 0.0, %v2594
        %v2596 = vpop.f32.mrf.mxu0
        %2597 = vmatprep.mubr.f32.mxu0 0.0
        %2598 = vmatmul.mubr.f32.gmra.mxu0 %v2504
        %v2599 = vpop.f32.mrf.mxu0
        %v2600 = vadd.f32 0.0, %v2599
        %v2601 = vpop.f32.mrf.mxu0
        %2602 = vmatprep.mubr.f32.mxu0 0.0
        %2603 = vmatmul.mubr.f32.gmra.mxu0 %v2507
        %v2604 = vpop.f32.mrf.mxu0
        %v2605 = vadd.f32 0.0, %v2604
        %v2606 = vpop.f32.mrf.mxu0
        %2607 = vmatprep.mubr.f32.mxu0 0.0
        %2608 = vmatmul.mubr.f32.gmra.mxu0 %v2510
        %v2609 = vpop.f32.mrf.mxu0
        %v2610 = vadd.f32 0.0, %v2609
        %v2611 = vpop.f32.mrf.mxu0
        %2612 = vmatprep.mubr.f32.mxu0 0.0
        %2613 = vmatmul.mubr.f32.gmra.mxu0 %v2513
        %v2614 = vpop.f32.mrf.mxu0
        %v2615 = vadd.f32 0.0, %v2614
        %v2616 = vpop.f32.mrf.mxu0
        %2617 = vmatprep.mubr.f32.mxu0 0.0
        %2618 = vmatmul.mubr.f32.gmra.mxu0 %v2516
        %v2619 = vpop.f32.mrf.mxu0
        %v2620 = vadd.f32 0.0, %v2619
        %v2621 = vpop.f32.mrf.mxu0
        %2622 = vdwg.mxu0
        %v2623 = vadd.f32 %v2339, %v2585
        %v2624 = vadd.f32 %v2340, %v2590
        %v2625 = vadd.f32 %v2341, %v2595
        %v2626 = vadd.f32 %v2342, %v2600
        %v2627 = vadd.f32 %v2343, %v2605
        %v2628 = vadd.f32 %v2344, %v2610
        %v2629 = vadd.f32 %v2345, %v2615
        %v2630 = vadd.f32 %v2346, %v2620
        %s2631 = scalar_lea.vmem %s3, 512
        %v2632 = vld [vmem:[%s2631] sm:$0xff]
        %v2633 = vld [vmem:[%s2631 + $0x8] sm:$0xff]
        %v2634 = vld [vmem:[%s2631 + $0x10] sm:$0xff]
        %v2635 = vld [vmem:[%s2631 + $0x18] sm:$0xff]
        %v2636 = vld [vmem:[%s2631 + $0x20] sm:$0xff]
        %v2637 = vld [vmem:[%s2631 + $0x28] sm:$0xff]
        %v2638 = vld [vmem:[%s2631 + $0x30] sm:$0xff]
        %v2639 = vld [vmem:[%s2631 + $0x38] sm:$0xff]
        %v2641 = vsel %vm377, %v2632, 0
        %v2644 = vsel %vm377, %v2633, 0
        %v2647 = vsel %vm377, %v2634, 0
        %v2650 = vsel %vm377, %v2635, 0
        %v2653 = vsel %vm377, %v2636, 0
        %v2656 = vsel %vm377, %v2637, 0
        %v2659 = vsel %vm377, %v2638, 0
        %v2662 = vsel %vm377, %v2639, 0
        %2664 = vmatprep.subr.mxu0 0.0
        %2665 = vmatpush1.msra.mxu0 0.0
        %2666 = vmatprep.subr.mxu0 0.0
        %2667 = vmatpush1.msra.mxu0 0.0
        %2668 = vmatprep.subr.mxu0 0.0
        %2669 = vmatpush1.msra.mxu0 0.0
        %2670 = vmatprep.subr.mxu0 0.0
        %2671 = vmatpush1.msra.mxu0 0.0
        %2672 = vmatprep.subr.mxu0 0.0
        %2673 = vmatpush1.msra.mxu0 0.0
        %2674 = vmatprep.subr.mxu0 0.0
        %2675 = vmatpush1.msra.mxu0 0.0
        %2676 = vmatprep.subr.mxu0 0.0
        %2677 = vmatpush1.msra.mxu0 0.0
        %2678 = vmatprep.subr.mxu0 0.0
        %2679 = vmatpush1.msra.mxu0 0.0
        %2680 = vmatprep.subr.mxu0 0.0
        %2681 = vmatpush1.msra.mxu0 %v514
        %2682 = vmatprep.subr.mxu0 0.0
        %2683 = vmatpush1.msra.mxu0 %v513
        %2684 = vmatprep.subr.mxu0 0.0
        %2685 = vmatpush1.msra.mxu0 %v512
        %2686 = vmatprep.subr.mxu0 0.0
        %2687 = vmatpush1.msra.mxu0 %v511
        %2688 = vmatprep.subr.mxu0 0.0
        %2689 = vmatpush1.msra.mxu0 %v510
        %2690 = vmatprep.subr.mxu0 0.0
        %2691 = vmatpush1.msra.mxu0 %v509
        %2692 = vmatprep.subr.mxu0 0.0
        %2693 = vmatpush1.msra.mxu0 %v508
        %2694 = vmatprep.subr.mxu0 0.0
        %2695 = vmatpush1.msra.mxu0 %v507
        %2696 = vmatprep.subr.mxu0 0.0
        %2697 = vmatpush2.msra.mxu0 0.0
        %2698 = vmatprep.subr.mxu0 0.0
        %2699 = vmatpush2.msra.mxu0 0.0
        %2700 = vmatprep.subr.mxu0 0.0
        %2701 = vmatpush2.msra.mxu0 0.0
        %2702 = vmatprep.subr.mxu0 0.0
        %2703 = vmatpush2.msra.mxu0 0.0
        %2704 = vmatprep.subr.mxu0 0.0
        %2705 = vmatpush2.msra.mxu0 0.0
        %2706 = vmatprep.subr.mxu0 0.0
        %2707 = vmatpush2.msra.mxu0 0.0
        %2708 = vmatprep.subr.mxu0 0.0
        %2709 = vmatpush2.msra.mxu0 0.0
        %2710 = vmatprep.subr.mxu0 0.0
        %2711 = vmatpush2.msra.mxu0 0.0
        %2712 = vmatprep.subr.mxu0 0.0
        %2713 = vmatpush2.msra.mxu0 0.0
        %2714 = vmatprep.subr.mxu0 0.0
        %2715 = vmatpush2.msra.mxu0 0.0
        %2716 = vmatprep.subr.mxu0 0.0
        %2717 = vmatpush2.msra.mxu0 0.0
        %2718 = vmatprep.subr.mxu0 0.0
        %2719 = vmatpush2.msra.mxu0 0.0
        %2720 = vmatprep.subr.mxu0 0.0
        %2721 = vmatpush2.msra.mxu0 0.0
        %2722 = vmatprep.subr.mxu0 0.0
        %2723 = vmatpush2.msra.mxu0 0.0
        %2724 = vmatprep.subr.mxu0 0.0
        %2725 = vmatpush2.msra.mxu0 0.0
        %2726 = vmatprep.subr.mxu0 0.0
        %2727 = vmatpush2.msra.mxu0 0.0
        %2728 = vmatprep.mubr.f32.mxu0 0.0
        %2729 = vmatmul.mubr.f32.gmra.mxu0 %v2641
        %v2730 = vpop.f32.mrf.mxu0
        %v2731 = vadd.f32 0.0, %v2730
        %v2732 = vpop.f32.mrf.mxu0
        %2733 = vmatprep.mubr.f32.mxu0 0.0
        %2734 = vmatmul.mubr.f32.gmra.mxu0 %v2644
        %v2735 = vpop.f32.mrf.mxu0
        %v2736 = vadd.f32 0.0, %v2735
        %v2737 = vpop.f32.mrf.mxu0
        %2738 = vmatprep.mubr.f32.mxu0 0.0
        %2739 = vmatmul.mubr.f32.gmra.mxu0 %v2647
        %v2740 = vpop.f32.mrf.mxu0
        %v2741 = vadd.f32 0.0, %v2740
        %v2742 = vpop.f32.mrf.mxu0
        %2743 = vmatprep.mubr.f32.mxu0 0.0
        %2744 = vmatmul.mubr.f32.gmra.mxu0 %v2650
        %v2745 = vpop.f32.mrf.mxu0
        %v2746 = vadd.f32 0.0, %v2745
        %v2747 = vpop.f32.mrf.mxu0
        %2748 = vmatprep.mubr.f32.mxu0 0.0
        %2749 = vmatmul.mubr.f32.gmra.mxu0 %v2653
        %v2750 = vpop.f32.mrf.mxu0
        %v2751 = vadd.f32 0.0, %v2750
        %v2752 = vpop.f32.mrf.mxu0
        %2753 = vmatprep.mubr.f32.mxu0 0.0
        %2754 = vmatmul.mubr.f32.gmra.mxu0 %v2656
        %v2755 = vpop.f32.mrf.mxu0
        %v2756 = vadd.f32 0.0, %v2755
        %v2757 = vpop.f32.mrf.mxu0
        %2758 = vmatprep.mubr.f32.mxu0 0.0
        %2759 = vmatmul.mubr.f32.gmra.mxu0 %v2659
        %v2760 = vpop.f32.mrf.mxu0
        %v2761 = vadd.f32 0.0, %v2760
        %v2762 = vpop.f32.mrf.mxu0
        %2763 = vmatprep.mubr.f32.mxu0 0.0
        %2764 = vmatmul.mubr.f32.gmra.mxu0 %v2662
        %v2765 = vpop.f32.mrf.mxu0
        %v2766 = vadd.f32 0.0, %v2765
        %v2767 = vpop.f32.mrf.mxu0
        %2768 = vdwg.mxu0
        %s2769 = scalar_lea.vmem %s4, 512
        %v2770 = vld [vmem:[%s2769] sm:$0xff]
        %v2771 = vld [vmem:[%s2769 + $0x8] sm:$0xff]
        %v2772 = vld [vmem:[%s2769 + $0x10] sm:$0xff]
        %v2773 = vld [vmem:[%s2769 + $0x18] sm:$0xff]
        %v2774 = vld [vmem:[%s2769 + $0x20] sm:$0xff]
        %v2775 = vld [vmem:[%s2769 + $0x28] sm:$0xff]
        %v2776 = vld [vmem:[%s2769 + $0x30] sm:$0xff]
        %v2777 = vld [vmem:[%s2769 + $0x38] sm:$0xff]
        %v2779 = vsel %vm377, %v2731, 0
        %v2782 = vsel %vm377, %v2736, 0
        %v2785 = vsel %vm377, %v2741, 0
        %v2788 = vsel %vm377, %v2746, 0
        %v2791 = vsel %vm377, %v2751, 0
        %v2794 = vsel %vm377, %v2756, 0
        %v2797 = vsel %vm377, %v2761, 0
        %v2800 = vsel %vm377, %v2766, 0
        %2802 = vmatprep.subr.mxu0 0.0
        %2803 = vmatpush1.msra.mxu0 0.0
        %2804 = vmatprep.subr.mxu0 0.0
        %2805 = vmatpush1.msra.mxu0 0.0
        %2806 = vmatprep.subr.mxu0 0.0
        %2807 = vmatpush1.msra.mxu0 0.0
        %2808 = vmatprep.subr.mxu0 0.0
        %2809 = vmatpush1.msra.mxu0 0.0
        %2810 = vmatprep.subr.mxu0 0.0
        %2811 = vmatpush1.msra.mxu0 0.0
        %2812 = vmatprep.subr.mxu0 0.0
        %2813 = vmatpush1.msra.mxu0 0.0
        %2814 = vmatprep.subr.mxu0 0.0
        %2815 = vmatpush1.msra.mxu0 0.0
        %2816 = vmatprep.subr.mxu0 0.0
        %2817 = vmatpush1.msra.mxu0 0.0
        %2818 = vmatprep.subr.mxu0 0.0
        %2819 = vmatpush1.msra.mxu0 %v2777
        %2820 = vmatprep.subr.mxu0 0.0
        %2821 = vmatpush1.msra.mxu0 %v2776
        %2822 = vmatprep.subr.mxu0 0.0
        %2823 = vmatpush1.msra.mxu0 %v2775
        %2824 = vmatprep.subr.mxu0 0.0
        %2825 = vmatpush1.msra.mxu0 %v2774
        %2826 = vmatprep.subr.mxu0 0.0
        %2827 = vmatpush1.msra.mxu0 %v2773
        %2828 = vmatprep.subr.mxu0 0.0
        %2829 = vmatpush1.msra.mxu0 %v2772
        %2830 = vmatprep.subr.mxu0 0.0
        %2831 = vmatpush1.msra.mxu0 %v2771
        %2832 = vmatprep.subr.mxu0 0.0
        %2833 = vmatpush1.msra.mxu0 %v2770
        %2834 = vmatprep.subr.mxu0 0.0
        %2835 = vmatpush2.msra.mxu0 0.0
        %2836 = vmatprep.subr.mxu0 0.0
        %2837 = vmatpush2.msra.mxu0 0.0
        %2838 = vmatprep.subr.mxu0 0.0
        %2839 = vmatpush2.msra.mxu0 0.0
        %2840 = vmatprep.subr.mxu0 0.0
        %2841 = vmatpush2.msra.mxu0 0.0
        %2842 = vmatprep.subr.mxu0 0.0
        %2843 = vmatpush2.msra.mxu0 0.0
        %2844 = vmatprep.subr.mxu0 0.0
        %2845 = vmatpush2.msra.mxu0 0.0
        %2846 = vmatprep.subr.mxu0 0.0
        %2847 = vmatpush2.msra.mxu0 0.0
        %2848 = vmatprep.subr.mxu0 0.0
        %2849 = vmatpush2.msra.mxu0 0.0
        %2850 = vmatprep.subr.mxu0 0.0
        %2851 = vmatpush2.msra.mxu0 0.0
        %2852 = vmatprep.subr.mxu0 0.0
        %2853 = vmatpush2.msra.mxu0 0.0
        %2854 = vmatprep.subr.mxu0 0.0
        %2855 = vmatpush2.msra.mxu0 0.0
        %2856 = vmatprep.subr.mxu0 0.0
        %2857 = vmatpush2.msra.mxu0 0.0
        %2858 = vmatprep.subr.mxu0 0.0
        %2859 = vmatpush2.msra.mxu0 0.0
        %2860 = vmatprep.subr.mxu0 0.0
        %2861 = vmatpush2.msra.mxu0 0.0
        %2862 = vmatprep.subr.mxu0 0.0
        %2863 = vmatpush2.msra.mxu0 0.0
        %2864 = vmatprep.subr.mxu0 0.0
        %2865 = vmatpush2.msra.mxu0 0.0
        %2866 = vmatprep.mubr.f32.mxu0 0.0
        %2867 = vmatmul.mubr.f32.gmra.mxu0 %v2779
        %v2868 = vpop.f32.mrf.mxu0
        %v2869 = vadd.f32 0.0, %v2868
        %v2870 = vpop.f32.mrf.mxu0
        %2871 = vmatprep.mubr.f32.mxu0 0.0
        %2872 = vmatmul.mubr.f32.gmra.mxu0 %v2782
        %v2873 = vpop.f32.mrf.mxu0
        %v2874 = vadd.f32 0.0, %v2873
        %v2875 = vpop.f32.mrf.mxu0
        %2876 = vmatprep.mubr.f32.mxu0 0.0
        %2877 = vmatmul.mubr.f32.gmra.mxu0 %v2785
        %v2878 = vpop.f32.mrf.mxu0
        %v2879 = vadd.f32 0.0, %v2878
        %v2880 = vpop.f32.mrf.mxu0
        %2881 = vmatprep.mubr.f32.mxu0 0.0
        %2882 = vmatmul.mubr.f32.gmra.mxu0 %v2788
        %v2883 = vpop.f32.mrf.mxu0
        %v2884 = vadd.f32 0.0, %v2883
        %v2885 = vpop.f32.mrf.mxu0
        %2886 = vmatprep.mubr.f32.mxu0 0.0
        %2887 = vmatmul.mubr.f32.gmra.mxu0 %v2791
        %v2888 = vpop.f32.mrf.mxu0
        %v2889 = vadd.f32 0.0, %v2888
        %v2890 = vpop.f32.mrf.mxu0
        %2891 = vmatprep.mubr.f32.mxu0 0.0
        %2892 = vmatmul.mubr.f32.gmra.mxu0 %v2794
        %v2893 = vpop.f32.mrf.mxu0
        %v2894 = vadd.f32 0.0, %v2893
        %v2895 = vpop.f32.mrf.mxu0
        %2896 = vmatprep.mubr.f32.mxu0 0.0
        %2897 = vmatmul.mubr.f32.gmra.mxu0 %v2797
        %v2898 = vpop.f32.mrf.mxu0
        %v2899 = vadd.f32 0.0, %v2898
        %v2900 = vpop.f32.mrf.mxu0
        %2901 = vmatprep.mubr.f32.mxu0 0.0
        %2902 = vmatmul.mubr.f32.gmra.mxu0 %v2800
        %v2903 = vpop.f32.mrf.mxu0
        %v2904 = vadd.f32 0.0, %v2903
        %v2905 = vpop.f32.mrf.mxu0
        %2906 = vdwg.mxu0
        %v2907 = vadd.f32 %v2623, %v2869
        %v2908 = vadd.f32 %v2624, %v2874
        %v2909 = vadd.f32 %v2625, %v2879
        %v2910 = vadd.f32 %v2626, %v2884
        %v2911 = vadd.f32 %v2627, %v2889
        %v2912 = vadd.f32 %v2628, %v2894
        %v2913 = vadd.f32 %v2629, %v2899
        %v2914 = vadd.f32 %v2630, %v2904
        %v2915 = vld [vmem:[%s5] sm:$0x1]
        %v2917 = vlaneseq
        %v2918 = vshrl.u32 %v2917, 7
        %v2919 = vsub.s32 0, %v2918
        %v2920 = vrot.slane %v2915, %v2919
        %v2922 = vadd.f32 %v2907, %v2920
        %v2923 = vadd.f32 %v2908, %v2920
        %v2924 = vadd.f32 %v2909, %v2920
        %v2925 = vadd.f32 %v2910, %v2920
        %v2926 = vadd.f32 %v2911, %v2920
        %v2927 = vadd.f32 %v2912, %v2920
        %v2928 = vadd.f32 %v2913, %v2920
        %v2929 = vadd.f32 %v2914, %v2920
        %v2930 = vmax.f32 %v2922, 0.0
        %v2931 = vmax.f32 %v2923, 0.0
        %v2932 = vmax.f32 %v2924, 0.0
        %v2933 = vmax.f32 %v2925, 0.0
        %v2934 = vmax.f32 %v2926, 0.0
        %v2935 = vmax.f32 %v2927, 0.0
        %v2936 = vmax.f32 %v2928, 0.0
        %v2937 = vmax.f32 %v2929, 0.0
        %v2938 = vld [vmem:[%s6] sm:$0xff]
        %v2939 = vld [vmem:[%s6 + $0x8] sm:$0xff]
        %v2941 = vsel %vm377, %v2938, 0
        %v2944 = vsel %vm377, %v2939, 0
        %2946 = vmatprep.subr.mxu0 0.0
        %2947 = vmatpush1.msra.mxu0 0.0
        %2948 = vmatprep.subr.mxu0 0.0
        %2949 = vmatpush1.msra.mxu0 0.0
        %2950 = vmatprep.subr.mxu0 0.0
        %2951 = vmatpush1.msra.mxu0 0.0
        %2952 = vmatprep.subr.mxu0 0.0
        %2953 = vmatpush1.msra.mxu0 0.0
        %2954 = vmatprep.subr.mxu0 0.0
        %2955 = vmatpush1.msra.mxu0 0.0
        %2956 = vmatprep.subr.mxu0 0.0
        %2957 = vmatpush1.msra.mxu0 0.0
        %2958 = vmatprep.subr.mxu0 0.0
        %2959 = vmatpush1.msra.mxu0 0.0
        %2960 = vmatprep.subr.mxu0 0.0
        %2961 = vmatpush1.msra.mxu0 0.0
        %2962 = vmatprep.subr.mxu0 0.0
        %2963 = vmatpush1.msra.mxu0 %v2937
        %2964 = vmatprep.subr.mxu0 0.0
        %2965 = vmatpush1.msra.mxu0 %v2936
        %2966 = vmatprep.subr.mxu0 0.0
        %2967 = vmatpush1.msra.mxu0 %v2935
        %2968 = vmatprep.subr.mxu0 0.0
        %2969 = vmatpush1.msra.mxu0 %v2934
        %2970 = vmatprep.subr.mxu0 0.0
        %2971 = vmatpush1.msra.mxu0 %v2933
        %2972 = vmatprep.subr.mxu0 0.0
        %2973 = vmatpush1.msra.mxu0 %v2932
        %2974 = vmatprep.subr.mxu0 0.0
        %2975 = vmatpush1.msra.mxu0 %v2931
        %2976 = vmatprep.subr.mxu0 0.0
        %2977 = vmatpush1.msra.mxu0 %v2930
        %2978 = vmatprep.subr.mxu0 0.0
        %2979 = vmatpush2.msra.mxu0 0.0
        %2980 = vmatprep.subr.mxu0 0.0
        %2981 = vmatpush2.msra.mxu0 0.0
        %2982 = vmatprep.subr.mxu0 0.0
        %2983 = vmatpush2.msra.mxu0 0.0
        %2984 = vmatprep.subr.mxu0 0.0
        %2985 = vmatpush2.msra.mxu0 0.0
        %2986 = vmatprep.subr.mxu0 0.0
        %2987 = vmatpush2.msra.mxu0 0.0
        %2988 = vmatprep.subr.mxu0 0.0
        %2989 = vmatpush2.msra.mxu0 0.0
        %2990 = vmatprep.subr.mxu0 0.0
        %2991 = vmatpush2.msra.mxu0 0.0
        %2992 = vmatprep.subr.mxu0 0.0
        %2993 = vmatpush2.msra.mxu0 0.0
        %2994 = vmatprep.subr.mxu0 0.0
        %2995 = vmatpush2.msra.mxu0 0.0
        %2996 = vmatprep.subr.mxu0 0.0
        %2997 = vmatpush2.msra.mxu0 0.0
        %2998 = vmatprep.subr.mxu0 0.0
        %2999 = vmatpush2.msra.mxu0 0.0
        %3000 = vmatprep.subr.mxu0 0.0
        %3001 = vmatpush2.msra.mxu0 0.0
        %3002 = vmatprep.subr.mxu0 0.0
        %3003 = vmatpush2.msra.mxu0 0.0
        %3004 = vmatprep.subr.mxu0 0.0
        %3005 = vmatpush2.msra.mxu0 0.0
        %3006 = vmatprep.subr.mxu0 0.0
        %3007 = vmatpush2.msra.mxu0 0.0
        %3008 = vmatprep.subr.mxu0 0.0
        %3009 = vmatpush2.msra.mxu0 0.0
        %3010 = vmatprep.mubr.f32.mxu0 0.0
        %3011 = vmatmul.mubr.f32.gmra.mxu0 %v2941
        %v3012 = vpop.f32.mrf.mxu0
        %v3013 = vadd.f32 0.0, %v3012
        %v3014 = vpop.f32.mrf.mxu0
        %3015 = vmatprep.mubr.f32.mxu0 0.0
        %3016 = vmatmul.mubr.f32.gmra.mxu0 %v2944
        %v3017 = vpop.f32.mrf.mxu0
        %v3018 = vadd.f32 0.0, %v3017
        %v3019 = vpop.f32.mrf.mxu0
        %3020 = vdwg.mxu0
        %v3021 = vld [vmem:[%s8] sm:$0x1]
        %v3022 = vld [vmem:[%s7] sm:$0xff]
        %v3023 = vld [vmem:[%s7 + $0x8] sm:$0xff]
        %v3024 = vld [vmem:[%s7 + $0x10] sm:$0xff]
        %v3025 = vld [vmem:[%s7 + $0x18] sm:$0xff]
        %vm3026 = vcmask 261120
        %v3028 = vsel %vm3026, %v3013, 0
        %3030 = vmatprep.subr.mxu0 0.0
        %3031 = vmatpush1.msra.mxu0 0.0
        %3032 = vmatprep.subr.mxu0 0.0
        %3033 = vmatpush1.msra.mxu0 0.0
        %3034 = vmatprep.subr.mxu0 0.0
        %3035 = vmatpush1.msra.mxu0 0.0
        %3036 = vmatprep.subr.mxu0 0.0
        %3037 = vmatpush1.msra.mxu0 0.0
        %3038 = vmatprep.subr.mxu0 0.0
        %3039 = vmatpush1.msra.mxu0 0.0
        %3040 = vmatprep.subr.mxu0 0.0
        %3041 = vmatpush1.msra.mxu0 0.0
        %3042 = vmatprep.subr.mxu0 0.0
        %3043 = vmatpush1.msra.mxu0 0.0
        %3044 = vmatprep.subr.mxu0 0.0
        %3045 = vmatpush1.msra.mxu0 0.0
        %3046 = vmatprep.subr.mxu0 0.0
        %3047 = vmatpush1.msra.mxu0 0.0
        %3048 = vmatprep.subr.mxu0 0.0
        %3049 = vmatpush1.msra.mxu0 0.0
        %3050 = vmatprep.subr.mxu0 0.0
        %3051 = vmatpush1.msra.mxu0 0.0
        %3052 = vmatprep.subr.mxu0 0.0
        %3053 = vmatpush1.msra.mxu0 0.0
        %3054 = vmatprep.subr.mxu0 0.0
        %3055 = vmatpush1.msra.mxu0 %v3025
        %3056 = vmatprep.subr.mxu0 0.0
        %3057 = vmatpush1.msra.mxu0 %v3024
        %3058 = vmatprep.subr.mxu0 0.0
        %3059 = vmatpush1.msra.mxu0 %v3023
        %3060 = vmatprep.subr.mxu0 0.0
        %3061 = vmatpush1.msra.mxu0 %v3022
        %3062 = vmatprep.subr.mxu0 0.0
        %3063 = vmatpush2.msra.mxu0 0.0
        %3064 = vmatprep.subr.mxu0 0.0
        %3065 = vmatpush2.msra.mxu0 0.0
        %3066 = vmatprep.subr.mxu0 0.0
        %3067 = vmatpush2.msra.mxu0 0.0
        %3068 = vmatprep.subr.mxu0 0.0
        %3069 = vmatpush2.msra.mxu0 0.0
        %3070 = vmatprep.subr.mxu0 0.0
        %3071 = vmatpush2.msra.mxu0 0.0
        %3072 = vmatprep.subr.mxu0 0.0
        %3073 = vmatpush2.msra.mxu0 0.0
        %3074 = vmatprep.subr.mxu0 0.0
        %3075 = vmatpush2.msra.mxu0 0.0
        %3076 = vmatprep.subr.mxu0 0.0
        %3077 = vmatpush2.msra.mxu0 0.0
        %3078 = vmatprep.subr.mxu0 0.0
        %3079 = vmatpush2.msra.mxu0 0.0
        %3080 = vmatprep.subr.mxu0 0.0
        %3081 = vmatpush2.msra.mxu0 0.0
        %3082 = vmatprep.subr.mxu0 0.0
        %3083 = vmatpush2.msra.mxu0 0.0
        %3084 = vmatprep.subr.mxu0 0.0
        %3085 = vmatpush2.msra.mxu0 0.0
        %3086 = vmatprep.subr.mxu0 0.0
        %3087 = vmatpush2.msra.mxu0 0.0
        %3088 = vmatprep.subr.mxu0 0.0
        %3089 = vmatpush2.msra.mxu0 0.0
        %3090 = vmatprep.subr.mxu0 0.0
        %3091 = vmatpush2.msra.mxu0 0.0
        %3092 = vmatprep.subr.mxu0 0.0
        %3093 = vmatpush2.msra.mxu0 0.0
        %3094 = vmatprep.mubr.f32.mxu0 0.0
        %3095 = vmatmul.mubr.f32.gmra.mxu0 %v3028
        %v3096 = vpop.f32.mrf.mxu0
        %v3097 = vadd.f32 0.0, %v3096
        %v3098 = vpop.f32.mrf.mxu0
        %3099 = vdwg.mxu0
        %v3100 = vadd.f32 %v3021, %v3097
        %s3101 = scalar_lea.vmem %s7, 32
        %v3102 = vld [vmem:[%s3101] sm:$0xff]
        %v3103 = vld [vmem:[%s3101 + $0x8] sm:$0xff]
        %v3104 = vld [vmem:[%s3101 + $0x10] sm:$0xff]
        %v3105 = vld [vmem:[%s3101 + $0x18] sm:$0xff]
        %v3106 = vrot.slane %v3013, 1
        %v3107 = vsel %vm3026, %v3106, 0
        %3109 = vmatprep.subr.mxu0 0.0
        %3110 = vmatpush1.msra.mxu0 0.0
        %3111 = vmatprep.subr.mxu0 0.0
        %3112 = vmatpush1.msra.mxu0 0.0
        %3113 = vmatprep.subr.mxu0 0.0
        %3114 = vmatpush1.msra.mxu0 0.0
        %3115 = vmatprep.subr.mxu0 0.0
        %3116 = vmatpush1.msra.mxu0 0.0
        %3117 = vmatprep.subr.mxu0 0.0
        %3118 = vmatpush1.msra.mxu0 0.0
        %3119 = vmatprep.subr.mxu0 0.0
        %3120 = vmatpush1.msra.mxu0 0.0
        %3121 = vmatprep.subr.mxu0 0.0
        %3122 = vmatpush1.msra.mxu0 0.0
        %3123 = vmatprep.subr.mxu0 0.0
        %3124 = vmatpush1.msra.mxu0 0.0
        %3125 = vmatprep.subr.mxu0 0.0
        %3126 = vmatpush1.msra.mxu0 0.0
        %3127 = vmatprep.subr.mxu0 0.0
        %3128 = vmatpush1.msra.mxu0 0.0
        %3129 = vmatprep.subr.mxu0 0.0
        %3130 = vmatpush1.msra.mxu0 0.0
        %3131 = vmatprep.subr.mxu0 0.0
        %3132 = vmatpush1.msra.mxu0 0.0
        %3133 = vmatprep.subr.mxu0 0.0
        %3134 = vmatpush1.msra.mxu0 %v3105
        %3135 = vmatprep.subr.mxu0 0.0
        %3136 = vmatpush1.msra.mxu0 %v3104
        %3137 = vmatprep.subr.mxu0 0.0
        %3138 = vmatpush1.msra.mxu0 %v3103
        %3139 = vmatprep.subr.mxu0 0.0
        %3140 = vmatpush1.msra.mxu0 %v3102
        %3141 = vmatprep.subr.mxu0 0.0
        %3142 = vmatpush2.msra.mxu0 0.0
        %3143 = vmatprep.subr.mxu0 0.0
        %3144 = vmatpush2.msra.mxu0 0.0
        %3145 = vmatprep.subr.mxu0 0.0
        %3146 = vmatpush2.msra.mxu0 0.0
        %3147 = vmatprep.subr.mxu0 0.0
        %3148 = vmatpush2.msra.mxu0 0.0
        %3149 = vmatprep.subr.mxu0 0.0
        %3150 = vmatpush2.msra.mxu0 0.0
        %3151 = vmatprep.subr.mxu0 0.0
        %3152 = vmatpush2.msra.mxu0 0.0
        %3153 = vmatprep.subr.mxu0 0.0
        %3154 = vmatpush2.msra.mxu0 0.0
        %3155 = vmatprep.subr.mxu0 0.0
        %3156 = vmatpush2.msra.mxu0 0.0
        %3157 = vmatprep.subr.mxu0 0.0
        %3158 = vmatpush2.msra.mxu0 0.0
        %3159 = vmatprep.subr.mxu0 0.0
        %3160 = vmatpush2.msra.mxu0 0.0
        %3161 = vmatprep.subr.mxu0 0.0
        %3162 = vmatpush2.msra.mxu0 0.0
        %3163 = vmatprep.subr.mxu0 0.0
        %3164 = vmatpush2.msra.mxu0 0.0
        %3165 = vmatprep.subr.mxu0 0.0
        %3166 = vmatpush2.msra.mxu0 0.0
        %3167 = vmatprep.subr.mxu0 0.0
        %3168 = vmatpush2.msra.mxu0 0.0
        %3169 = vmatprep.subr.mxu0 0.0
        %3170 = vmatpush2.msra.mxu0 0.0
        %3171 = vmatprep.subr.mxu0 0.0
        %3172 = vmatpush2.msra.mxu0 0.0
        %3173 = vmatprep.mubr.f32.mxu0 0.0
        %3174 = vmatmul.mubr.f32.gmra.mxu0 %v3107
        %v3175 = vpop.f32.mrf.mxu0
        %v3176 = vadd.f32 0.0, %v3175
        %v3177 = vpop.f32.mrf.mxu0
        %3178 = vdwg.mxu0
        %v3179 = vadd.f32 %v3100, %v3176
        %s3180 = scalar_lea.vmem %s7, 64
        %v3181 = vld [vmem:[%s3180] sm:$0xff]
        %v3182 = vld [vmem:[%s3180 + $0x8] sm:$0xff]
        %v3183 = vld [vmem:[%s3180 + $0x10] sm:$0xff]
        %v3184 = vld [vmem:[%s3180 + $0x18] sm:$0xff]
        %v3185 = vrot.slane %v3013, 2
        %v3186 = vsel %vm3026, %v3185, 0
        %3188 = vmatprep.subr.mxu0 0.0
        %3189 = vmatpush1.msra.mxu0 0.0
        %3190 = vmatprep.subr.mxu0 0.0
        %3191 = vmatpush1.msra.mxu0 0.0
        %3192 = vmatprep.subr.mxu0 0.0
        %3193 = vmatpush1.msra.mxu0 0.0
        %3194 = vmatprep.subr.mxu0 0.0
        %3195 = vmatpush1.msra.mxu0 0.0
        %3196 = vmatprep.subr.mxu0 0.0
        %3197 = vmatpush1.msra.mxu0 0.0
        %3198 = vmatprep.subr.mxu0 0.0
        %3199 = vmatpush1.msra.mxu0 0.0
        %3200 = vmatprep.subr.mxu0 0.0
        %3201 = vmatpush1.msra.mxu0 0.0
        %3202 = vmatprep.subr.mxu0 0.0
        %3203 = vmatpush1.msra.mxu0 0.0
        %3204 = vmatprep.subr.mxu0 0.0
        %3205 = vmatpush1.msra.mxu0 0.0
        %3206 = vmatprep.subr.mxu0 0.0
        %3207 = vmatpush1.msra.mxu0 0.0
        %3208 = vmatprep.subr.mxu0 0.0
        %3209 = vmatpush1.msra.mxu0 0.0
        %3210 = vmatprep.subr.mxu0 0.0
        %3211 = vmatpush1.msra.mxu0 0.0
        %3212 = vmatprep.subr.mxu0 0.0
        %3213 = vmatpush1.msra.mxu0 %v3184
        %3214 = vmatprep.subr.mxu0 0.0
        %3215 = vmatpush1.msra.mxu0 %v3183
        %3216 = vmatprep.subr.mxu0 0.0
        %3217 = vmatpush1.msra.mxu0 %v3182
        %3218 = vmatprep.subr.mxu0 0.0
        %3219 = vmatpush1.msra.mxu0 %v3181
        %3220 = vmatprep.subr.mxu0 0.0
        %3221 = vmatpush2.msra.mxu0 0.0
        %3222 = vmatprep.subr.mxu0 0.0
        %3223 = vmatpush2.msra.mxu0 0.0
        %3224 = vmatprep.subr.mxu0 0.0
        %3225 = vmatpush2.msra.mxu0 0.0
        %3226 = vmatprep.subr.mxu0 0.0
        %3227 = vmatpush2.msra.mxu0 0.0
        %3228 = vmatprep.subr.mxu0 0.0
        %3229 = vmatpush2.msra.mxu0 0.0
        %3230 = vmatprep.subr.mxu0 0.0
        %3231 = vmatpush2.msra.mxu0 0.0
        %3232 = vmatprep.subr.mxu0 0.0
        %3233 = vmatpush2.msra.mxu0 0.0
        %3234 = vmatprep.subr.mxu0 0.0
        %3235 = vmatpush2.msra.mxu0 0.0
        %3236 = vmatprep.subr.mxu0 0.0
        %3237 = vmatpush2.msra.mxu0 0.0
        %3238 = vmatprep.subr.mxu0 0.0
        %3239 = vmatpush2.msra.mxu0 0.0
        %3240 = vmatprep.subr.mxu0 0.0
        %3241 = vmatpush2.msra.mxu0 0.0
        %3242 = vmatprep.subr.mxu0 0.0
        %3243 = vmatpush2.msra.mxu0 0.0
        %3244 = vmatprep.subr.mxu0 0.0
        %3245 = vmatpush2.msra.mxu0 0.0
        %3246 = vmatprep.subr.mxu0 0.0
        %3247 = vmatpush2.msra.mxu0 0.0
        %3248 = vmatprep.subr.mxu0 0.0
        %3249 = vmatpush2.msra.mxu0 0.0
        %3250 = vmatprep.subr.mxu0 0.0
        %3251 = vmatpush2.msra.mxu0 0.0
        %3252 = vmatprep.mubr.f32.mxu0 0.0
        %3253 = vmatmul.mubr.f32.gmra.mxu0 %v3186
        %v3254 = vpop.f32.mrf.mxu0
        %v3255 = vadd.f32 0.0, %v3254
        %v3256 = vpop.f32.mrf.mxu0
        %3257 = vdwg.mxu0
        %v3258 = vadd.f32 %v3179, %v3255
        %s3259 = scalar_lea.vmem %s7, 96
        %v3260 = vld [vmem:[%s3259] sm:$0xff]
        %v3261 = vld [vmem:[%s3259 + $0x8] sm:$0xff]
        %v3262 = vld [vmem:[%s3259 + $0x10] sm:$0xff]
        %v3263 = vld [vmem:[%s3259 + $0x18] sm:$0xff]
        %v3264 = vrot.slane %v3013, 3
        %v3265 = vsel %vm3026, %v3264, 0
        %3267 = vmatprep.subr.mxu0 0.0
        %3268 = vmatpush1.msra.mxu0 0.0
        %3269 = vmatprep.subr.mxu0 0.0
        %3270 = vmatpush1.msra.mxu0 0.0
        %3271 = vmatprep.subr.mxu0 0.0
        %3272 = vmatpush1.msra.mxu0 0.0
        %3273 = vmatprep.subr.mxu0 0.0
        %3274 = vmatpush1.msra.mxu0 0.0
        %3275 = vmatprep.subr.mxu0 0.0
        %3276 = vmatpush1.msra.mxu0 0.0
        %3277 = vmatprep.subr.mxu0 0.0
        %3278 = vmatpush1.msra.mxu0 0.0
        %3279 = vmatprep.subr.mxu0 0.0
        %3280 = vmatpush1.msra.mxu0 0.0
        %3281 = vmatprep.subr.mxu0 0.0
        %3282 = vmatpush1.msra.mxu0 0.0
        %3283 = vmatprep.subr.mxu0 0.0
        %3284 = vmatpush1.msra.mxu0 0.0
        %3285 = vmatprep.subr.mxu0 0.0
        %3286 = vmatpush1.msra.mxu0 0.0
        %3287 = vmatprep.subr.mxu0 0.0
        %3288 = vmatpush1.msra.mxu0 0.0
        %3289 = vmatprep.subr.mxu0 0.0
        %3290 = vmatpush1.msra.mxu0 0.0
        %3291 = vmatprep.subr.mxu0 0.0
        %3292 = vmatpush1.msra.mxu0 %v3263
        %3293 = vmatprep.subr.mxu0 0.0
        %3294 = vmatpush1.msra.mxu0 %v3262
        %3295 = vmatprep.subr.mxu0 0.0
        %3296 = vmatpush1.msra.mxu0 %v3261
        %3297 = vmatprep.subr.mxu0 0.0
        %3298 = vmatpush1.msra.mxu0 %v3260
        %3299 = vmatprep.subr.mxu0 0.0
        %3300 = vmatpush2.msra.mxu0 0.0
        %3301 = vmatprep.subr.mxu0 0.0
        %3302 = vmatpush2.msra.mxu0 0.0
        %3303 = vmatprep.subr.mxu0 0.0
        %3304 = vmatpush2.msra.mxu0 0.0
        %3305 = vmatprep.subr.mxu0 0.0
        %3306 = vmatpush2.msra.mxu0 0.0
        %3307 = vmatprep.subr.mxu0 0.0
        %3308 = vmatpush2.msra.mxu0 0.0
        %3309 = vmatprep.subr.mxu0 0.0
        %3310 = vmatpush2.msra.mxu0 0.0
        %3311 = vmatprep.subr.mxu0 0.0
        %3312 = vmatpush2.msra.mxu0 0.0
        %3313 = vmatprep.subr.mxu0 0.0
        %3314 = vmatpush2.msra.mxu0 0.0
        %3315 = vmatprep.subr.mxu0 0.0
        %3316 = vmatpush2.msra.mxu0 0.0
        %3317 = vmatprep.subr.mxu0 0.0
        %3318 = vmatpush2.msra.mxu0 0.0
        %3319 = vmatprep.subr.mxu0 0.0
        %3320 = vmatpush2.msra.mxu0 0.0
        %3321 = vmatprep.subr.mxu0 0.0
        %3322 = vmatpush2.msra.mxu0 0.0
        %3323 = vmatprep.subr.mxu0 0.0
        %3324 = vmatpush2.msra.mxu0 0.0
        %3325 = vmatprep.subr.mxu0 0.0
        %3326 = vmatpush2.msra.mxu0 0.0
        %3327 = vmatprep.subr.mxu0 0.0
        %3328 = vmatpush2.msra.mxu0 0.0
        %3329 = vmatprep.subr.mxu0 0.0
        %3330 = vmatpush2.msra.mxu0 0.0
        %3331 = vmatprep.mubr.f32.mxu0 0.0
        %3332 = vmatmul.mubr.f32.gmra.mxu0 %v3265
        %v3333 = vpop.f32.mrf.mxu0
        %v3334 = vadd.f32 0.0, %v3333
        %v3335 = vpop.f32.mrf.mxu0
        %3336 = vdwg.mxu0
        %v3337 = vadd.f32 %v3258, %v3334
        %s3338 = scalar_lea.vmem %s7, 128
        %v3339 = vld [vmem:[%s3338] sm:$0xff]
        %v3340 = vld [vmem:[%s3338 + $0x8] sm:$0xff]
        %v3341 = vld [vmem:[%s3338 + $0x10] sm:$0xff]
        %v3342 = vld [vmem:[%s3338 + $0x18] sm:$0xff]
        %v3343 = vrot.slane %v3013, 4
        %v3344 = vsel %vm3026, %v3343, 0
        %3346 = vmatprep.subr.mxu0 0.0
        %3347 = vmatpush1.msra.mxu0 0.0
        %3348 = vmatprep.subr.mxu0 0.0
        %3349 = vmatpush1.msra.mxu0 0.0
        %3350 = vmatprep.subr.mxu0 0.0
        %3351 = vmatpush1.msra.mxu0 0.0
        %3352 = vmatprep.subr.mxu0 0.0
        %3353 = vmatpush1.msra.mxu0 0.0
        %3354 = vmatprep.subr.mxu0 0.0
        %3355 = vmatpush1.msra.mxu0 0.0
        %3356 = vmatprep.subr.mxu0 0.0
        %3357 = vmatpush1.msra.mxu0 0.0
        %3358 = vmatprep.subr.mxu0 0.0
        %3359 = vmatpush1.msra.mxu0 0.0
        %3360 = vmatprep.subr.mxu0 0.0
        %3361 = vmatpush1.msra.mxu0 0.0
        %3362 = vmatprep.subr.mxu0 0.0
        %3363 = vmatpush1.msra.mxu0 0.0
        %3364 = vmatprep.subr.mxu0 0.0
        %3365 = vmatpush1.msra.mxu0 0.0
        %3366 = vmatprep.subr.mxu0 0.0
        %3367 = vmatpush1.msra.mxu0 0.0
        %3368 = vmatprep.subr.mxu0 0.0
        %3369 = vmatpush1.msra.mxu0 0.0
        %3370 = vmatprep.subr.mxu0 0.0
        %3371 = vmatpush1.msra.mxu0 %v3342
        %3372 = vmatprep.subr.mxu0 0.0
        %3373 = vmatpush1.msra.mxu0 %v3341
        %3374 = vmatprep.subr.mxu0 0.0
        %3375 = vmatpush1.msra.mxu0 %v3340
        %3376 = vmatprep.subr.mxu0 0.0
        %3377 = vmatpush1.msra.mxu0 %v3339
        %3378 = vmatprep.subr.mxu0 0.0
        %3379 = vmatpush2.msra.mxu0 0.0
        %3380 = vmatprep.subr.mxu0 0.0
        %3381 = vmatpush2.msra.mxu0 0.0
        %3382 = vmatprep.subr.mxu0 0.0
        %3383 = vmatpush2.msra.mxu0 0.0
        %3384 = vmatprep.subr.mxu0 0.0
        %3385 = vmatpush2.msra.mxu0 0.0
        %3386 = vmatprep.subr.mxu0 0.0
        %3387 = vmatpush2.msra.mxu0 0.0
        %3388 = vmatprep.subr.mxu0 0.0
        %3389 = vmatpush2.msra.mxu0 0.0
        %3390 = vmatprep.subr.mxu0 0.0
        %3391 = vmatpush2.msra.mxu0 0.0
        %3392 = vmatprep.subr.mxu0 0.0
        %3393 = vmatpush2.msra.mxu0 0.0
        %3394 = vmatprep.subr.mxu0 0.0
        %3395 = vmatpush2.msra.mxu0 0.0
        %3396 = vmatprep.subr.mxu0 0.0
        %3397 = vmatpush2.msra.mxu0 0.0
        %3398 = vmatprep.subr.mxu0 0.0
        %3399 = vmatpush2.msra.mxu0 0.0
        %3400 = vmatprep.subr.mxu0 0.0
        %3401 = vmatpush2.msra.mxu0 0.0
        %3402 = vmatprep.subr.mxu0 0.0
        %3403 = vmatpush2.msra.mxu0 0.0
        %3404 = vmatprep.subr.mxu0 0.0
        %3405 = vmatpush2.msra.mxu0 0.0
        %3406 = vmatprep.subr.mxu0 0.0
        %3407 = vmatpush2.msra.mxu0 0.0
        %3408 = vmatprep.subr.mxu0 0.0
        %3409 = vmatpush2.msra.mxu0 0.0
        %3410 = vmatprep.mubr.f32.mxu0 0.0
        %3411 = vmatmul.mubr.f32.gmra.mxu0 %v3344
        %v3412 = vpop.f32.mrf.mxu0
        %v3413 = vadd.f32 0.0, %v3412
        %v3414 = vpop.f32.mrf.mxu0
        %3415 = vdwg.mxu0
        %v3416 = vadd.f32 %v3337, %v3413
        %s3417 = scalar_lea.vmem %s7, 160
        %v3418 = vld [vmem:[%s3417] sm:$0xff]
        %v3419 = vld [vmem:[%s3417 + $0x8] sm:$0xff]
        %v3420 = vld [vmem:[%s3417 + $0x10] sm:$0xff]
        %v3421 = vld [vmem:[%s3417 + $0x18] sm:$0xff]
        %v3422 = vrot.slane %v3013, 5
        %v3423 = vsel %vm3026, %v3422, 0
        %3425 = vmatprep.subr.mxu0 0.0
        %3426 = vmatpush1.msra.mxu0 0.0
        %3427 = vmatprep.subr.mxu0 0.0
        %3428 = vmatpush1.msra.mxu0 0.0
        %3429 = vmatprep.subr.mxu0 0.0
        %3430 = vmatpush1.msra.mxu0 0.0
        %3431 = vmatprep.subr.mxu0 0.0
        %3432 = vmatpush1.msra.mxu0 0.0
        %3433 = vmatprep.subr.mxu0 0.0
        %3434 = vmatpush1.msra.mxu0 0.0
        %3435 = vmatprep.subr.mxu0 0.0
        %3436 = vmatpush1.msra.mxu0 0.0
        %3437 = vmatprep.subr.mxu0 0.0
        %3438 = vmatpush1.msra.mxu0 0.0
        %3439 = vmatprep.subr.mxu0 0.0
        %3440 = vmatpush1.msra.mxu0 0.0
        %3441 = vmatprep.subr.mxu0 0.0
        %3442 = vmatpush1.msra.mxu0 0.0
        %3443 = vmatprep.subr.mxu0 0.0
        %3444 = vmatpush1.msra.mxu0 0.0
        %3445 = vmatprep.subr.mxu0 0.0
        %3446 = vmatpush1.msra.mxu0 0.0
        %3447 = vmatprep.subr.mxu0 0.0
        %3448 = vmatpush1.msra.mxu0 0.0
        %3449 = vmatprep.subr.mxu0 0.0
        %3450 = vmatpush1.msra.mxu0 %v3421
        %3451 = vmatprep.subr.mxu0 0.0
        %3452 = vmatpush1.msra.mxu0 %v3420
        %3453 = vmatprep.subr.mxu0 0.0
        %3454 = vmatpush1.msra.mxu0 %v3419
        %3455 = vmatprep.subr.mxu0 0.0
        %3456 = vmatpush1.msra.mxu0 %v3418
        %3457 = vmatprep.subr.mxu0 0.0
        %3458 = vmatpush2.msra.mxu0 0.0
        %3459 = vmatprep.subr.mxu0 0.0
        %3460 = vmatpush2.msra.mxu0 0.0
        %3461 = vmatprep.subr.mxu0 0.0
        %3462 = vmatpush2.msra.mxu0 0.0
        %3463 = vmatprep.subr.mxu0 0.0
        %3464 = vmatpush2.msra.mxu0 0.0
        %3465 = vmatprep.subr.mxu0 0.0
        %3466 = vmatpush2.msra.mxu0 0.0
        %3467 = vmatprep.subr.mxu0 0.0
        %3468 = vmatpush2.msra.mxu0 0.0
        %3469 = vmatprep.subr.mxu0 0.0
        %3470 = vmatpush2.msra.mxu0 0.0
        %3471 = vmatprep.subr.mxu0 0.0
        %3472 = vmatpush2.msra.mxu0 0.0
        %3473 = vmatprep.subr.mxu0 0.0
        %3474 = vmatpush2.msra.mxu0 0.0
        %3475 = vmatprep.subr.mxu0 0.0
        %3476 = vmatpush2.msra.mxu0 0.0
        %3477 = vmatprep.subr.mxu0 0.0
        %3478 = vmatpush2.msra.mxu0 0.0
        %3479 = vmatprep.subr.mxu0 0.0
        %3480 = vmatpush2.msra.mxu0 0.0
        %3481 = vmatprep.subr.mxu0 0.0
        %3482 = vmatpush2.msra.mxu0 0.0
        %3483 = vmatprep.subr.mxu0 0.0
        %3484 = vmatpush2.msra.mxu0 0.0
        %3485 = vmatprep.subr.mxu0 0.0
        %3486 = vmatpush2.msra.mxu0 0.0
        %3487 = vmatprep.subr.mxu0 0.0
        %3488 = vmatpush2.msra.mxu0 0.0
        %3489 = vmatprep.mubr.f32.mxu0 0.0
        %3490 = vmatmul.mubr.f32.gmra.mxu0 %v3423
        %v3491 = vpop.f32.mrf.mxu0
        %v3492 = vadd.f32 0.0, %v3491
        %v3493 = vpop.f32.mrf.mxu0
        %3494 = vdwg.mxu0
        %v3495 = vadd.f32 %v3416, %v3492
        %s3496 = scalar_lea.vmem %s7, 192
        %v3497 = vld [vmem:[%s3496] sm:$0xff]
        %v3498 = vld [vmem:[%s3496 + $0x8] sm:$0xff]
        %v3499 = vld [vmem:[%s3496 + $0x10] sm:$0xff]
        %v3500 = vld [vmem:[%s3496 + $0x18] sm:$0xff]
        %v3501 = vrot.slane %v3013, 6
        %v3502 = vsel %vm3026, %v3501, 0
        %3504 = vmatprep.subr.mxu0 0.0
        %3505 = vmatpush1.msra.mxu0 0.0
        %3506 = vmatprep.subr.mxu0 0.0
        %3507 = vmatpush1.msra.mxu0 0.0
        %3508 = vmatprep.subr.mxu0 0.0
        %3509 = vmatpush1.msra.mxu0 0.0
        %3510 = vmatprep.subr.mxu0 0.0
        %3511 = vmatpush1.msra.mxu0 0.0
        %3512 = vmatprep.subr.mxu0 0.0
        %3513 = vmatpush1.msra.mxu0 0.0
        %3514 = vmatprep.subr.mxu0 0.0
        %3515 = vmatpush1.msra.mxu0 0.0
        %3516 = vmatprep.subr.mxu0 0.0
        %3517 = vmatpush1.msra.mxu0 0.0
        %3518 = vmatprep.subr.mxu0 0.0
        %3519 = vmatpush1.msra.mxu0 0.0
        %3520 = vmatprep.subr.mxu0 0.0
        %3521 = vmatpush1.msra.mxu0 0.0
        %3522 = vmatprep.subr.mxu0 0.0
        %3523 = vmatpush1.msra.mxu0 0.0
        %3524 = vmatprep.subr.mxu0 0.0
        %3525 = vmatpush1.msra.mxu0 0.0
        %3526 = vmatprep.subr.mxu0 0.0
        %3527 = vmatpush1.msra.mxu0 0.0
        %3528 = vmatprep.subr.mxu0 0.0
        %3529 = vmatpush1.msra.mxu0 %v3500
        %3530 = vmatprep.subr.mxu0 0.0
        %3531 = vmatpush1.msra.mxu0 %v3499
        %3532 = vmatprep.subr.mxu0 0.0
        %3533 = vmatpush1.msra.mxu0 %v3498
        %3534 = vmatprep.subr.mxu0 0.0
        %3535 = vmatpush1.msra.mxu0 %v3497
        %3536 = vmatprep.subr.mxu0 0.0
        %3537 = vmatpush2.msra.mxu0 0.0
        %3538 = vmatprep.subr.mxu0 0.0
        %3539 = vmatpush2.msra.mxu0 0.0
        %3540 = vmatprep.subr.mxu0 0.0
        %3541 = vmatpush2.msra.mxu0 0.0
        %3542 = vmatprep.subr.mxu0 0.0
        %3543 = vmatpush2.msra.mxu0 0.0
        %3544 = vmatprep.subr.mxu0 0.0
        %3545 = vmatpush2.msra.mxu0 0.0
        %3546 = vmatprep.subr.mxu0 0.0
        %3547 = vmatpush2.msra.mxu0 0.0
        %3548 = vmatprep.subr.mxu0 0.0
        %3549 = vmatpush2.msra.mxu0 0.0
        %3550 = vmatprep.subr.mxu0 0.0
        %3551 = vmatpush2.msra.mxu0 0.0
        %3552 = vmatprep.subr.mxu0 0.0
        %3553 = vmatpush2.msra.mxu0 0.0
        %3554 = vmatprep.subr.mxu0 0.0
        %3555 = vmatpush2.msra.mxu0 0.0
        %3556 = vmatprep.subr.mxu0 0.0
        %3557 = vmatpush2.msra.mxu0 0.0
        %3558 = vmatprep.subr.mxu0 0.0
        %3559 = vmatpush2.msra.mxu0 0.0
        %3560 = vmatprep.subr.mxu0 0.0
        %3561 = vmatpush2.msra.mxu0 0.0
        %3562 = vmatprep.subr.mxu0 0.0
        %3563 = vmatpush2.msra.mxu0 0.0
        %3564 = vmatprep.subr.mxu0 0.0
        %3565 = vmatpush2.msra.mxu0 0.0
        %3566 = vmatprep.subr.mxu0 0.0
        %3567 = vmatpush2.msra.mxu0 0.0
        %3568 = vmatprep.mubr.f32.mxu0 0.0
        %3569 = vmatmul.mubr.f32.gmra.mxu0 %v3502
        %v3570 = vpop.f32.mrf.mxu0
        %v3571 = vadd.f32 0.0, %v3570
        %v3572 = vpop.f32.mrf.mxu0
        %3573 = vdwg.mxu0
        %v3574 = vadd.f32 %v3495, %v3571
        %s3575 = scalar_lea.vmem %s7, 224
        %v3576 = vld [vmem:[%s3575] sm:$0xff]
        %v3577 = vld [vmem:[%s3575 + $0x8] sm:$0xff]
        %v3578 = vld [vmem:[%s3575 + $0x10] sm:$0xff]
        %v3579 = vld [vmem:[%s3575 + $0x18] sm:$0xff]
        %v3580 = vrot.slane %v3013, 7
        %v3581 = vsel %vm3026, %v3580, 0
        %3583 = vmatprep.subr.mxu0 0.0
        %3584 = vmatpush1.msra.mxu0 0.0
        %3585 = vmatprep.subr.mxu0 0.0
        %3586 = vmatpush1.msra.mxu0 0.0
        %3587 = vmatprep.subr.mxu0 0.0
        %3588 = vmatpush1.msra.mxu0 0.0
        %3589 = vmatprep.subr.mxu0 0.0
        %3590 = vmatpush1.msra.mxu0 0.0
        %3591 = vmatprep.subr.mxu0 0.0
        %3592 = vmatpush1.msra.mxu0 0.0
        %3593 = vmatprep.subr.mxu0 0.0
        %3594 = vmatpush1.msra.mxu0 0.0
        %3595 = vmatprep.subr.mxu0 0.0
        %3596 = vmatpush1.msra.mxu0 0.0
        %3597 = vmatprep.subr.mxu0 0.0
        %3598 = vmatpush1.msra.mxu0 0.0
        %3599 = vmatprep.subr.mxu0 0.0
        %3600 = vmatpush1.msra.mxu0 0.0
        %3601 = vmatprep.subr.mxu0 0.0
        %3602 = vmatpush1.msra.mxu0 0.0
        %3603 = vmatprep.subr.mxu0 0.0
        %3604 = vmatpush1.msra.mxu0 0.0
        %3605 = vmatprep.subr.mxu0 0.0
        %3606 = vmatpush1.msra.mxu0 0.0
        %3607 = vmatprep.subr.mxu0 0.0
        %3608 = vmatpush1.msra.mxu0 %v3579
        %3609 = vmatprep.subr.mxu0 0.0
        %3610 = vmatpush1.msra.mxu0 %v3578
        %3611 = vmatprep.subr.mxu0 0.0
        %3612 = vmatpush1.msra.mxu0 %v3577
        %3613 = vmatprep.subr.mxu0 0.0
        %3614 = vmatpush1.msra.mxu0 %v3576
        %3615 = vmatprep.subr.mxu0 0.0
        %3616 = vmatpush2.msra.mxu0 0.0
        %3617 = vmatprep.subr.mxu0 0.0
        %3618 = vmatpush2.msra.mxu0 0.0
        %3619 = vmatprep.subr.mxu0 0.0
        %3620 = vmatpush2.msra.mxu0 0.0
        %3621 = vmatprep.subr.mxu0 0.0
        %3622 = vmatpush2.msra.mxu0 0.0
        %3623 = vmatprep.subr.mxu0 0.0
        %3624 = vmatpush2.msra.mxu0 0.0
        %3625 = vmatprep.subr.mxu0 0.0
        %3626 = vmatpush2.msra.mxu0 0.0
        %3627 = vmatprep.subr.mxu0 0.0
        %3628 = vmatpush2.msra.mxu0 0.0
        %3629 = vmatprep.subr.mxu0 0.0
        %3630 = vmatpush2.msra.mxu0 0.0
        %3631 = vmatprep.subr.mxu0 0.0
        %3632 = vmatpush2.msra.mxu0 0.0
        %3633 = vmatprep.subr.mxu0 0.0
        %3634 = vmatpush2.msra.mxu0 0.0
        %3635 = vmatprep.subr.mxu0 0.0
        %3636 = vmatpush2.msra.mxu0 0.0
        %3637 = vmatprep.subr.mxu0 0.0
        %3638 = vmatpush2.msra.mxu0 0.0
        %3639 = vmatprep.subr.mxu0 0.0
        %3640 = vmatpush2.msra.mxu0 0.0
        %3641 = vmatprep.subr.mxu0 0.0
        %3642 = vmatpush2.msra.mxu0 0.0
        %3643 = vmatprep.subr.mxu0 0.0
        %3644 = vmatpush2.msra.mxu0 0.0
        %3645 = vmatprep.subr.mxu0 0.0
        %3646 = vmatpush2.msra.mxu0 0.0
        %3647 = vmatprep.mubr.f32.mxu0 0.0
        %3648 = vmatmul.mubr.f32.gmra.mxu0 %v3581
        %v3649 = vpop.f32.mrf.mxu0
        %v3650 = vadd.f32 0.0, %v3649
        %v3651 = vpop.f32.mrf.mxu0
        %3652 = vdwg.mxu0
        %v3653 = vadd.f32 %v3574, %v3650
        %s3654 = scalar_lea.vmem %s7, 256
        %v3655 = vld [vmem:[%s3654] sm:$0xff]
        %v3656 = vld [vmem:[%s3654 + $0x8] sm:$0xff]
        %v3657 = vld [vmem:[%s3654 + $0x10] sm:$0xff]
        %v3658 = vld [vmem:[%s3654 + $0x18] sm:$0xff]
        %v3660 = vsel %vm3026, %v3018, 0
        %3662 = vmatprep.subr.mxu0 0.0
        %3663 = vmatpush1.msra.mxu0 0.0
        %3664 = vmatprep.subr.mxu0 0.0
        %3665 = vmatpush1.msra.mxu0 0.0
        %3666 = vmatprep.subr.mxu0 0.0
        %3667 = vmatpush1.msra.mxu0 0.0
        %3668 = vmatprep.subr.mxu0 0.0
        %3669 = vmatpush1.msra.mxu0 0.0
        %3670 = vmatprep.subr.mxu0 0.0
        %3671 = vmatpush1.msra.mxu0 0.0
        %3672 = vmatprep.subr.mxu0 0.0
        %3673 = vmatpush1.msra.mxu0 0.0
        %3674 = vmatprep.subr.mxu0 0.0
        %3675 = vmatpush1.msra.mxu0 0.0
        %3676 = vmatprep.subr.mxu0 0.0
        %3677 = vmatpush1.msra.mxu0 0.0
        %3678 = vmatprep.subr.mxu0 0.0
        %3679 = vmatpush1.msra.mxu0 0.0
        %3680 = vmatprep.subr.mxu0 0.0
        %3681 = vmatpush1.msra.mxu0 0.0
        %3682 = vmatprep.subr.mxu0 0.0
        %3683 = vmatpush1.msra.mxu0 0.0
        %3684 = vmatprep.subr.mxu0 0.0
        %3685 = vmatpush1.msra.mxu0 0.0
        %3686 = vmatprep.subr.mxu0 0.0
        %3687 = vmatpush1.msra.mxu0 %v3658
        %3688 = vmatprep.subr.mxu0 0.0
        %3689 = vmatpush1.msra.mxu0 %v3657
        %3690 = vmatprep.subr.mxu0 0.0
        %3691 = vmatpush1.msra.mxu0 %v3656
        %3692 = vmatprep.subr.mxu0 0.0
        %3693 = vmatpush1.msra.mxu0 %v3655
        %3694 = vmatprep.subr.mxu0 0.0
        %3695 = vmatpush2.msra.mxu0 0.0
        %3696 = vmatprep.subr.mxu0 0.0
        %3697 = vmatpush2.msra.mxu0 0.0
        %3698 = vmatprep.subr.mxu0 0.0
        %3699 = vmatpush2.msra.mxu0 0.0
        %3700 = vmatprep.subr.mxu0 0.0
        %3701 = vmatpush2.msra.mxu0 0.0
        %3702 = vmatprep.subr.mxu0 0.0
        %3703 = vmatpush2.msra.mxu0 0.0
        %3704 = vmatprep.subr.mxu0 0.0
        %3705 = vmatpush2.msra.mxu0 0.0
        %3706 = vmatprep.subr.mxu0 0.0
        %3707 = vmatpush2.msra.mxu0 0.0
        %3708 = vmatprep.subr.mxu0 0.0
        %3709 = vmatpush2.msra.mxu0 0.0
        %3710 = vmatprep.subr.mxu0 0.0
        %3711 = vmatpush2.msra.mxu0 0.0
        %3712 = vmatprep.subr.mxu0 0.0
        %3713 = vmatpush2.msra.mxu0 0.0
        %3714 = vmatprep.subr.mxu0 0.0
        %3715 = vmatpush2.msra.mxu0 0.0
        %3716 = vmatprep.subr.mxu0 0.0
        %3717 = vmatpush2.msra.mxu0 0.0
        %3718 = vmatprep.subr.mxu0 0.0
        %3719 = vmatpush2.msra.mxu0 0.0
        %3720 = vmatprep.subr.mxu0 0.0
        %3721 = vmatpush2.msra.mxu0 0.0
        %3722 = vmatprep.subr.mxu0 0.0
        %3723 = vmatpush2.msra.mxu0 0.0
        %3724 = vmatprep.subr.mxu0 0.0
        %3725 = vmatpush2.msra.mxu0 0.0
        %3726 = vmatprep.mubr.f32.mxu0 0.0
        %3727 = vmatmul.mubr.f32.gmra.mxu0 %v3660
        %v3728 = vpop.f32.mrf.mxu0
        %v3729 = vadd.f32 0.0, %v3728
        %v3730 = vpop.f32.mrf.mxu0
        %3731 = vdwg.mxu0
        %v3732 = vadd.f32 %v3653, %v3729
        %s3733 = scalar_lea.vmem %s7, 288
        %v3734 = vld [vmem:[%s3733] sm:$0xff]
        %v3735 = vld [vmem:[%s3733 + $0x8] sm:$0xff]
        %v3736 = vld [vmem:[%s3733 + $0x10] sm:$0xff]
        %v3737 = vld [vmem:[%s3733 + $0x18] sm:$0xff]
        %v3738 = vrot.slane %v3018, 1
        %v3739 = vsel %vm3026, %v3738, 0
        %3741 = vmatprep.subr.mxu0 0.0
        %3742 = vmatpush1.msra.mxu0 0.0
        %3743 = vmatprep.subr.mxu0 0.0
        %3744 = vmatpush1.msra.mxu0 0.0
        %3745 = vmatprep.subr.mxu0 0.0
        %3746 = vmatpush1.msra.mxu0 0.0
        %3747 = vmatprep.subr.mxu0 0.0
        %3748 = vmatpush1.msra.mxu0 0.0
        %3749 = vmatprep.subr.mxu0 0.0
        %3750 = vmatpush1.msra.mxu0 0.0
        %3751 = vmatprep.subr.mxu0 0.0
        %3752 = vmatpush1.msra.mxu0 0.0
        %3753 = vmatprep.subr.mxu0 0.0
        %3754 = vmatpush1.msra.mxu0 0.0
        %3755 = vmatprep.subr.mxu0 0.0
        %3756 = vmatpush1.msra.mxu0 0.0
        %3757 = vmatprep.subr.mxu0 0.0
        %3758 = vmatpush1.msra.mxu0 0.0
        %3759 = vmatprep.subr.mxu0 0.0
        %3760 = vmatpush1.msra.mxu0 0.0
        %3761 = vmatprep.subr.mxu0 0.0
        %3762 = vmatpush1.msra.mxu0 0.0
        %3763 = vmatprep.subr.mxu0 0.0
        %3764 = vmatpush1.msra.mxu0 0.0
        %3765 = vmatprep.subr.mxu0 0.0
        %3766 = vmatpush1.msra.mxu0 %v3737
        %3767 = vmatprep.subr.mxu0 0.0
        %3768 = vmatpush1.msra.mxu0 %v3736
        %3769 = vmatprep.subr.mxu0 0.0
        %3770 = vmatpush1.msra.mxu0 %v3735
        %3771 = vmatprep.subr.mxu0 0.0
        %3772 = vmatpush1.msra.mxu0 %v3734
        %3773 = vmatprep.subr.mxu0 0.0
        %3774 = vmatpush2.msra.mxu0 0.0
        %3775 = vmatprep.subr.mxu0 0.0
        %3776 = vmatpush2.msra.mxu0 0.0
        %3777 = vmatprep.subr.mxu0 0.0
        %3778 = vmatpush2.msra.mxu0 0.0
        %3779 = vmatprep.subr.mxu0 0.0
        %3780 = vmatpush2.msra.mxu0 0.0
        %3781 = vmatprep.subr.mxu0 0.0
        %3782 = vmatpush2.msra.mxu0 0.0
        %3783 = vmatprep.subr.mxu0 0.0
        %3784 = vmatpush2.msra.mxu0 0.0
        %3785 = vmatprep.subr.mxu0 0.0
        %3786 = vmatpush2.msra.mxu0 0.0
        %3787 = vmatprep.subr.mxu0 0.0
        %3788 = vmatpush2.msra.mxu0 0.0
        %3789 = vmatprep.subr.mxu0 0.0
        %3790 = vmatpush2.msra.mxu0 0.0
        %3791 = vmatprep.subr.mxu0 0.0
        %3792 = vmatpush2.msra.mxu0 0.0
        %3793 = vmatprep.subr.mxu0 0.0
        %3794 = vmatpush2.msra.mxu0 0.0
        %3795 = vmatprep.subr.mxu0 0.0
        %3796 = vmatpush2.msra.mxu0 0.0
        %3797 = vmatprep.subr.mxu0 0.0
        %3798 = vmatpush2.msra.mxu0 0.0
        %3799 = vmatprep.subr.mxu0 0.0
        %3800 = vmatpush2.msra.mxu0 0.0
        %3801 = vmatprep.subr.mxu0 0.0
        %3802 = vmatpush2.msra.mxu0 0.0
        %3803 = vmatprep.subr.mxu0 0.0
        %3804 = vmatpush2.msra.mxu0 0.0
        %3805 = vmatprep.mubr.f32.mxu0 0.0
        %3806 = vmatmul.mubr.f32.gmra.mxu0 %v3739
        %v3807 = vpop.f32.mrf.mxu0
        %v3808 = vadd.f32 0.0, %v3807
        %v3809 = vpop.f32.mrf.mxu0
        %3810 = vdwg.mxu0
        %v3811 = vadd.f32 %v3732, %v3808
        %s3812 = scalar_lea.vmem %s7, 320
        %v3813 = vld [vmem:[%s3812] sm:$0xff]
        %v3814 = vld [vmem:[%s3812 + $0x8] sm:$0xff]
        %v3815 = vld [vmem:[%s3812 + $0x10] sm:$0xff]
        %v3816 = vld [vmem:[%s3812 + $0x18] sm:$0xff]
        %v3817 = vrot.slane %v3018, 2
        %v3818 = vsel %vm3026, %v3817, 0
        %3820 = vmatprep.subr.mxu0 0.0
        %3821 = vmatpush1.msra.mxu0 0.0
        %3822 = vmatprep.subr.mxu0 0.0
        %3823 = vmatpush1.msra.mxu0 0.0
        %3824 = vmatprep.subr.mxu0 0.0
        %3825 = vmatpush1.msra.mxu0 0.0
        %3826 = vmatprep.subr.mxu0 0.0
        %3827 = vmatpush1.msra.mxu0 0.0
        %3828 = vmatprep.subr.mxu0 0.0
        %3829 = vmatpush1.msra.mxu0 0.0
        %3830 = vmatprep.subr.mxu0 0.0
        %3831 = vmatpush1.msra.mxu0 0.0
        %3832 = vmatprep.subr.mxu0 0.0
        %3833 = vmatpush1.msra.mxu0 0.0
        %3834 = vmatprep.subr.mxu0 0.0
        %3835 = vmatpush1.msra.mxu0 0.0
        %3836 = vmatprep.subr.mxu0 0.0
        %3837 = vmatpush1.msra.mxu0 0.0
        %3838 = vmatprep.subr.mxu0 0.0
        %3839 = vmatpush1.msra.mxu0 0.0
        %3840 = vmatprep.subr.mxu0 0.0
        %3841 = vmatpush1.msra.mxu0 0.0
        %3842 = vmatprep.subr.mxu0 0.0
        %3843 = vmatpush1.msra.mxu0 0.0
        %3844 = vmatprep.subr.mxu0 0.0
        %3845 = vmatpush1.msra.mxu0 %v3816
        %3846 = vmatprep.subr.mxu0 0.0
        %3847 = vmatpush1.msra.mxu0 %v3815
        %3848 = vmatprep.subr.mxu0 0.0
        %3849 = vmatpush1.msra.mxu0 %v3814
        %3850 = vmatprep.subr.mxu0 0.0
        %3851 = vmatpush1.msra.mxu0 %v3813
        %3852 = vmatprep.subr.mxu0 0.0
        %3853 = vmatpush2.msra.mxu0 0.0
        %3854 = vmatprep.subr.mxu0 0.0
        %3855 = vmatpush2.msra.mxu0 0.0
        %3856 = vmatprep.subr.mxu0 0.0
        %3857 = vmatpush2.msra.mxu0 0.0
        %3858 = vmatprep.subr.mxu0 0.0
        %3859 = vmatpush2.msra.mxu0 0.0
        %3860 = vmatprep.subr.mxu0 0.0
        %3861 = vmatpush2.msra.mxu0 0.0
        %3862 = vmatprep.subr.mxu0 0.0
        %3863 = vmatpush2.msra.mxu0 0.0
        %3864 = vmatprep.subr.mxu0 0.0
        %3865 = vmatpush2.msra.mxu0 0.0
        %3866 = vmatprep.subr.mxu0 0.0
        %3867 = vmatpush2.msra.mxu0 0.0
        %3868 = vmatprep.subr.mxu0 0.0
        %3869 = vmatpush2.msra.mxu0 0.0
        %3870 = vmatprep.subr.mxu0 0.0
        %3871 = vmatpush2.msra.mxu0 0.0
        %3872 = vmatprep.subr.mxu0 0.0
        %3873 = vmatpush2.msra.mxu0 0.0
        %3874 = vmatprep.subr.mxu0 0.0
        %3875 = vmatpush2.msra.mxu0 0.0
        %3876 = vmatprep.subr.mxu0 0.0
        %3877 = vmatpush2.msra.mxu0 0.0
        %3878 = vmatprep.subr.mxu0 0.0
        %3879 = vmatpush2.msra.mxu0 0.0
        %3880 = vmatprep.subr.mxu0 0.0
        %3881 = vmatpush2.msra.mxu0 0.0
        %3882 = vmatprep.subr.mxu0 0.0
        %3883 = vmatpush2.msra.mxu0 0.0
        %3884 = vmatprep.mubr.f32.mxu0 0.0
        %3885 = vmatmul.mubr.f32.gmra.mxu0 %v3818
        %v3886 = vpop.f32.mrf.mxu0
        %v3887 = vadd.f32 0.0, %v3886
        %v3888 = vpop.f32.mrf.mxu0
        %3889 = vdwg.mxu0
        %v3890 = vadd.f32 %v3811, %v3887
        %s3891 = scalar_lea.vmem %s7, 352
        %v3892 = vld [vmem:[%s3891] sm:$0xff]
        %v3893 = vld [vmem:[%s3891 + $0x8] sm:$0xff]
        %v3894 = vld [vmem:[%s3891 + $0x10] sm:$0xff]
        %v3895 = vld [vmem:[%s3891 + $0x18] sm:$0xff]
        %v3896 = vrot.slane %v3018, 3
        %v3897 = vsel %vm3026, %v3896, 0
        %3899 = vmatprep.subr.mxu0 0.0
        %3900 = vmatpush1.msra.mxu0 0.0
        %3901 = vmatprep.subr.mxu0 0.0
        %3902 = vmatpush1.msra.mxu0 0.0
        %3903 = vmatprep.subr.mxu0 0.0
        %3904 = vmatpush1.msra.mxu0 0.0
        %3905 = vmatprep.subr.mxu0 0.0
        %3906 = vmatpush1.msra.mxu0 0.0
        %3907 = vmatprep.subr.mxu0 0.0
        %3908 = vmatpush1.msra.mxu0 0.0
        %3909 = vmatprep.subr.mxu0 0.0
        %3910 = vmatpush1.msra.mxu0 0.0
        %3911 = vmatprep.subr.mxu0 0.0
        %3912 = vmatpush1.msra.mxu0 0.0
        %3913 = vmatprep.subr.mxu0 0.0
        %3914 = vmatpush1.msra.mxu0 0.0
        %3915 = vmatprep.subr.mxu0 0.0
        %3916 = vmatpush1.msra.mxu0 0.0
        %3917 = vmatprep.subr.mxu0 0.0
        %3918 = vmatpush1.msra.mxu0 0.0
        %3919 = vmatprep.subr.mxu0 0.0
        %3920 = vmatpush1.msra.mxu0 0.0
        %3921 = vmatprep.subr.mxu0 0.0
        %3922 = vmatpush1.msra.mxu0 0.0
        %3923 = vmatprep.subr.mxu0 0.0
        %3924 = vmatpush1.msra.mxu0 %v3895
        %3925 = vmatprep.subr.mxu0 0.0
        %3926 = vmatpush1.msra.mxu0 %v3894
        %3927 = vmatprep.subr.mxu0 0.0
        %3928 = vmatpush1.msra.mxu0 %v3893
        %3929 = vmatprep.subr.mxu0 0.0
        %3930 = vmatpush1.msra.mxu0 %v3892
        %3931 = vmatprep.subr.mxu0 0.0
        %3932 = vmatpush2.msra.mxu0 0.0
        %3933 = vmatprep.subr.mxu0 0.0
        %3934 = vmatpush2.msra.mxu0 0.0
        %3935 = vmatprep.subr.mxu0 0.0
        %3936 = vmatpush2.msra.mxu0 0.0
        %3937 = vmatprep.subr.mxu0 0.0
        %3938 = vmatpush2.msra.mxu0 0.0
        %3939 = vmatprep.subr.mxu0 0.0
        %3940 = vmatpush2.msra.mxu0 0.0
        %3941 = vmatprep.subr.mxu0 0.0
        %3942 = vmatpush2.msra.mxu0 0.0
        %3943 = vmatprep.subr.mxu0 0.0
        %3944 = vmatpush2.msra.mxu0 0.0
        %3945 = vmatprep.subr.mxu0 0.0
        %3946 = vmatpush2.msra.mxu0 0.0
        %3947 = vmatprep.subr.mxu0 0.0
        %3948 = vmatpush2.msra.mxu0 0.0
        %3949 = vmatprep.subr.mxu0 0.0
        %3950 = vmatpush2.msra.mxu0 0.0
        %3951 = vmatprep.subr.mxu0 0.0
        %3952 = vmatpush2.msra.mxu0 0.0
        %3953 = vmatprep.subr.mxu0 0.0
        %3954 = vmatpush2.msra.mxu0 0.0
        %3955 = vmatprep.subr.mxu0 0.0
        %3956 = vmatpush2.msra.mxu0 0.0
        %3957 = vmatprep.subr.mxu0 0.0
        %3958 = vmatpush2.msra.mxu0 0.0
        %3959 = vmatprep.subr.mxu0 0.0
        %3960 = vmatpush2.msra.mxu0 0.0
        %3961 = vmatprep.subr.mxu0 0.0
        %3962 = vmatpush2.msra.mxu0 0.0
        %3963 = vmatprep.mubr.f32.mxu0 0.0
        %3964 = vmatmul.mubr.f32.gmra.mxu0 %v3897
        %v3965 = vpop.f32.mrf.mxu0
        %v3966 = vadd.f32 0.0, %v3965
        %v3967 = vpop.f32.mrf.mxu0
        %3968 = vdwg.mxu0
        %v3969 = vadd.f32 %v3890, %v3966
        %s3970 = scalar_lea.vmem %s7, 384
        %v3971 = vld [vmem:[%s3970] sm:$0xff]
        %v3972 = vld [vmem:[%s3970 + $0x8] sm:$0xff]
        %v3973 = vld [vmem:[%s3970 + $0x10] sm:$0xff]
        %v3974 = vld [vmem:[%s3970 + $0x18] sm:$0xff]
        %v3975 = vrot.slane %v3018, 4
        %v3976 = vsel %vm3026, %v3975, 0
        %3978 = vmatprep.subr.mxu0 0.0
        %3979 = vmatpush1.msra.mxu0 0.0
        %3980 = vmatprep.subr.mxu0 0.0
        %3981 = vmatpush1.msra.mxu0 0.0
        %3982 = vmatprep.subr.mxu0 0.0
        %3983 = vmatpush1.msra.mxu0 0.0
        %3984 = vmatprep.subr.mxu0 0.0
        %3985 = vmatpush1.msra.mxu0 0.0
        %3986 = vmatprep.subr.mxu0 0.0
        %3987 = vmatpush1.msra.mxu0 0.0
        %3988 = vmatprep.subr.mxu0 0.0
        %3989 = vmatpush1.msra.mxu0 0.0
        %3990 = vmatprep.subr.mxu0 0.0
        %3991 = vmatpush1.msra.mxu0 0.0
        %3992 = vmatprep.subr.mxu0 0.0
        %3993 = vmatpush1.msra.mxu0 0.0
        %3994 = vmatprep.subr.mxu0 0.0
        %3995 = vmatpush1.msra.mxu0 0.0
        %3996 = vmatprep.subr.mxu0 0.0
        %3997 = vmatpush1.msra.mxu0 0.0
        %3998 = vmatprep.subr.mxu0 0.0
        %3999 = vmatpush1.msra.mxu0 0.0
        %4000 = vmatprep.subr.mxu0 0.0
        %4001 = vmatpush1.msra.mxu0 0.0
        %4002 = vmatprep.subr.mxu0 0.0
        %4003 = vmatpush1.msra.mxu0 %v3974
        %4004 = vmatprep.subr.mxu0 0.0
        %4005 = vmatpush1.msra.mxu0 %v3973
        %4006 = vmatprep.subr.mxu0 0.0
        %4007 = vmatpush1.msra.mxu0 %v3972
        %4008 = vmatprep.subr.mxu0 0.0
        %4009 = vmatpush1.msra.mxu0 %v3971
        %4010 = vmatprep.subr.mxu0 0.0
        %4011 = vmatpush2.msra.mxu0 0.0
        %4012 = vmatprep.subr.mxu0 0.0
        %4013 = vmatpush2.msra.mxu0 0.0
        %4014 = vmatprep.subr.mxu0 0.0
        %4015 = vmatpush2.msra.mxu0 0.0
        %4016 = vmatprep.subr.mxu0 0.0
        %4017 = vmatpush2.msra.mxu0 0.0
        %4018 = vmatprep.subr.mxu0 0.0
        %4019 = vmatpush2.msra.mxu0 0.0
        %4020 = vmatprep.subr.mxu0 0.0
        %4021 = vmatpush2.msra.mxu0 0.0
        %4022 = vmatprep.subr.mxu0 0.0
        %4023 = vmatpush2.msra.mxu0 0.0
        %4024 = vmatprep.subr.mxu0 0.0
        %4025 = vmatpush2.msra.mxu0 0.0
        %4026 = vmatprep.subr.mxu0 0.0
        %4027 = vmatpush2.msra.mxu0 0.0
        %4028 = vmatprep.subr.mxu0 0.0
        %4029 = vmatpush2.msra.mxu0 0.0
        %4030 = vmatprep.subr.mxu0 0.0
        %4031 = vmatpush2.msra.mxu0 0.0
        %4032 = vmatprep.subr.mxu0 0.0
        %4033 = vmatpush2.msra.mxu0 0.0
        %4034 = vmatprep.subr.mxu0 0.0
        %4035 = vmatpush2.msra.mxu0 0.0
        %4036 = vmatprep.subr.mxu0 0.0
        %4037 = vmatpush2.msra.mxu0 0.0
        %4038 = vmatprep.subr.mxu0 0.0
        %4039 = vmatpush2.msra.mxu0 0.0
        %4040 = vmatprep.subr.mxu0 0.0
        %4041 = vmatpush2.msra.mxu0 0.0
        %4042 = vmatprep.mubr.f32.mxu0 0.0
        %4043 = vmatmul.mubr.f32.gmra.mxu0 %v3976
        %v4044 = vpop.f32.mrf.mxu0
        %v4045 = vadd.f32 0.0, %v4044
        %v4046 = vpop.f32.mrf.mxu0
        %4047 = vdwg.mxu0
        %v4048 = vadd.f32 %v3969, %v4045
        %s4049 = scalar_lea.vmem %s7, 416
        %v4050 = vld [vmem:[%s4049] sm:$0xff]
        %v4051 = vld [vmem:[%s4049 + $0x8] sm:$0xff]
        %v4052 = vld [vmem:[%s4049 + $0x10] sm:$0xff]
        %v4053 = vld [vmem:[%s4049 + $0x18] sm:$0xff]
        %v4054 = vrot.slane %v3018, 5
        %v4055 = vsel %vm3026, %v4054, 0
        %4057 = vmatprep.subr.mxu0 0.0
        %4058 = vmatpush1.msra.mxu0 0.0
        %4059 = vmatprep.subr.mxu0 0.0
        %4060 = vmatpush1.msra.mxu0 0.0
        %4061 = vmatprep.subr.mxu0 0.0
        %4062 = vmatpush1.msra.mxu0 0.0
        %4063 = vmatprep.subr.mxu0 0.0
        %4064 = vmatpush1.msra.mxu0 0.0
        %4065 = vmatprep.subr.mxu0 0.0
        %4066 = vmatpush1.msra.mxu0 0.0
        %4067 = vmatprep.subr.mxu0 0.0
        %4068 = vmatpush1.msra.mxu0 0.0
        %4069 = vmatprep.subr.mxu0 0.0
        %4070 = vmatpush1.msra.mxu0 0.0
        %4071 = vmatprep.subr.mxu0 0.0
        %4072 = vmatpush1.msra.mxu0 0.0
        %4073 = vmatprep.subr.mxu0 0.0
        %4074 = vmatpush1.msra.mxu0 0.0
        %4075 = vmatprep.subr.mxu0 0.0
        %4076 = vmatpush1.msra.mxu0 0.0
        %4077 = vmatprep.subr.mxu0 0.0
        %4078 = vmatpush1.msra.mxu0 0.0
        %4079 = vmatprep.subr.mxu0 0.0
        %4080 = vmatpush1.msra.mxu0 0.0
        %4081 = vmatprep.subr.mxu0 0.0
        %4082 = vmatpush1.msra.mxu0 %v4053
        %4083 = vmatprep.subr.mxu0 0.0
        %4084 = vmatpush1.msra.mxu0 %v4052
        %4085 = vmatprep.subr.mxu0 0.0
        %4086 = vmatpush1.msra.mxu0 %v4051
        %4087 = vmatprep.subr.mxu0 0.0
        %4088 = vmatpush1.msra.mxu0 %v4050
        %4089 = vmatprep.subr.mxu0 0.0
        %4090 = vmatpush2.msra.mxu0 0.0
        %4091 = vmatprep.subr.mxu0 0.0
        %4092 = vmatpush2.msra.mxu0 0.0
        %4093 = vmatprep.subr.mxu0 0.0
        %4094 = vmatpush2.msra.mxu0 0.0
        %4095 = vmatprep.subr.mxu0 0.0
        %4096 = vmatpush2.msra.mxu0 0.0
        %4097 = vmatprep.subr.mxu0 0.0
        %4098 = vmatpush2.msra.mxu0 0.0
        %4099 = vmatprep.subr.mxu0 0.0
        %4100 = vmatpush2.msra.mxu0 0.0
        %4101 = vmatprep.subr.mxu0 0.0
        %4102 = vmatpush2.msra.mxu0 0.0
        %4103 = vmatprep.subr.mxu0 0.0
        %4104 = vmatpush2.msra.mxu0 0.0
        %4105 = vmatprep.subr.mxu0 0.0
        %4106 = vmatpush2.msra.mxu0 0.0
        %4107 = vmatprep.subr.mxu0 0.0
        %4108 = vmatpush2.msra.mxu0 0.0
        %4109 = vmatprep.subr.mxu0 0.0
        %4110 = vmatpush2.msra.mxu0 0.0
        %4111 = vmatprep.subr.mxu0 0.0
        %4112 = vmatpush2.msra.mxu0 0.0
        %4113 = vmatprep.subr.mxu0 0.0
        %4114 = vmatpush2.msra.mxu0 0.0
        %4115 = vmatprep.subr.mxu0 0.0
        %4116 = vmatpush2.msra.mxu0 0.0
        %4117 = vmatprep.subr.mxu0 0.0
        %4118 = vmatpush2.msra.mxu0 0.0
        %4119 = vmatprep.subr.mxu0 0.0
        %4120 = vmatpush2.msra.mxu0 0.0
        %4121 = vmatprep.mubr.f32.mxu0 0.0
        %4122 = vmatmul.mubr.f32.gmra.mxu0 %v4055
        %v4123 = vpop.f32.mrf.mxu0
        %v4124 = vadd.f32 0.0, %v4123
        %v4125 = vpop.f32.mrf.mxu0
        %4126 = vdwg.mxu0
        %v4127 = vadd.f32 %v4048, %v4124
        %s4128 = scalar_lea.vmem %s7, 448
        %v4129 = vld [vmem:[%s4128] sm:$0xff]
        %v4130 = vld [vmem:[%s4128 + $0x8] sm:$0xff]
        %v4131 = vld [vmem:[%s4128 + $0x10] sm:$0xff]
        %v4132 = vld [vmem:[%s4128 + $0x18] sm:$0xff]
        %v4133 = vrot.slane %v3018, 6
        %v4134 = vsel %vm3026, %v4133, 0
        %4136 = vmatprep.subr.mxu0 0.0
        %4137 = vmatpush1.msra.mxu0 0.0
        %4138 = vmatprep.subr.mxu0 0.0
        %4139 = vmatpush1.msra.mxu0 0.0
        %4140 = vmatprep.subr.mxu0 0.0
        %4141 = vmatpush1.msra.mxu0 0.0
        %4142 = vmatprep.subr.mxu0 0.0
        %4143 = vmatpush1.msra.mxu0 0.0
        %4144 = vmatprep.subr.mxu0 0.0
        %4145 = vmatpush1.msra.mxu0 0.0
        %4146 = vmatprep.subr.mxu0 0.0
        %4147 = vmatpush1.msra.mxu0 0.0
        %4148 = vmatprep.subr.mxu0 0.0
        %4149 = vmatpush1.msra.mxu0 0.0
        %4150 = vmatprep.subr.mxu0 0.0
        %4151 = vmatpush1.msra.mxu0 0.0
        %4152 = vmatprep.subr.mxu0 0.0
        %4153 = vmatpush1.msra.mxu0 0.0
        %4154 = vmatprep.subr.mxu0 0.0
        %4155 = vmatpush1.msra.mxu0 0.0
        %4156 = vmatprep.subr.mxu0 0.0
        %4157 = vmatpush1.msra.mxu0 0.0
        %4158 = vmatprep.subr.mxu0 0.0
        %4159 = vmatpush1.msra.mxu0 0.0
        %4160 = vmatprep.subr.mxu0 0.0
        %4161 = vmatpush1.msra.mxu0 %v4132
        %4162 = vmatprep.subr.mxu0 0.0
        %4163 = vmatpush1.msra.mxu0 %v4131
        %4164 = vmatprep.subr.mxu0 0.0
        %4165 = vmatpush1.msra.mxu0 %v4130
        %4166 = vmatprep.subr.mxu0 0.0
        %4167 = vmatpush1.msra.mxu0 %v4129
        %4168 = vmatprep.subr.mxu0 0.0
        %4169 = vmatpush2.msra.mxu0 0.0
        %4170 = vmatprep.subr.mxu0 0.0
        %4171 = vmatpush2.msra.mxu0 0.0
        %4172 = vmatprep.subr.mxu0 0.0
        %4173 = vmatpush2.msra.mxu0 0.0
        %4174 = vmatprep.subr.mxu0 0.0
        %4175 = vmatpush2.msra.mxu0 0.0
        %4176 = vmatprep.subr.mxu0 0.0
        %4177 = vmatpush2.msra.mxu0 0.0
        %4178 = vmatprep.subr.mxu0 0.0
        %4179 = vmatpush2.msra.mxu0 0.0
        %4180 = vmatprep.subr.mxu0 0.0
        %4181 = vmatpush2.msra.mxu0 0.0
        %4182 = vmatprep.subr.mxu0 0.0
        %4183 = vmatpush2.msra.mxu0 0.0
        %4184 = vmatprep.subr.mxu0 0.0
        %4185 = vmatpush2.msra.mxu0 0.0
        %4186 = vmatprep.subr.mxu0 0.0
        %4187 = vmatpush2.msra.mxu0 0.0
        %4188 = vmatprep.subr.mxu0 0.0
        %4189 = vmatpush2.msra.mxu0 0.0
        %4190 = vmatprep.subr.mxu0 0.0
        %4191 = vmatpush2.msra.mxu0 0.0
        %4192 = vmatprep.subr.mxu0 0.0
        %4193 = vmatpush2.msra.mxu0 0.0
        %4194 = vmatprep.subr.mxu0 0.0
        %4195 = vmatpush2.msra.mxu0 0.0
        %4196 = vmatprep.subr.mxu0 0.0
        %4197 = vmatpush2.msra.mxu0 0.0
        %4198 = vmatprep.subr.mxu0 0.0
        %4199 = vmatpush2.msra.mxu0 0.0
        %4200 = vmatprep.mubr.f32.mxu0 0.0
        %4201 = vmatmul.mubr.f32.gmra.mxu0 %v4134
        %v4202 = vpop.f32.mrf.mxu0
        %v4203 = vadd.f32 0.0, %v4202
        %v4204 = vpop.f32.mrf.mxu0
        %4205 = vdwg.mxu0
        %v4206 = vadd.f32 %v4127, %v4203
        %s4207 = scalar_lea.vmem %s7, 480
        %v4208 = vld [vmem:[%s4207] sm:$0xff]
        %v4209 = vld [vmem:[%s4207 + $0x8] sm:$0xff]
        %v4210 = vld [vmem:[%s4207 + $0x10] sm:$0xff]
        %v4211 = vld [vmem:[%s4207 + $0x18] sm:$0xff]
        %v4212 = vrot.slane %v3018, 7
        %v4213 = vsel %vm3026, %v4212, 0
        %4215 = vmatprep.subr.mxu0 0.0
        %4216 = vmatpush1.msra.mxu0 0.0
        %4217 = vmatprep.subr.mxu0 0.0
        %4218 = vmatpush1.msra.mxu0 0.0
        %4219 = vmatprep.subr.mxu0 0.0
        %4220 = vmatpush1.msra.mxu0 0.0
        %4221 = vmatprep.subr.mxu0 0.0
        %4222 = vmatpush1.msra.mxu0 0.0
        %4223 = vmatprep.subr.mxu0 0.0
        %4224 = vmatpush1.msra.mxu0 0.0
        %4225 = vmatprep.subr.mxu0 0.0
        %4226 = vmatpush1.msra.mxu0 0.0
        %4227 = vmatprep.subr.mxu0 0.0
        %4228 = vmatpush1.msra.mxu0 0.0
        %4229 = vmatprep.subr.mxu0 0.0
        %4230 = vmatpush1.msra.mxu0 0.0
        %4231 = vmatprep.subr.mxu0 0.0
        %4232 = vmatpush1.msra.mxu0 0.0
        %4233 = vmatprep.subr.mxu0 0.0
        %4234 = vmatpush1.msra.mxu0 0.0
        %4235 = vmatprep.subr.mxu0 0.0
        %4236 = vmatpush1.msra.mxu0 0.0
        %4237 = vmatprep.subr.mxu0 0.0
        %4238 = vmatpush1.msra.mxu0 0.0
        %4239 = vmatprep.subr.mxu0 0.0
        %4240 = vmatpush1.msra.mxu0 %v4211
        %4241 = vmatprep.subr.mxu0 0.0
        %4242 = vmatpush1.msra.mxu0 %v4210
        %4243 = vmatprep.subr.mxu0 0.0
        %4244 = vmatpush1.msra.mxu0 %v4209
        %4245 = vmatprep.subr.mxu0 0.0
        %4246 = vmatpush1.msra.mxu0 %v4208
        %4247 = vmatprep.subr.mxu0 0.0
        %4248 = vmatpush2.msra.mxu0 0.0
        %4249 = vmatprep.subr.mxu0 0.0
        %4250 = vmatpush2.msra.mxu0 0.0
        %4251 = vmatprep.subr.mxu0 0.0
        %4252 = vmatpush2.msra.mxu0 0.0
        %4253 = vmatprep.subr.mxu0 0.0
        %4254 = vmatpush2.msra.mxu0 0.0
        %4255 = vmatprep.subr.mxu0 0.0
        %4256 = vmatpush2.msra.mxu0 0.0
        %4257 = vmatprep.subr.mxu0 0.0
        %4258 = vmatpush2.msra.mxu0 0.0
        %4259 = vmatprep.subr.mxu0 0.0
        %4260 = vmatpush2.msra.mxu0 0.0
        %4261 = vmatprep.subr.mxu0 0.0
        %4262 = vmatpush2.msra.mxu0 0.0
        %4263 = vmatprep.subr.mxu0 0.0
        %4264 = vmatpush2.msra.mxu0 0.0
        %4265 = vmatprep.subr.mxu0 0.0
        %4266 = vmatpush2.msra.mxu0 0.0
        %4267 = vmatprep.subr.mxu0 0.0
        %4268 = vmatpush2.msra.mxu0 0.0
        %4269 = vmatprep.subr.mxu0 0.0
        %4270 = vmatpush2.msra.mxu0 0.0
        %4271 = vmatprep.subr.mxu0 0.0
        %4272 = vmatpush2.msra.mxu0 0.0
        %4273 = vmatprep.subr.mxu0 0.0
        %4274 = vmatpush2.msra.mxu0 0.0
        %4275 = vmatprep.subr.mxu0 0.0
        %4276 = vmatpush2.msra.mxu0 0.0
        %4277 = vmatprep.subr.mxu0 0.0
        %4278 = vmatpush2.msra.mxu0 0.0
        %4279 = vmatprep.mubr.f32.mxu0 0.0
        %4280 = vmatmul.mubr.f32.gmra.mxu0 %v4213
        %v4281 = vpop.f32.mrf.mxu0
        %v4282 = vadd.f32 0.0, %v4281
        %v4283 = vpop.f32.mrf.mxu0
        %4284 = vdwg.mxu0
        %v4285 = vadd.f32 %v4206, %v4282
        %vm4286 = vcmask 516096
        %4287 = vst.msk [vmem:[%s324] sm:$0x1] %vm4286, %v4285
        %s4288 = sand.u32 %s225, 1
        %s4289 = scalar_lea.sflag [#allocation3], %s4288
        %s4290 = sand.u32 %s225, 1
        %s4291 = scalar_lea.vmem [#allocation2], %s4290
        // Predicated region
        $region57: #{feature_extractor_forward.1} parent=55 // pred_check
          %p4292 = pneg %p235
        $region58: #{feature_extractor_forward.1} parent=55 // pred_check_branch
          %4294 = sbr.rel (%p4292) target = $region60
        $region59: #{feature_extractor_forward.1} parent=55 // pred_region
          %s4296 = ssub.s32 16, 16
          %4297 = vsyncadd %s4289, %s4296
          %s4298 = smul.addr %s23, 16
          %s4299 = scalar_lea.hbm %s9, %s4298
          %s4301 = sshll.u32 %s4291, 4
          %s4302 = int_to_ptr.vmem [resolvable:$true] %s4301
          %4304 = dma.vmem_to_hbm [thread:$0]  %s4302, 16, %s4299, %s4289
        $region60: #{feature_extractor_forward.1} parent=55 // pred_fallthru
          _
      $region56: #{feature_extractor_forward.1} parent=5 // pred_fallthru
        _
      %p4305 = scmp.le.s32.totalorder 2, %s18
      // Predicated region
      $region61: #{feature_extractor_forward.1} parent=5 // pred_check
        %p4306 = pneg %p4305
      $region62: #{feature_extractor_forward.1} parent=5 // pred_check_branch
        %4308 = sbr.rel (%p4306) target = $region64
      $region63: #{feature_extractor_forward.1} parent=5 // pred_region
        %s4309 = ssub.s32 %s18, 2
        // Predicated region
        $region65: #{feature_extractor_forward.1} parent=63 // pred_check
          %p4310 = pneg %p241
        $region66: #{feature_extractor_forward.1} parent=63 // pred_check_branch
          %4312 = sbr.rel (%p4310) target = $region68
        $region67: #{feature_extractor_forward.1} parent=63 // pred_region
          %s4313 = sand.u32 %s226, 1
          %s4314 = scalar_lea.sflag [#allocation3], %s4313
          %s4315 = sand.u32 %s226, 1
          %s4316 = scalar_lea.vmem [#allocation2], %s4315
          %4317 = dma.done %s4314, 16
        $region68: #{feature_extractor_forward.1} parent=63 // pred_fallthru
          _
      $region64: #{feature_extractor_forward.1} parent=5 // pred_fallthru
        _
    $region6: #{feature_extractor_forward.1} parent=1 // loop_footer
      %s22 = sadd.s32 1, %s18
    $region7: #{feature_extractor_forward.1} parent=1 // loop_footer_branch
      %17 = sbr.rel target = $region3
    $region8: #{feature_extractor_forward.1} parent=1 // loop_exit
      _
    %4318 = vsyncpa [#allocation3], 1
    %s4319 = scalar_lea.sflag [#allocation3], 1
    %4320 = vsyncpa %s4319, 1

</llo_original>
